<compile_context>
chip_gen: v6e
topology: v6e:2x2x1
jax: 0.10.0
libtpu: 0.0.40
codegen_flags: <defaults>
</compile_context>

<pallas_src>
import jax
import jax.numpy as jnp
from jax import lax
from jax.experimental import pallas as pl
from jax.experimental.pallas import tpu as pltpu


def _sobel_kernel(x_ref, o_ref):
    # x_ref: (B_TILE, H, W) images; o_ref: (B_TILE, H, W) gradient magnitude.
    B, H, W = x_ref.shape

    # Loop-invariant boundary masks, built once per grid step (hoisted out of
    # the batch loop).  A rolled (wrapped) neighbour is zeroed exactly where
    # the zero-padded 3x3 stencil would have read outside the image.
    row = lax.broadcasted_iota(jnp.int32, (H, W), 0)
    col = lax.broadcasted_iota(jnp.int32, (H, W), 1)
    has_left = col >= 1          # column j-1 exists
    has_right = col <= W - 2     # column j+1 exists
    has_up = row >= 1            # row i-1 exists
    has_down = row <= H - 2      # row i+1 exists

    def one_image(b, carry):
        x = x_ref[b].astype(jnp.float32)

        # Horizontal (lane) pass.  roll(x, 1)[., j] == x[., j-1] (wraps at
        # j == 0 -> masked to zero); roll(x, W-1)[., j] == x[., j+1].
        xl = jnp.where(has_left, pltpu.roll(x, 1, axis=1), 0.0)
        xr = jnp.where(has_right, pltpu.roll(x, W - 1, axis=1), 0.0)
        d = xl - xr                       # Gx horizontal difference
        s = (xl + xr) + 2.0 * x           # Gy horizontal smoothing

        # Vertical (sublane) pass for Gx, then fold into the accumulator so
        # the d-path temporaries die before the s-path is expanded.
        du = jnp.where(has_up, pltpu.roll(d, 1, axis=0), 0.0)      # d[i-1]
        dd = jnp.where(has_down, pltpu.roll(d, H - 1, axis=0), 0.0)  # d[i+1]
        gx = du + 2.0 * d + dd
        acc = gx * gx

        # Vertical pass for Gy.
        su = jnp.where(has_up, pltpu.roll(s, 1, axis=0), 0.0)      # s[i-1]
        sd = jnp.where(has_down, pltpu.roll(s, H - 1, axis=0), 0.0)  # s[i+1]
        gy = su - sd
        acc = acc + gy * gy

        # square -> sum over the 2 output channels -> sqrt
        o_ref[b] = jnp.sqrt(acc).astype(o_ref.dtype)
        return carry

    lax.fori_loop(0, B, one_image, None, unroll=2 if B >= 2 else 1)


def _pick_b_tile(n, cap=8):
    """Images per grid step: amortise the ~0.35us per-step overhead, keep
    >= 2 grid steps when possible (megacore), cap so double-buffered in/out
    blocks fit v5e's 16 MiB scoped-VMEM default (cap=8).  On v7x, callers
    may pass b_tile=16 explicitly."""
    for cand in (16, 8, 4, 2):
        if cand <= cap and n % cand == 0 and n // cand >= 2:
            return cand
    for cand in (16, 8, 4, 2):
        if cand <= cap and n % cand == 0:
            return cand
    return 1


def sobel_filter(img, *, b_tile=None):
    """img: (N, 1, 224, 224) -> (N, 1, 224, 224) float32 gradient magnitude."""
    N, C, H, W = img.shape
    assert C == 1 and H == W == 224, "SobelFilter expects (N, 1, 224, 224)"

    if b_tile is None:
        b_tile = _pick_b_tile(N)
    assert N % b_tile == 0

    x = img.reshape(N, H, W).astype(jnp.float32)   # metadata-only for f32 input

    out = pl.pallas_call(
        _sobel_kernel,
        out_shape=jax.ShapeDtypeStruct((N, H, W), jnp.float32),
        grid_spec=pltpu.PrefetchScalarGridSpec(
            num_scalar_prefetch=0,
            grid=(N // b_tile,),
            in_specs=[pl.BlockSpec((b_tile, H, W), lambda n: (n, 0, 0))],
            out_specs=pl.BlockSpec((b_tile, H, W), lambda n: (n, 0, 0)),
        ),
        compiler_params=pltpu.CompilerParams(
            dimension_semantics=("parallel",),
            # b_tile > 8 (~12.6 MiB of double-buffered blocks) overflows the
            # 16 MiB v5e scoped-VMEM default; raise the limit explicitly.
            vmem_limit_bytes=(32 * 1024 * 1024 if b_tile > 8 else None),
        ),
    )(x)
    return out.reshape(N, 1, H, W)


def sobel_filter_ref(img):
    """Pure-JAX reference matching the PyTorch module exactly."""
    Gx = jnp.array([[1., 0., -1.], [2., 0., -2.], [1., 0., -1.]], jnp.float32)
    Gy = jnp.array([[1., 2., 1.], [0., 0., 0.], [-1., -2., -1.]], jnp.float32)
    w = jnp.stack([Gx, Gy], axis=0)[:, None, :, :]      # (2, 1, 3, 3) OIHW
    x = lax.conv_general_dilated(
        img.astype(jnp.float32), w, window_strides=(1, 1),
        padding=((1, 1), (1, 1)),
        dimension_numbers=("NCHW", "OIHW", "NCHW"))
    x = x * x
    x = jnp.sum(x, axis=1, keepdims=True)
    return jnp.sqrt(x)


if __name__ == "__main__":
    key = jax.random.PRNGKey(0)
    # The module's forward asserts H == W == 224; batch kept small (2).
    img = jax.random.normal(key, (2, 1, 224, 224), dtype=jnp.float32)

    out = jax.block_until_ready(sobel_filter(img))
    ref = jax.block_until_ready(sobel_filter_ref(img))

    assert out.shape == (2, 1, 224, 224)
    assert jnp.allclose(out, ref, atol=1e-4, rtol=1e-4), float(
        jnp.max(jnp.abs(out - ref)))
    print("KERNEL_OK")
</pallas_src>

<mosaic_0001>
module attributes {stable_mosaic.version = 11 : i64} {
  func.func @_sobel_kernel(%arg0: i32, %arg1: memref<2x224x224xf32, #tpu.memory_space<vmem>>, %arg2: memref<2x224x224xf32, #tpu.memory_space<vmem>>) attributes {dimension_semantics = [#tpu.dimension_semantics<parallel>], iteration_bounds = array<i64: 1>, scalar_prefetch = 0 : i64, scratch_operands = 0 : i64, tpu.core_type = #tpu.core_type<tc>, window_params = [{transform_indices = @transform_0, window_bounds = array<i64: 2, 224, 224>}, {transform_indices = @transform_1, window_bounds = array<i64: 2, 224, 224>}]} {
    %0 = tpu.iota {dimensions = array<i32: 0>} : vector<224x224xi32>
    %1 = tpu.iota {dimensions = array<i32: 1>} : vector<224x224xi32>
    %c1_i32 = arith.constant 1 : i32
    %2 = vector.broadcast %c1_i32 : i32 to vector<224x224xi32>
    %3 = arith.cmpi sge, %1, %2 : vector<224x224xi32>
    %c222_i32 = arith.constant 222 : i32
    %4 = vector.broadcast %c222_i32 : i32 to vector<224x224xi32>
    %5 = arith.cmpi sle, %1, %4 : vector<224x224xi32>
    %c1_i32_0 = arith.constant 1 : i32
    %6 = vector.broadcast %c1_i32_0 : i32 to vector<224x224xi32>
    %7 = arith.cmpi sge, %0, %6 : vector<224x224xi32>
    %c222_i32_1 = arith.constant 222 : i32
    %8 = vector.broadcast %c222_i32_1 : i32 to vector<224x224xi32>
    %9 = arith.cmpi sle, %0, %8 : vector<224x224xi32>
    %c0_i32 = arith.constant 0 : i32
    %10 = arith.index_cast %c0_i32 : i32 to index
    %c0 = arith.constant 0 : index
    %c0_2 = arith.constant 0 : index
    %11 = vector.load %arg1[%10, %c0, %c0_2] : memref<2x224x224xf32, #tpu.memory_space<vmem>>, vector<1x224x224xf32>
    %12 = vector.shape_cast %11 : vector<1x224x224xf32> to vector<224x224xf32>
    %c1_i32_3 = arith.constant 1 : i32
    %13 = tpu.dynamic_rotate %12 by %c1_i32_3 dim 1 : vector<224x224xf32>, i32 -> vector<224x224xf32>
    %cst = arith.constant 0.000000e+00 : f32
    %14 = vector.broadcast %cst : f32 to vector<224x224xf32>
    %15 = arith.select %3, %13, %14 : vector<224x224xi1>, vector<224x224xf32>
    %c223_i32 = arith.constant 223 : i32
    %16 = tpu.dynamic_rotate %12 by %c223_i32 dim 1 : vector<224x224xf32>, i32 -> vector<224x224xf32>
    %cst_4 = arith.constant 0.000000e+00 : f32
    %17 = vector.broadcast %cst_4 : f32 to vector<224x224xf32>
    %18 = arith.select %5, %16, %17 : vector<224x224xi1>, vector<224x224xf32>
    %19 = arith.subf %15, %18 : vector<224x224xf32>
    %20 = arith.addf %15, %18 : vector<224x224xf32>
    %cst_5 = arith.constant 2.000000e+00 : f32
    %21 = vector.broadcast %cst_5 : f32 to vector<224x224xf32>
    %22 = arith.mulf %21, %12 : vector<224x224xf32>
    %23 = arith.addf %20, %22 : vector<224x224xf32>
    %c1_i32_6 = arith.constant 1 : i32
    %24 = tpu.dynamic_rotate %19 by %c1_i32_6 dim 0 : vector<224x224xf32>, i32 -> vector<224x224xf32>
    %cst_7 = arith.constant 0.000000e+00 : f32
    %25 = vector.broadcast %cst_7 : f32 to vector<224x224xf32>
    %26 = arith.select %7, %24, %25 : vector<224x224xi1>, vector<224x224xf32>
    %c223_i32_8 = arith.constant 223 : i32
    %27 = tpu.dynamic_rotate %19 by %c223_i32_8 dim 0 : vector<224x224xf32>, i32 -> vector<224x224xf32>
    %cst_9 = arith.constant 0.000000e+00 : f32
    %28 = vector.broadcast %cst_9 : f32 to vector<224x224xf32>
    %29 = arith.select %9, %27, %28 : vector<224x224xi1>, vector<224x224xf32>
    %cst_10 = arith.constant 2.000000e+00 : f32
    %30 = vector.broadcast %cst_10 : f32 to vector<224x224xf32>
    %31 = arith.mulf %30, %19 : vector<224x224xf32>
    %32 = arith.addf %26, %31 : vector<224x224xf32>
    %33 = arith.addf %32, %29 : vector<224x224xf32>
    %34 = arith.mulf %33, %33 : vector<224x224xf32>
    %c1_i32_11 = arith.constant 1 : i32
    %35 = tpu.dynamic_rotate %23 by %c1_i32_11 dim 0 : vector<224x224xf32>, i32 -> vector<224x224xf32>
    %cst_12 = arith.constant 0.000000e+00 : f32
    %36 = vector.broadcast %cst_12 : f32 to vector<224x224xf32>
    %37 = arith.select %7, %35, %36 : vector<224x224xi1>, vector<224x224xf32>
    %c223_i32_13 = arith.constant 223 : i32
    %38 = tpu.dynamic_rotate %23 by %c223_i32_13 dim 0 : vector<224x224xf32>, i32 -> vector<224x224xf32>
    %cst_14 = arith.constant 0.000000e+00 : f32
    %39 = vector.broadcast %cst_14 : f32 to vector<224x224xf32>
    %40 = arith.select %9, %38, %39 : vector<224x224xi1>, vector<224x224xf32>
    %41 = arith.subf %37, %40 : vector<224x224xf32>
    %42 = arith.mulf %41, %41 : vector<224x224xf32>
    %43 = arith.addf %34, %42 : vector<224x224xf32>
    %44 = math.sqrt %43 : vector<224x224xf32>
    %45 = arith.index_cast %c0_i32 : i32 to index
    %c0_15 = arith.constant 0 : index
    %c0_16 = arith.constant 0 : index
    %46 = vector.load %arg2[%45, %c0_15, %c0_16] : memref<2x224x224xf32, #tpu.memory_space<vmem>>, vector<1x224x224xf32>
    %47 = vector.shape_cast %46 : vector<1x224x224xf32> to vector<224x224xf32>
    %48 = vector.shape_cast %44 : vector<224x224xf32> to vector<1x224x224xf32>
    tpu.vector_store %arg2[%45, %c0_15, %c0_16], %48 {strides = array<i32>} : memref<2x224x224xf32, #tpu.memory_space<vmem>>, vector<1x224x224xf32>,
    %c1_i32_17 = arith.constant 1 : i32
    %49 = arith.index_cast %c1_i32_17 : i32 to index
    %c0_18 = arith.constant 0 : index
    %c0_19 = arith.constant 0 : index
    %50 = vector.load %arg1[%49, %c0_18, %c0_19] : memref<2x224x224xf32, #tpu.memory_space<vmem>>, vector<1x224x224xf32>
    %51 = vector.shape_cast %50 : vector<1x224x224xf32> to vector<224x224xf32>
    %c1_i32_20 = arith.constant 1 : i32
    %52 = tpu.dynamic_rotate %51 by %c1_i32_20 dim 1 : vector<224x224xf32>, i32 -> vector<224x224xf32>
    %cst_21 = arith.constant 0.000000e+00 : f32
    %53 = vector.broadcast %cst_21 : f32 to vector<224x224xf32>
    %54 = arith.select %3, %52, %53 : vector<224x224xi1>, vector<224x224xf32>
    %c223_i32_22 = arith.constant 223 : i32
    %55 = tpu.dynamic_rotate %51 by %c223_i32_22 dim 1 : vector<224x224xf32>, i32 -> vector<224x224xf32>
    %cst_23 = arith.constant 0.000000e+00 : f32
    %56 = vector.broadcast %cst_23 : f32 to vector<224x224xf32>
    %57 = arith.select %5, %55, %56 : vector<224x224xi1>, vector<224x224xf32>
    %58 = arith.subf %54, %57 : vector<224x224xf32>
    %59 = arith.addf %54, %57 : vector<224x224xf32>
    %cst_24 = arith.constant 2.000000e+00 : f32
    %60 = vector.broadcast %cst_24 : f32 to vector<224x224xf32>
    %61 = arith.mulf %60, %51 : vector<224x224xf32>
    %62 = arith.addf %59, %61 : vector<224x224xf32>
    %c1_i32_25 = arith.constant 1 : i32
    %63 = tpu.dynamic_rotate %58 by %c1_i32_25 dim 0 : vector<224x224xf32>, i32 -> vector<224x224xf32>
    %cst_26 = arith.constant 0.000000e+00 : f32
    %64 = vector.broadcast %cst_26 : f32 to vector<224x224xf32>
    %65 = arith.select %7, %63, %64 : vector<224x224xi1>, vector<224x224xf32>
    %c223_i32_27 = arith.constant 223 : i32
    %66 = tpu.dynamic_rotate %58 by %c223_i32_27 dim 0 : vector<224x224xf32>, i32 -> vector<224x224xf32>
    %cst_28 = arith.constant 0.000000e+00 : f32
    %67 = vector.broadcast %cst_28 : f32 to vector<224x224xf32>
    %68 = arith.select %9, %66, %67 : vector<224x224xi1>, vector<224x224xf32>
    %cst_29 = arith.constant 2.000000e+00 : f32
    %69 = vector.broadcast %cst_29 : f32 to vector<224x224xf32>
    %70 = arith.mulf %69, %58 : vector<224x224xf32>
    %71 = arith.addf %65, %70 : vector<224x224xf32>
    %72 = arith.addf %71, %68 : vector<224x224xf32>
    %73 = arith.mulf %72, %72 : vector<224x224xf32>
    %c1_i32_30 = arith.constant 1 : i32
    %74 = tpu.dynamic_rotate %62 by %c1_i32_30 dim 0 : vector<224x224xf32>, i32 -> vector<224x224xf32>
    %cst_31 = arith.constant 0.000000e+00 : f32
    %75 = vector.broadcast %cst_31 : f32 to vector<224x224xf32>
    %76 = arith.select %7, %74, %75 : vector<224x224xi1>, vector<224x224xf32>
    %c223_i32_32 = arith.constant 223 : i32
    %77 = tpu.dynamic_rotate %62 by %c223_i32_32 dim 0 : vector<224x224xf32>, i32 -> vector<224x224xf32>
    %cst_33 = arith.constant 0.000000e+00 : f32
    %78 = vector.broadcast %cst_33 : f32 to vector<224x224xf32>
    %79 = arith.select %9, %77, %78 : vector<224x224xi1>, vector<224x224xf32>
    %80 = arith.subf %76, %79 : vector<224x224xf32>
    %81 = arith.mulf %80, %80 : vector<224x224xf32>
    %82 = arith.addf %73, %81 : vector<224x224xf32>
    %83 = math.sqrt %82 : vector<224x224xf32>
    %84 = arith.index_cast %c1_i32_17 : i32 to index
    %c0_34 = arith.constant 0 : index
    %c0_35 = arith.constant 0 : index
    %85 = vector.load %arg2[%84, %c0_34, %c0_35] : memref<2x224x224xf32, #tpu.memory_space<vmem>>, vector<1x224x224xf32>
    %86 = vector.shape_cast %85 : vector<1x224x224xf32> to vector<224x224xf32>
    %87 = vector.shape_cast %83 : vector<224x224xf32> to vector<1x224x224xf32>
    tpu.vector_store %arg2[%84, %c0_34, %c0_35], %87 {strides = array<i32>} : memref<2x224x224xf32, #tpu.memory_space<vmem>>, vector<1x224x224xf32>,
    %c2_i32 = arith.constant 2 : i32
    return
  }
  func.func @transform_0(%arg0: i32) -> (i32, i32, i32) {
    %c0_i32 = arith.constant 0 : i32
    %c0_i32_0 = arith.constant 0 : i32
    %c0_i32_1 = arith.constant 0 : i32
    return %arg0, %c0_i32, %c0_i32_0 : i32, i32, i32
  }
  func.func @transform_1(%arg0: i32) -> (i32, i32, i32) {
    %c0_i32 = arith.constant 0 : i32
    %c0_i32_0 = arith.constant 0 : i32
    %c0_i32_1 = arith.constant 0 : i32
    return %arg0, %c0_i32, %c0_i32_0 : i32, i32, i32
  }
}

</mosaic_0001>

<llo_original>
// kernel: tpu_custom_call.1
$region0: #{tpu_custom_call.1}
  #allocation0 [shape = 'u32[]', space=smem, size = 0x4, offset = 0x4, fixed_abs, tag = 'smem constant byte address 0x4 - core index']
  #allocation1 [shape = 'u32[144,128]{1,0:T(1,128)}', space=vmem, size = 0x12000, scoped, tag = 'internal scratch']
  %s0 = inlined_call_operand.hbm [shape: f32[2,224,224], index: 0, kind: input, shape index: {}]
  %s1 = inlined_call_operand.hbm [shape: f32[2,224,224], index: 1, kind: output, shape index: {}]
  %s2 = sld [smem:[#allocation0]]
  $region18: #{tpu_custom_call.1} parent=0
    _
  %s4 = ssub.s32 1, %s2
  %s5 = scalar_select 0, %s4, %s2
  $region1: #{tpu_custom_call.1} parent=0
    #allocation2 [shape = 'u8[458752]{0}', space=vmem, size = 0x70000, scoped, tag = 'input window, operand 0, single buffered']
    #allocation3 [shape = 's32[1]{0}', space=sflag, size = 0x4, scoped, tag = 'scoped memory for tpu_custom_call.1']
    #allocation4 [shape = 's32[1]{0}', space=sflag, size = 0x4, scoped, tag = 'scoped memory for tpu_custom_call.1']
    #allocation5 [shape = 'u8[458752]{0}', space=vmem, size = 0x70000, scoped, tag = 'output window, operand 0, single buffered']
    %6 = vsyncpa [#allocation3], 0
    %7 = vsyncpa [#allocation4], 0
    // Predicated region
    $region2: #{tpu_custom_call.1} parent=1 // pred_check
      _
    $region3: #{tpu_custom_call.1} parent=1 // pred_check_branch
      %9 = sbr.rel (0) target = $region5
    $region4: #{tpu_custom_call.1} parent=1 // pred_region
      %s11 = ssub.s32 14336, 14336
      %12 = vsyncadd [#allocation3], %s11
      %s13 = sshll.u32 [#allocation2], 4
      %s14 = int_to_ptr.vmem [resolvable:$true] %s13
      %19 = dma.hbm_to_vmem [thread:$0]  %s0, 14336, %s14, [#allocation3], 256, 256, 16
    $region5: #{tpu_custom_call.1} parent=1 // pred_fallthru
      _
    // Predicated region
    $region6: #{tpu_custom_call.1} parent=1 // pred_check
      _
    $region7: #{tpu_custom_call.1} parent=1 // pred_check_branch
      %21 = sbr.rel (0) target = $region9
    $region8: #{tpu_custom_call.1} parent=1 // pred_region
      %22 = dma.done [#allocation3], 14336
    $region9: #{tpu_custom_call.1} parent=1 // pred_fallthru
      _
    %v23 = vlaneseq
    %v24 = vshrl.u32 %v23, 7
    %v25 = vadd.s32 %v24, 8
    %v26 = vadd.s32 %v24, 16
    %v27 = vadd.s32 %v24, 24
    %v28 = vadd.s32 %v24, 32
    %v29 = vadd.s32 %v24, 40
    %v30 = vadd.s32 %v24, 48
    %v31 = vadd.s32 %v24, 56
    %v32 = vadd.s32 %v24, 64
    %v33 = vadd.s32 %v24, 72
    %v34 = vadd.s32 %v24, 80
    %v35 = vadd.s32 %v24, 88
    %v36 = vadd.s32 %v24, 96
    %v37 = vadd.s32 %v24, 104
    %v38 = vadd.s32 %v24, 112
    %v39 = vadd.s32 %v24, 120
    %v40 = vadd.s32 %v24, 128
    %v41 = vadd.s32 %v24, 136
    %v42 = vadd.s32 %v24, 144
    %v43 = vadd.s32 %v24, 152
    %v44 = vadd.s32 %v24, 160
    %v45 = vadd.s32 %v24, 168
    %v46 = vadd.s32 %v24, 176
    %v47 = vadd.s32 %v24, 184
    %v48 = vadd.s32 %v24, 192
    %v49 = vadd.s32 %v24, 200
    %v50 = vadd.s32 %v24, 208
    %v51 = vadd.s32 %v24, 216
    %v52 = vlaneseq
    %v53 = vand.u32 %v52, 127
    %v54 = vadd.s32 %v53, 128
    %vm55 = vcmp.ge.s32.totalorder %v53, 1
    %vm56 = vcmp.ge.s32.totalorder %v54, 1
    %vm57 = vcmp.le.s32.totalorder %v53, 222
    %vm58 = vcmp.le.s32.totalorder %v54, 222
    %vm59 = vcmp.ge.s32.totalorder %v24, 1
    %vm60 = vcmp.ge.s32.totalorder %v25, 1
    %vm61 = vcmp.ge.s32.totalorder %v26, 1
    %vm62 = vcmp.ge.s32.totalorder %v27, 1
    %vm63 = vcmp.ge.s32.totalorder %v28, 1
    %vm64 = vcmp.ge.s32.totalorder %v29, 1
    %vm65 = vcmp.ge.s32.totalorder %v30, 1
    %vm66 = vcmp.ge.s32.totalorder %v31, 1
    %vm67 = vcmp.ge.s32.totalorder %v32, 1
    %vm68 = vcmp.ge.s32.totalorder %v33, 1
    %vm69 = vcmp.ge.s32.totalorder %v34, 1
    %vm70 = vcmp.ge.s32.totalorder %v35, 1
    %vm71 = vcmp.ge.s32.totalorder %v36, 1
    %vm72 = vcmp.ge.s32.totalorder %v37, 1
    %vm73 = vcmp.ge.s32.totalorder %v38, 1
    %vm74 = vcmp.ge.s32.totalorder %v39, 1
    %vm75 = vcmp.ge.s32.totalorder %v40, 1
    %vm76 = vcmp.ge.s32.totalorder %v41, 1
    %vm77 = vcmp.ge.s32.totalorder %v42, 1
    %vm78 = vcmp.ge.s32.totalorder %v43, 1
    %vm79 = vcmp.ge.s32.totalorder %v44, 1
    %vm80 = vcmp.ge.s32.totalorder %v45, 1
    %vm81 = vcmp.ge.s32.totalorder %v46, 1
    %vm82 = vcmp.ge.s32.totalorder %v47, 1
    %vm83 = vcmp.ge.s32.totalorder %v48, 1
    %vm84 = vcmp.ge.s32.totalorder %v49, 1
    %vm85 = vcmp.ge.s32.totalorder %v50, 1
    %vm86 = vcmp.ge.s32.totalorder %v51, 1
    %vm87 = vcmp.le.s32.totalorder %v24, 222
    %vm88 = vcmp.le.s32.totalorder %v25, 222
    %vm89 = vcmp.le.s32.totalorder %v26, 222
    %vm90 = vcmp.le.s32.totalorder %v27, 222
    %vm91 = vcmp.le.s32.totalorder %v28, 222
    %vm92 = vcmp.le.s32.totalorder %v29, 222
    %vm93 = vcmp.le.s32.totalorder %v30, 222
    %vm94 = vcmp.le.s32.totalorder %v31, 222
    %vm95 = vcmp.le.s32.totalorder %v32, 222
    %vm96 = vcmp.le.s32.totalorder %v33, 222
    %vm97 = vcmp.le.s32.totalorder %v34, 222
    %vm98 = vcmp.le.s32.totalorder %v35, 222
    %vm99 = vcmp.le.s32.totalorder %v36, 222
    %vm100 = vcmp.le.s32.totalorder %v37, 222
    %vm101 = vcmp.le.s32.totalorder %v38, 222
    %vm102 = vcmp.le.s32.totalorder %v39, 222
    %vm103 = vcmp.le.s32.totalorder %v40, 222
    %vm104 = vcmp.le.s32.totalorder %v41, 222
    %vm105 = vcmp.le.s32.totalorder %v42, 222
    %vm106 = vcmp.le.s32.totalorder %v43, 222
    %vm107 = vcmp.le.s32.totalorder %v44, 222
    %vm108 = vcmp.le.s32.totalorder %v45, 222
    %vm109 = vcmp.le.s32.totalorder %v46, 222
    %vm110 = vcmp.le.s32.totalorder %v47, 222
    %vm111 = vcmp.le.s32.totalorder %v48, 222
    %vm112 = vcmp.le.s32.totalorder %v49, 222
    %vm113 = vcmp.le.s32.totalorder %v50, 222
    %vm114 = vcmp.le.s32.totalorder %v51, 222
    %v115 = vld [vmem:[#allocation2] sm:$0xff]
    %v116 = vld [vmem:[#allocation2 + $0x8] sm:$0xff]
    %v117 = vld [vmem:[#allocation2 + $0x10] sm:$0xff]
    %v118 = vld [vmem:[#allocation2 + $0x18] sm:$0xff]
    %v119 = vld [vmem:[#allocation2 + $0x20] sm:$0xff]
    %v120 = vld [vmem:[#allocation2 + $0x28] sm:$0xff]
    %v121 = vld [vmem:[#allocation2 + $0x30] sm:$0xff]
    %v122 = vld [vmem:[#allocation2 + $0x38] sm:$0xff]
    %v123 = vld [vmem:[#allocation2 + $0x40] sm:$0xff]
    %v124 = vld [vmem:[#allocation2 + $0x48] sm:$0xff]
    %v125 = vld [vmem:[#allocation2 + $0x50] sm:$0xff]
    %v126 = vld [vmem:[#allocation2 + $0x58] sm:$0xff]
    %v127 = vld [vmem:[#allocation2 + $0x60] sm:$0xff]
    %v128 = vld [vmem:[#allocation2 + $0x68] sm:$0xff]
    %v129 = vld [vmem:[#allocation2 + $0x70] sm:$0xff]
    %v130 = vld [vmem:[#allocation2 + $0x78] sm:$0xff]
    %v131 = vld [vmem:[#allocation2 + $0x80] sm:$0xff]
    %v132 = vld [vmem:[#allocation2 + $0x88] sm:$0xff]
    %v133 = vld [vmem:[#allocation2 + $0x90] sm:$0xff]
    %v134 = vld [vmem:[#allocation2 + $0x98] sm:$0xff]
    %v135 = vld [vmem:[#allocation2 + $0xa0] sm:$0xff]
    %v136 = vld [vmem:[#allocation2 + $0xa8] sm:$0xff]
    %v137 = vld [vmem:[#allocation2 + $0xb0] sm:$0xff]
    %v138 = vld [vmem:[#allocation2 + $0xb8] sm:$0xff]
    %v139 = vld [vmem:[#allocation2 + $0xc0] sm:$0xff]
    %v140 = vld [vmem:[#allocation2 + $0xc8] sm:$0xff]
    %v141 = vld [vmem:[#allocation2 + $0xd0] sm:$0xff]
    %v142 = vld [vmem:[#allocation2 + $0xd8] sm:$0xff]
    %v143 = vld [vmem:[#allocation2 + $0xe0] sm:$0xff]
    %v144 = vld [vmem:[#allocation2 + $0xe8] sm:$0xff]
    %v145 = vld [vmem:[#allocation2 + $0xf0] sm:$0xff]
    %v146 = vld [vmem:[#allocation2 + $0xf8] sm:$0xff]
    %v147 = vld [vmem:[#allocation2 + $0x100] sm:$0xff]
    %v148 = vld [vmem:[#allocation2 + $0x108] sm:$0xff]
    %v149 = vld [vmem:[#allocation2 + $0x110] sm:$0xff]
    %v150 = vld [vmem:[#allocation2 + $0x118] sm:$0xff]
    %v151 = vld [vmem:[#allocation2 + $0x120] sm:$0xff]
    %v152 = vld [vmem:[#allocation2 + $0x128] sm:$0xff]
    %v153 = vld [vmem:[#allocation2 + $0x130] sm:$0xff]
    %v154 = vld [vmem:[#allocation2 + $0x138] sm:$0xff]
    %v155 = vld [vmem:[#allocation2 + $0x140] sm:$0xff]
    %v156 = vld [vmem:[#allocation2 + $0x148] sm:$0xff]
    %v157 = vld [vmem:[#allocation2 + $0x150] sm:$0xff]
    %v158 = vld [vmem:[#allocation2 + $0x158] sm:$0xff]
    %v159 = vld [vmem:[#allocation2 + $0x160] sm:$0xff]
    %v160 = vld [vmem:[#allocation2 + $0x168] sm:$0xff]
    %v161 = vld [vmem:[#allocation2 + $0x170] sm:$0xff]
    %v162 = vld [vmem:[#allocation2 + $0x178] sm:$0xff]
    %v163 = vld [vmem:[#allocation2 + $0x180] sm:$0xff]
    %v164 = vld [vmem:[#allocation2 + $0x188] sm:$0xff]
    %v165 = vld [vmem:[#allocation2 + $0x190] sm:$0xff]
    %v166 = vld [vmem:[#allocation2 + $0x198] sm:$0xff]
    %v167 = vld [vmem:[#allocation2 + $0x1a0] sm:$0xff]
    %v168 = vld [vmem:[#allocation2 + $0x1a8] sm:$0xff]
    %v169 = vld [vmem:[#allocation2 + $0x1b0] sm:$0xff]
    %v170 = vld [vmem:[#allocation2 + $0x1b8] sm:$0xff]
    %vm171 = vcmask 1048320
    %172 = vrot.lane.b32.xlu0 %v115, 96
    %v173 = vpop.permute.xlu0 %172
    %v174 = vsel %vm171, %v173, %v116
    %175 = vrot.lane.b32.xlu0 %v117, 96
    %v176 = vpop.permute.xlu0 %175
    %v177 = vsel %vm171, %v176, %v118
    %178 = vrot.lane.b32.xlu0 %v119, 96
    %v179 = vpop.permute.xlu0 %178
    %v180 = vsel %vm171, %v179, %v120
    %181 = vrot.lane.b32.xlu0 %v121, 96
    %v182 = vpop.permute.xlu0 %181
    %v183 = vsel %vm171, %v182, %v122
    %184 = vrot.lane.b32.xlu0 %v123, 96
    %v185 = vpop.permute.xlu0 %184
    %v186 = vsel %vm171, %v185, %v124
    %187 = vrot.lane.b32.xlu0 %v125, 96
    %v188 = vpop.permute.xlu0 %187
    %v189 = vsel %vm171, %v188, %v126
    %190 = vrot.lane.b32.xlu0 %v127, 96
    %v191 = vpop.permute.xlu0 %190
    %v192 = vsel %vm171, %v191, %v128
    %193 = vrot.lane.b32.xlu0 %v129, 96
    %v194 = vpop.permute.xlu0 %193
    %v195 = vsel %vm171, %v194, %v130
    %196 = vrot.lane.b32.xlu0 %v131, 96
    %v197 = vpop.permute.xlu0 %196
    %v198 = vsel %vm171, %v197, %v132
    %199 = vrot.lane.b32.xlu0 %v133, 96
    %v200 = vpop.permute.xlu0 %199
    %v201 = vsel %vm171, %v200, %v134
    %202 = vrot.lane.b32.xlu0 %v135, 96
    %v203 = vpop.permute.xlu0 %202
    %v204 = vsel %vm171, %v203, %v136
    %205 = vrot.lane.b32.xlu0 %v137, 96
    %v206 = vpop.permute.xlu0 %205
    %v207 = vsel %vm171, %v206, %v138
    %208 = vrot.lane.b32.xlu0 %v139, 96
    %v209 = vpop.permute.xlu0 %208
    %v210 = vsel %vm171, %v209, %v140
    %211 = vrot.lane.b32.xlu0 %v141, 96
    %v212 = vpop.permute.xlu0 %211
    %v213 = vsel %vm171, %v212, %v142
    %214 = vrot.lane.b32.xlu0 %v143, 96
    %v215 = vpop.permute.xlu0 %214
    %v216 = vsel %vm171, %v215, %v144
    %217 = vrot.lane.b32.xlu0 %v145, 96
    %v218 = vpop.permute.xlu0 %217
    %v219 = vsel %vm171, %v218, %v146
    %220 = vrot.lane.b32.xlu0 %v147, 96
    %v221 = vpop.permute.xlu0 %220
    %v222 = vsel %vm171, %v221, %v148
    %223 = vrot.lane.b32.xlu0 %v149, 96
    %v224 = vpop.permute.xlu0 %223
    %v225 = vsel %vm171, %v224, %v150
    %226 = vrot.lane.b32.xlu0 %v151, 96
    %v227 = vpop.permute.xlu0 %226
    %v228 = vsel %vm171, %v227, %v152
    %229 = vrot.lane.b32.xlu0 %v153, 96
    %v230 = vpop.permute.xlu0 %229
    %v231 = vsel %vm171, %v230, %v154
    %232 = vrot.lane.b32.xlu0 %v155, 96
    %v233 = vpop.permute.xlu0 %232
    %v234 = vsel %vm171, %v233, %v156
    %235 = vrot.lane.b32.xlu0 %v157, 96
    %v236 = vpop.permute.xlu0 %235
    %v237 = vsel %vm171, %v236, %v158
    %238 = vrot.lane.b32.xlu0 %v159, 96
    %v239 = vpop.permute.xlu0 %238
    %v240 = vsel %vm171, %v239, %v160
    %241 = vrot.lane.b32.xlu0 %v161, 96
    %v242 = vpop.permute.xlu0 %241
    %v243 = vsel %vm171, %v242, %v162
    %244 = vrot.lane.b32.xlu0 %v163, 96
    %v245 = vpop.permute.xlu0 %244
    %v246 = vsel %vm171, %v245, %v164
    %247 = vrot.lane.b32.xlu0 %v165, 96
    %v248 = vpop.permute.xlu0 %247
    %v249 = vsel %vm171, %v248, %v166
    %250 = vrot.lane.b32.xlu0 %v167, 96
    %v251 = vpop.permute.xlu0 %250
    %v252 = vsel %vm171, %v251, %v168
    %253 = vrot.lane.b32.xlu0 %v169, 96
    %v254 = vpop.permute.xlu0 %253
    %v255 = vsel %vm171, %v254, %v170
    %256 = vrot.lane.b32.xlu0 %v174, 96
    %v257 = vpop.permute.xlu0 %256
    %258 = vrot.lane.b32.xlu0 %v177, 96
    %v259 = vpop.permute.xlu0 %258
    %260 = vrot.lane.b32.xlu0 %v180, 96
    %v261 = vpop.permute.xlu0 %260
    %262 = vrot.lane.b32.xlu0 %v183, 96
    %v263 = vpop.permute.xlu0 %262
    %264 = vrot.lane.b32.xlu0 %v186, 96
    %v265 = vpop.permute.xlu0 %264
    %266 = vrot.lane.b32.xlu0 %v189, 96
    %v267 = vpop.permute.xlu0 %266
    %268 = vrot.lane.b32.xlu0 %v192, 96
    %v269 = vpop.permute.xlu0 %268
    %270 = vrot.lane.b32.xlu0 %v195, 96
    %v271 = vpop.permute.xlu0 %270
    %272 = vrot.lane.b32.xlu0 %v198, 96
    %v273 = vpop.permute.xlu0 %272
    %274 = vrot.lane.b32.xlu0 %v201, 96
    %v275 = vpop.permute.xlu0 %274
    %276 = vrot.lane.b32.xlu0 %v204, 96
    %v277 = vpop.permute.xlu0 %276
    %278 = vrot.lane.b32.xlu0 %v207, 96
    %v279 = vpop.permute.xlu0 %278
    %280 = vrot.lane.b32.xlu0 %v210, 96
    %v281 = vpop.permute.xlu0 %280
    %282 = vrot.lane.b32.xlu0 %v213, 96
    %v283 = vpop.permute.xlu0 %282
    %284 = vrot.lane.b32.xlu0 %v216, 96
    %v285 = vpop.permute.xlu0 %284
    %286 = vrot.lane.b32.xlu0 %v219, 96
    %v287 = vpop.permute.xlu0 %286
    %288 = vrot.lane.b32.xlu0 %v222, 96
    %v289 = vpop.permute.xlu0 %288
    %290 = vrot.lane.b32.xlu0 %v225, 96
    %v291 = vpop.permute.xlu0 %290
    %292 = vrot.lane.b32.xlu0 %v228, 96
    %v293 = vpop.permute.xlu0 %292
    %294 = vrot.lane.b32.xlu0 %v231, 96
    %v295 = vpop.permute.xlu0 %294
    %296 = vrot.lane.b32.xlu0 %v234, 96
    %v297 = vpop.permute.xlu0 %296
    %298 = vrot.lane.b32.xlu0 %v237, 96
    %v299 = vpop.permute.xlu0 %298
    %300 = vrot.lane.b32.xlu0 %v240, 96
    %v301 = vpop.permute.xlu0 %300
    %302 = vrot.lane.b32.xlu0 %v243, 96
    %v303 = vpop.permute.xlu0 %302
    %304 = vrot.lane.b32.xlu0 %v246, 96
    %v305 = vpop.permute.xlu0 %304
    %306 = vrot.lane.b32.xlu0 %v249, 96
    %v307 = vpop.permute.xlu0 %306
    %308 = vrot.lane.b32.xlu0 %v252, 96
    %v309 = vpop.permute.xlu0 %308
    %310 = vrot.lane.b32.xlu0 %v255, 96
    %v311 = vpop.permute.xlu0 %310
    %v312 = vsel %vm171, %v257, %v173
    %v313 = vsel %vm171, %v259, %v176
    %v314 = vsel %vm171, %v261, %v179
    %v315 = vsel %vm171, %v263, %v182
    %v316 = vsel %vm171, %v265, %v185
    %v317 = vsel %vm171, %v267, %v188
    %v318 = vsel %vm171, %v269, %v191
    %v319 = vsel %vm171, %v271, %v194
    %v320 = vsel %vm171, %v273, %v197
    %v321 = vsel %vm171, %v275, %v200
    %v322 = vsel %vm171, %v277, %v203
    %v323 = vsel %vm171, %v279, %v206
    %v324 = vsel %vm171, %v281, %v209
    %v325 = vsel %vm171, %v283, %v212
    %v326 = vsel %vm171, %v285, %v215
    %v327 = vsel %vm171, %v287, %v218
    %v328 = vsel %vm171, %v289, %v221
    %v329 = vsel %vm171, %v291, %v224
    %v330 = vsel %vm171, %v293, %v227
    %v331 = vsel %vm171, %v295, %v230
    %v332 = vsel %vm171, %v297, %v233
    %v333 = vsel %vm171, %v299, %v236
    %v334 = vsel %vm171, %v301, %v239
    %v335 = vsel %vm171, %v303, %v242
    %v336 = vsel %vm171, %v305, %v245
    %v337 = vsel %vm171, %v307, %v248
    %v338 = vsel %vm171, %v309, %v251
    %v339 = vsel %vm171, %v311, %v254
    %424 = vrot.lane.b32.xlu0 %v174, 33
    %v425 = vpop.permute.xlu0 %424
    %426 = vrot.lane.b32.xlu0 %v312, 33
    %v427 = vpop.permute.xlu0 %426
    %428 = vrot.lane.b32.xlu0 %v257, 33
    %v429 = vpop.permute.xlu0 %428
    %430 = vrot.lane.b32.xlu0 %v177, 33
    %v431 = vpop.permute.xlu0 %430
    %432 = vrot.lane.b32.xlu0 %v313, 33
    %v433 = vpop.permute.xlu0 %432
    %434 = vrot.lane.b32.xlu0 %v259, 33
    %v435 = vpop.permute.xlu0 %434
    %436 = vrot.lane.b32.xlu0 %v180, 33
    %v437 = vpop.permute.xlu0 %436
    %438 = vrot.lane.b32.xlu0 %v314, 33
    %v439 = vpop.permute.xlu0 %438
    %440 = vrot.lane.b32.xlu0 %v261, 33
    %v441 = vpop.permute.xlu0 %440
    %442 = vrot.lane.b32.xlu0 %v183, 33
    %v443 = vpop.permute.xlu0 %442
    %444 = vrot.lane.b32.xlu0 %v315, 33
    %v445 = vpop.permute.xlu0 %444
    %446 = vrot.lane.b32.xlu0 %v263, 33
    %v447 = vpop.permute.xlu0 %446
    %448 = vrot.lane.b32.xlu0 %v186, 33
    %v449 = vpop.permute.xlu0 %448
    %450 = vrot.lane.b32.xlu0 %v316, 33
    %v451 = vpop.permute.xlu0 %450
    %452 = vrot.lane.b32.xlu0 %v265, 33
    %v453 = vpop.permute.xlu0 %452
    %454 = vrot.lane.b32.xlu0 %v189, 33
    %v455 = vpop.permute.xlu0 %454
    %456 = vrot.lane.b32.xlu0 %v317, 33
    %v457 = vpop.permute.xlu0 %456
    %458 = vrot.lane.b32.xlu0 %v267, 33
    %v459 = vpop.permute.xlu0 %458
    %460 = vrot.lane.b32.xlu0 %v192, 33
    %v461 = vpop.permute.xlu0 %460
    %462 = vrot.lane.b32.xlu0 %v318, 33
    %v463 = vpop.permute.xlu0 %462
    %464 = vrot.lane.b32.xlu0 %v269, 33
    %v465 = vpop.permute.xlu0 %464
    %466 = vrot.lane.b32.xlu0 %v195, 33
    %v467 = vpop.permute.xlu0 %466
    %468 = vrot.lane.b32.xlu0 %v319, 33
    %v469 = vpop.permute.xlu0 %468
    %470 = vrot.lane.b32.xlu0 %v271, 33
    %v471 = vpop.permute.xlu0 %470
    %472 = vrot.lane.b32.xlu0 %v198, 33
    %v473 = vpop.permute.xlu0 %472
    %474 = vrot.lane.b32.xlu0 %v320, 33
    %v475 = vpop.permute.xlu0 %474
    %476 = vrot.lane.b32.xlu0 %v273, 33
    %v477 = vpop.permute.xlu0 %476
    %478 = vrot.lane.b32.xlu0 %v201, 33
    %v479 = vpop.permute.xlu0 %478
    %480 = vrot.lane.b32.xlu0 %v321, 33
    %v481 = vpop.permute.xlu0 %480
    %482 = vrot.lane.b32.xlu0 %v275, 33
    %v483 = vpop.permute.xlu0 %482
    %484 = vrot.lane.b32.xlu0 %v204, 33
    %v485 = vpop.permute.xlu0 %484
    %486 = vrot.lane.b32.xlu0 %v322, 33
    %v487 = vpop.permute.xlu0 %486
    %488 = vrot.lane.b32.xlu0 %v277, 33
    %v489 = vpop.permute.xlu0 %488
    %490 = vrot.lane.b32.xlu0 %v207, 33
    %v491 = vpop.permute.xlu0 %490
    %492 = vrot.lane.b32.xlu0 %v323, 33
    %v493 = vpop.permute.xlu0 %492
    %494 = vrot.lane.b32.xlu0 %v279, 33
    %v495 = vpop.permute.xlu0 %494
    %496 = vrot.lane.b32.xlu0 %v210, 33
    %v497 = vpop.permute.xlu0 %496
    %498 = vrot.lane.b32.xlu0 %v324, 33
    %v499 = vpop.permute.xlu0 %498
    %500 = vrot.lane.b32.xlu0 %v281, 33
    %v501 = vpop.permute.xlu0 %500
    %502 = vrot.lane.b32.xlu0 %v213, 33
    %v503 = vpop.permute.xlu0 %502
    %504 = vrot.lane.b32.xlu0 %v325, 33
    %v505 = vpop.permute.xlu0 %504
    %506 = vrot.lane.b32.xlu0 %v283, 33
    %v507 = vpop.permute.xlu0 %506
    %508 = vrot.lane.b32.xlu0 %v216, 33
    %v509 = vpop.permute.xlu0 %508
    %510 = vrot.lane.b32.xlu0 %v326, 33
    %v511 = vpop.permute.xlu0 %510
    %512 = vrot.lane.b32.xlu0 %v285, 33
    %v513 = vpop.permute.xlu0 %512
    %514 = vrot.lane.b32.xlu0 %v219, 33
    %v515 = vpop.permute.xlu0 %514
    %516 = vrot.lane.b32.xlu0 %v327, 33
    %v517 = vpop.permute.xlu0 %516
    %518 = vrot.lane.b32.xlu0 %v287, 33
    %v519 = vpop.permute.xlu0 %518
    %520 = vrot.lane.b32.xlu0 %v222, 33
    %v521 = vpop.permute.xlu0 %520
    %522 = vrot.lane.b32.xlu0 %v328, 33
    %v523 = vpop.permute.xlu0 %522
    %524 = vrot.lane.b32.xlu0 %v289, 33
    %v525 = vpop.permute.xlu0 %524
    %526 = vrot.lane.b32.xlu0 %v225, 33
    %v527 = vpop.permute.xlu0 %526
    %528 = vrot.lane.b32.xlu0 %v329, 33
    %v529 = vpop.permute.xlu0 %528
    %530 = vrot.lane.b32.xlu0 %v291, 33
    %v531 = vpop.permute.xlu0 %530
    %532 = vrot.lane.b32.xlu0 %v228, 33
    %v533 = vpop.permute.xlu0 %532
    %534 = vrot.lane.b32.xlu0 %v330, 33
    %v535 = vpop.permute.xlu0 %534
    %536 = vrot.lane.b32.xlu0 %v293, 33
    %v537 = vpop.permute.xlu0 %536
    %538 = vrot.lane.b32.xlu0 %v231, 33
    %v539 = vpop.permute.xlu0 %538
    %540 = vrot.lane.b32.xlu0 %v331, 33
    %v541 = vpop.permute.xlu0 %540
    %542 = vrot.lane.b32.xlu0 %v295, 33
    %v543 = vpop.permute.xlu0 %542
    %544 = vrot.lane.b32.xlu0 %v234, 33
    %v545 = vpop.permute.xlu0 %544
    %546 = vrot.lane.b32.xlu0 %v332, 33
    %v547 = vpop.permute.xlu0 %546
    %548 = vrot.lane.b32.xlu0 %v297, 33
    %v549 = vpop.permute.xlu0 %548
    %550 = vrot.lane.b32.xlu0 %v237, 33
    %v551 = vpop.permute.xlu0 %550
    %552 = vrot.lane.b32.xlu0 %v333, 33
    %v553 = vpop.permute.xlu0 %552
    %554 = vrot.lane.b32.xlu0 %v299, 33
    %v555 = vpop.permute.xlu0 %554
    %556 = vrot.lane.b32.xlu0 %v240, 33
    %v557 = vpop.permute.xlu0 %556
    %558 = vrot.lane.b32.xlu0 %v334, 33
    %v559 = vpop.permute.xlu0 %558
    %560 = vrot.lane.b32.xlu0 %v301, 33
    %v561 = vpop.permute.xlu0 %560
    %562 = vrot.lane.b32.xlu0 %v243, 33
    %v563 = vpop.permute.xlu0 %562
    %564 = vrot.lane.b32.xlu0 %v335, 33
    %v565 = vpop.permute.xlu0 %564
    %566 = vrot.lane.b32.xlu0 %v303, 33
    %v567 = vpop.permute.xlu0 %566
    %568 = vrot.lane.b32.xlu0 %v246, 33
    %v569 = vpop.permute.xlu0 %568
    %570 = vrot.lane.b32.xlu0 %v336, 33
    %v571 = vpop.permute.xlu0 %570
    %572 = vrot.lane.b32.xlu0 %v305, 33
    %v573 = vpop.permute.xlu0 %572
    %574 = vrot.lane.b32.xlu0 %v249, 33
    %v575 = vpop.permute.xlu0 %574
    %576 = vrot.lane.b32.xlu0 %v337, 33
    %v577 = vpop.permute.xlu0 %576
    %578 = vrot.lane.b32.xlu0 %v307, 33
    %v579 = vpop.permute.xlu0 %578
    %580 = vrot.lane.b32.xlu0 %v252, 33
    %v581 = vpop.permute.xlu0 %580
    %582 = vrot.lane.b32.xlu0 %v338, 33
    %v583 = vpop.permute.xlu0 %582
    %584 = vrot.lane.b32.xlu0 %v309, 33
    %v585 = vpop.permute.xlu0 %584
    %586 = vrot.lane.b32.xlu0 %v255, 33
    %v587 = vpop.permute.xlu0 %586
    %588 = vrot.lane.b32.xlu0 %v339, 33
    %v589 = vpop.permute.xlu0 %588
    %590 = vrot.lane.b32.xlu0 %v311, 33
    %v591 = vpop.permute.xlu0 %590
    %vm592 = vcmask 269312
    %v593 = vsel %vm592, %v425, %v427
    %v594 = vsel %vm592, %v427, %v429
    %v595 = vsel %vm592, %v431, %v433
    %v596 = vsel %vm592, %v433, %v435
    %v597 = vsel %vm592, %v437, %v439
    %v598 = vsel %vm592, %v439, %v441
    %v599 = vsel %vm592, %v443, %v445
    %v600 = vsel %vm592, %v445, %v447
    %v601 = vsel %vm592, %v449, %v451
    %v602 = vsel %vm592, %v451, %v453
    %v603 = vsel %vm592, %v455, %v457
    %v604 = vsel %vm592, %v457, %v459
    %v605 = vsel %vm592, %v461, %v463
    %v606 = vsel %vm592, %v463, %v465
    %v607 = vsel %vm592, %v467, %v469
    %v608 = vsel %vm592, %v469, %v471
    %v609 = vsel %vm592, %v473, %v475
    %v610 = vsel %vm592, %v475, %v477
    %v611 = vsel %vm592, %v479, %v481
    %v612 = vsel %vm592, %v481, %v483
    %v613 = vsel %vm592, %v485, %v487
    %v614 = vsel %vm592, %v487, %v489
    %v615 = vsel %vm592, %v491, %v493
    %v616 = vsel %vm592, %v493, %v495
    %v617 = vsel %vm592, %v497, %v499
    %v618 = vsel %vm592, %v499, %v501
    %v619 = vsel %vm592, %v503, %v505
    %v620 = vsel %vm592, %v505, %v507
    %v621 = vsel %vm592, %v509, %v511
    %v622 = vsel %vm592, %v511, %v513
    %v623 = vsel %vm592, %v515, %v517
    %v624 = vsel %vm592, %v517, %v519
    %v625 = vsel %vm592, %v521, %v523
    %v626 = vsel %vm592, %v523, %v525
    %v627 = vsel %vm592, %v527, %v529
    %v628 = vsel %vm592, %v529, %v531
    %v629 = vsel %vm592, %v533, %v535
    %v630 = vsel %vm592, %v535, %v537
    %v631 = vsel %vm592, %v539, %v541
    %v632 = vsel %vm592, %v541, %v543
    %v633 = vsel %vm592, %v545, %v547
    %v634 = vsel %vm592, %v547, %v549
    %v635 = vsel %vm592, %v551, %v553
    %v636 = vsel %vm592, %v553, %v555
    %v637 = vsel %vm592, %v557, %v559
    %v638 = vsel %vm592, %v559, %v561
    %v639 = vsel %vm592, %v563, %v565
    %v640 = vsel %vm592, %v565, %v567
    %v641 = vsel %vm592, %v569, %v571
    %v642 = vsel %vm592, %v571, %v573
    %v643 = vsel %vm592, %v575, %v577
    %v644 = vsel %vm592, %v577, %v579
    %v645 = vsel %vm592, %v581, %v583
    %v646 = vsel %vm592, %v583, %v585
    %v647 = vsel %vm592, %v587, %v589
    %v648 = vsel %vm592, %v589, %v591
    %v705 = vsel %vm55, %v593, 0.0
    %v706 = vsel %vm56, %v594, 0.0
    %v707 = vsel %vm55, %v595, 0.0
    %v708 = vsel %vm56, %v596, 0.0
    %v709 = vsel %vm55, %v597, 0.0
    %v710 = vsel %vm56, %v598, 0.0
    %v711 = vsel %vm55, %v599, 0.0
    %v712 = vsel %vm56, %v600, 0.0
    %v713 = vsel %vm55, %v601, 0.0
    %v714 = vsel %vm56, %v602, 0.0
    %v715 = vsel %vm55, %v603, 0.0
    %v716 = vsel %vm56, %v604, 0.0
    %v717 = vsel %vm55, %v605, 0.0
    %v718 = vsel %vm56, %v606, 0.0
    %v719 = vsel %vm55, %v607, 0.0
    %v720 = vsel %vm56, %v608, 0.0
    %v721 = vsel %vm55, %v609, 0.0
    %v722 = vsel %vm56, %v610, 0.0
    %v723 = vsel %vm55, %v611, 0.0
    %v724 = vsel %vm56, %v612, 0.0
    %v725 = vsel %vm55, %v613, 0.0
    %v726 = vsel %vm56, %v614, 0.0
    %v727 = vsel %vm55, %v615, 0.0
    %v728 = vsel %vm56, %v616, 0.0
    %v729 = vsel %vm55, %v617, 0.0
    %v730 = vsel %vm56, %v618, 0.0
    %v731 = vsel %vm55, %v619, 0.0
    %v732 = vsel %vm56, %v620, 0.0
    %v733 = vsel %vm55, %v621, 0.0
    %v734 = vsel %vm56, %v622, 0.0
    %v735 = vsel %vm55, %v623, 0.0
    %v736 = vsel %vm56, %v624, 0.0
    %v737 = vsel %vm55, %v625, 0.0
    %v738 = vsel %vm56, %v626, 0.0
    %v739 = vsel %vm55, %v627, 0.0
    %v740 = vsel %vm56, %v628, 0.0
    %v741 = vsel %vm55, %v629, 0.0
    %v742 = vsel %vm56, %v630, 0.0
    %v743 = vsel %vm55, %v631, 0.0
    %v744 = vsel %vm56, %v632, 0.0
    %v745 = vsel %vm55, %v633, 0.0
    %v746 = vsel %vm56, %v634, 0.0
    %v747 = vsel %vm55, %v635, 0.0
    %v748 = vsel %vm56, %v636, 0.0
    %v749 = vsel %vm55, %v637, 0.0
    %v750 = vsel %vm56, %v638, 0.0
    %v751 = vsel %vm55, %v639, 0.0
    %v752 = vsel %vm56, %v640, 0.0
    %v753 = vsel %vm55, %v641, 0.0
    %v754 = vsel %vm56, %v642, 0.0
    %v755 = vsel %vm55, %v643, 0.0
    %v756 = vsel %vm56, %v644, 0.0
    %v757 = vsel %vm55, %v645, 0.0
    %v758 = vsel %vm56, %v646, 0.0
    %v759 = vsel %vm55, %v647, 0.0
    %v760 = vsel %vm56, %v648, 0.0
    %789 = vrot.lane.b32.xlu0 %v115, 127
    %v790 = vpop.permute.xlu0 %789
    %791 = vrot.lane.b32.xlu0 %v174, 127
    %v792 = vpop.permute.xlu0 %791
    %793 = vrot.lane.b32.xlu0 %v117, 127
    %v794 = vpop.permute.xlu0 %793
    %795 = vrot.lane.b32.xlu0 %v177, 127
    %v796 = vpop.permute.xlu0 %795
    %797 = vrot.lane.b32.xlu0 %v119, 127
    %v798 = vpop.permute.xlu0 %797
    %799 = vrot.lane.b32.xlu0 %v180, 127
    %v800 = vpop.permute.xlu0 %799
    %801 = vrot.lane.b32.xlu0 %v121, 127
    %v802 = vpop.permute.xlu0 %801
    %803 = vrot.lane.b32.xlu0 %v183, 127
    %v804 = vpop.permute.xlu0 %803
    %805 = vrot.lane.b32.xlu0 %v123, 127
    %v806 = vpop.permute.xlu0 %805
    %807 = vrot.lane.b32.xlu0 %v186, 127
    %v808 = vpop.permute.xlu0 %807
    %809 = vrot.lane.b32.xlu0 %v125, 127
    %v810 = vpop.permute.xlu0 %809
    %811 = vrot.lane.b32.xlu0 %v189, 127
    %v812 = vpop.permute.xlu0 %811
    %813 = vrot.lane.b32.xlu0 %v127, 127
    %v814 = vpop.permute.xlu0 %813
    %815 = vrot.lane.b32.xlu0 %v192, 127
    %v816 = vpop.permute.xlu0 %815
    %817 = vrot.lane.b32.xlu0 %v129, 127
    %v818 = vpop.permute.xlu0 %817
    %819 = vrot.lane.b32.xlu0 %v195, 127
    %v820 = vpop.permute.xlu0 %819
    %821 = vrot.lane.b32.xlu0 %v131, 127
    %v822 = vpop.permute.xlu0 %821
    %823 = vrot.lane.b32.xlu0 %v198, 127
    %v824 = vpop.permute.xlu0 %823
    %825 = vrot.lane.b32.xlu0 %v133, 127
    %v826 = vpop.permute.xlu0 %825
    %827 = vrot.lane.b32.xlu0 %v201, 127
    %v828 = vpop.permute.xlu0 %827
    %829 = vrot.lane.b32.xlu0 %v135, 127
    %v830 = vpop.permute.xlu0 %829
    %831 = vrot.lane.b32.xlu0 %v204, 127
    %v832 = vpop.permute.xlu0 %831
    %833 = vrot.lane.b32.xlu0 %v137, 127
    %v834 = vpop.permute.xlu0 %833
    %835 = vrot.lane.b32.xlu0 %v207, 127
    %v836 = vpop.permute.xlu0 %835
    %837 = vrot.lane.b32.xlu0 %v139, 127
    %v838 = vpop.permute.xlu0 %837
    %839 = vrot.lane.b32.xlu0 %v210, 127
    %v840 = vpop.permute.xlu0 %839
    %841 = vrot.lane.b32.xlu0 %v141, 127
    %v842 = vpop.permute.xlu0 %841
    %843 = vrot.lane.b32.xlu0 %v213, 127
    %v844 = vpop.permute.xlu0 %843
    %845 = vrot.lane.b32.xlu0 %v143, 127
    %v846 = vpop.permute.xlu0 %845
    %847 = vrot.lane.b32.xlu0 %v216, 127
    %v848 = vpop.permute.xlu0 %847
    %849 = vrot.lane.b32.xlu0 %v145, 127
    %v850 = vpop.permute.xlu0 %849
    %851 = vrot.lane.b32.xlu0 %v219, 127
    %v852 = vpop.permute.xlu0 %851
    %853 = vrot.lane.b32.xlu0 %v147, 127
    %v854 = vpop.permute.xlu0 %853
    %855 = vrot.lane.b32.xlu0 %v222, 127
    %v856 = vpop.permute.xlu0 %855
    %857 = vrot.lane.b32.xlu0 %v149, 127
    %v858 = vpop.permute.xlu0 %857
    %859 = vrot.lane.b32.xlu0 %v225, 127
    %v860 = vpop.permute.xlu0 %859
    %861 = vrot.lane.b32.xlu0 %v151, 127
    %v862 = vpop.permute.xlu0 %861
    %863 = vrot.lane.b32.xlu0 %v228, 127
    %v864 = vpop.permute.xlu0 %863
    %865 = vrot.lane.b32.xlu0 %v153, 127
    %v866 = vpop.permute.xlu0 %865
    %867 = vrot.lane.b32.xlu0 %v231, 127
    %v868 = vpop.permute.xlu0 %867
    %869 = vrot.lane.b32.xlu0 %v155, 127
    %v870 = vpop.permute.xlu0 %869
    %871 = vrot.lane.b32.xlu0 %v234, 127
    %v872 = vpop.permute.xlu0 %871
    %873 = vrot.lane.b32.xlu0 %v157, 127
    %v874 = vpop.permute.xlu0 %873
    %875 = vrot.lane.b32.xlu0 %v237, 127
    %v876 = vpop.permute.xlu0 %875
    %877 = vrot.lane.b32.xlu0 %v159, 127
    %v878 = vpop.permute.xlu0 %877
    %879 = vrot.lane.b32.xlu0 %v240, 127
    %v880 = vpop.permute.xlu0 %879
    %881 = vrot.lane.b32.xlu0 %v161, 127
    %v882 = vpop.permute.xlu0 %881
    %883 = vrot.lane.b32.xlu0 %v243, 127
    %v884 = vpop.permute.xlu0 %883
    %885 = vrot.lane.b32.xlu0 %v163, 127
    %v886 = vpop.permute.xlu0 %885
    %887 = vrot.lane.b32.xlu0 %v246, 127
    %v888 = vpop.permute.xlu0 %887
    %889 = vrot.lane.b32.xlu0 %v165, 127
    %v890 = vpop.permute.xlu0 %889
    %891 = vrot.lane.b32.xlu0 %v249, 127
    %v892 = vpop.permute.xlu0 %891
    %893 = vrot.lane.b32.xlu0 %v167, 127
    %v894 = vpop.permute.xlu0 %893
    %895 = vrot.lane.b32.xlu0 %v252, 127
    %v896 = vpop.permute.xlu0 %895
    %897 = vrot.lane.b32.xlu0 %v169, 127
    %v898 = vpop.permute.xlu0 %897
    %899 = vrot.lane.b32.xlu0 %v255, 127
    %v900 = vpop.permute.xlu0 %899
    %vm901 = vcmask 1039360
    %v902 = vsel %vm901, %v790, %v792
    %v903 = vsel %vm901, %v794, %v796
    %v904 = vsel %vm901, %v798, %v800
    %v905 = vsel %vm901, %v802, %v804
    %v906 = vsel %vm901, %v806, %v808
    %v907 = vsel %vm901, %v810, %v812
    %v908 = vsel %vm901, %v814, %v816
    %v909 = vsel %vm901, %v818, %v820
    %v910 = vsel %vm901, %v822, %v824
    %v911 = vsel %vm901, %v826, %v828
    %v912 = vsel %vm901, %v830, %v832
    %v913 = vsel %vm901, %v834, %v836
    %v914 = vsel %vm901, %v838, %v840
    %v915 = vsel %vm901, %v842, %v844
    %v916 = vsel %vm901, %v846, %v848
    %v917 = vsel %vm901, %v850, %v852
    %v918 = vsel %vm901, %v854, %v856
    %v919 = vsel %vm901, %v858, %v860
    %v920 = vsel %vm901, %v862, %v864
    %v921 = vsel %vm901, %v866, %v868
    %v922 = vsel %vm901, %v870, %v872
    %v923 = vsel %vm901, %v874, %v876
    %v924 = vsel %vm901, %v878, %v880
    %v925 = vsel %vm901, %v882, %v884
    %v926 = vsel %vm901, %v886, %v888
    %v927 = vsel %vm901, %v890, %v892
    %v928 = vsel %vm901, %v894, %v896
    %v929 = vsel %vm901, %v898, %v900
    %v986 = vsel %vm57, %v902, 0.0
    %v987 = vsel %vm58, %v792, 0.0
    %v988 = vsel %vm57, %v903, 0.0
    %v989 = vsel %vm58, %v796, 0.0
    %v990 = vsel %vm57, %v904, 0.0
    %v991 = vsel %vm58, %v800, 0.0
    %v992 = vsel %vm57, %v905, 0.0
    %v993 = vsel %vm58, %v804, 0.0
    %v994 = vsel %vm57, %v906, 0.0
    %v995 = vsel %vm58, %v808, 0.0
    %v996 = vsel %vm57, %v907, 0.0
    %v997 = vsel %vm58, %v812, 0.0
    %v998 = vsel %vm57, %v908, 0.0
    %v999 = vsel %vm58, %v816, 0.0
    %v1000 = vsel %vm57, %v909, 0.0
    %v1001 = vsel %vm58, %v820, 0.0
    %v1002 = vsel %vm57, %v910, 0.0
    %v1003 = vsel %vm58, %v824, 0.0
    %v1004 = vsel %vm57, %v911, 0.0
    %v1005 = vsel %vm58, %v828, 0.0
    %v1006 = vsel %vm57, %v912, 0.0
    %v1007 = vsel %vm58, %v832, 0.0
    %v1008 = vsel %vm57, %v913, 0.0
    %v1009 = vsel %vm58, %v836, 0.0
    %v1010 = vsel %vm57, %v914, 0.0
    %v1011 = vsel %vm58, %v840, 0.0
    %v1012 = vsel %vm57, %v915, 0.0
    %v1013 = vsel %vm58, %v844, 0.0
    %v1014 = vsel %vm57, %v916, 0.0
    %v1015 = vsel %vm58, %v848, 0.0
    %v1016 = vsel %vm57, %v917, 0.0
    %v1017 = vsel %vm58, %v852, 0.0
    %v1018 = vsel %vm57, %v918, 0.0
    %v1019 = vsel %vm58, %v856, 0.0
    %v1020 = vsel %vm57, %v919, 0.0
    %v1021 = vsel %vm58, %v860, 0.0
    %v1022 = vsel %vm57, %v920, 0.0
    %v1023 = vsel %vm58, %v864, 0.0
    %v1024 = vsel %vm57, %v921, 0.0
    %v1025 = vsel %vm58, %v868, 0.0
    %v1026 = vsel %vm57, %v922, 0.0
    %v1027 = vsel %vm58, %v872, 0.0
    %v1028 = vsel %vm57, %v923, 0.0
    %v1029 = vsel %vm58, %v876, 0.0
    %v1030 = vsel %vm57, %v924, 0.0
    %v1031 = vsel %vm58, %v880, 0.0
    %v1032 = vsel %vm57, %v925, 0.0
    %v1033 = vsel %vm58, %v884, 0.0
    %v1034 = vsel %vm57, %v926, 0.0
    %v1035 = vsel %vm58, %v888, 0.0
    %v1036 = vsel %vm57, %v927, 0.0
    %v1037 = vsel %vm58, %v892, 0.0
    %v1038 = vsel %vm57, %v928, 0.0
    %v1039 = vsel %vm58, %v896, 0.0
    %v1040 = vsel %vm57, %v929, 0.0
    %v1041 = vsel %vm58, %v900, 0.0
    %v1042 = vsub.f32 %v705, %v986
    %v1043 = vsub.f32 %v706, %v987
    %v1044 = vsub.f32 %v707, %v988
    %v1045 = vsub.f32 %v708, %v989
    %v1046 = vsub.f32 %v709, %v990
    %v1047 = vsub.f32 %v710, %v991
    %v1048 = vsub.f32 %v711, %v992
    %v1049 = vsub.f32 %v712, %v993
    %v1050 = vsub.f32 %v713, %v994
    %v1051 = vsub.f32 %v714, %v995
    %v1052 = vsub.f32 %v715, %v996
    %v1053 = vsub.f32 %v716, %v997
    %v1054 = vsub.f32 %v717, %v998
    %v1055 = vsub.f32 %v718, %v999
    %v1056 = vsub.f32 %v719, %v1000
    %v1057 = vsub.f32 %v720, %v1001
    %v1058 = vsub.f32 %v721, %v1002
    %v1059 = vsub.f32 %v722, %v1003
    %v1060 = vsub.f32 %v723, %v1004
    %v1061 = vsub.f32 %v724, %v1005
    %v1062 = vsub.f32 %v725, %v1006
    %v1063 = vsub.f32 %v726, %v1007
    %v1064 = vsub.f32 %v727, %v1008
    %v1065 = vsub.f32 %v728, %v1009
    %v1066 = vsub.f32 %v729, %v1010
    %v1067 = vsub.f32 %v730, %v1011
    %v1068 = vsub.f32 %v731, %v1012
    %v1069 = vsub.f32 %v732, %v1013
    %v1070 = vsub.f32 %v733, %v1014
    %v1071 = vsub.f32 %v734, %v1015
    %v1072 = vsub.f32 %v735, %v1016
    %v1073 = vsub.f32 %v736, %v1017
    %v1074 = vsub.f32 %v737, %v1018
    %v1075 = vsub.f32 %v738, %v1019
    %v1076 = vsub.f32 %v739, %v1020
    %v1077 = vsub.f32 %v740, %v1021
    %v1078 = vsub.f32 %v741, %v1022
    %v1079 = vsub.f32 %v742, %v1023
    %v1080 = vsub.f32 %v743, %v1024
    %v1081 = vsub.f32 %v744, %v1025
    %v1082 = vsub.f32 %v745, %v1026
    %v1083 = vsub.f32 %v746, %v1027
    %v1084 = vsub.f32 %v747, %v1028
    %v1085 = vsub.f32 %v748, %v1029
    %v1086 = vsub.f32 %v749, %v1030
    %v1087 = vsub.f32 %v750, %v1031
    %v1088 = vsub.f32 %v751, %v1032
    %v1089 = vsub.f32 %v752, %v1033
    %v1090 = vsub.f32 %v753, %v1034
    %v1091 = vsub.f32 %v754, %v1035
    %v1092 = vsub.f32 %v755, %v1036
    %v1093 = vsub.f32 %v756, %v1037
    %v1094 = vsub.f32 %v757, %v1038
    %v1095 = vsub.f32 %v758, %v1039
    %v1096 = vsub.f32 %v759, %v1040
    %v1097 = vsub.f32 %v760, %v1041
    %v1098 = vadd.f32 %v705, %v986
    %v1099 = vadd.f32 %v706, %v987
    %v1100 = vadd.f32 %v707, %v988
    %v1101 = vadd.f32 %v708, %v989
    %v1102 = vadd.f32 %v709, %v990
    %v1103 = vadd.f32 %v710, %v991
    %v1104 = vadd.f32 %v711, %v992
    %v1105 = vadd.f32 %v712, %v993
    %v1106 = vadd.f32 %v713, %v994
    %v1107 = vadd.f32 %v714, %v995
    %v1108 = vadd.f32 %v715, %v996
    %v1109 = vadd.f32 %v716, %v997
    %v1110 = vadd.f32 %v717, %v998
    %v1111 = vadd.f32 %v718, %v999
    %v1112 = vadd.f32 %v719, %v1000
    %v1113 = vadd.f32 %v720, %v1001
    %v1114 = vadd.f32 %v721, %v1002
    %v1115 = vadd.f32 %v722, %v1003
    %v1116 = vadd.f32 %v723, %v1004
    %v1117 = vadd.f32 %v724, %v1005
    %v1118 = vadd.f32 %v725, %v1006
    %v1119 = vadd.f32 %v726, %v1007
    %v1120 = vadd.f32 %v727, %v1008
    %v1121 = vadd.f32 %v728, %v1009
    %v1122 = vadd.f32 %v729, %v1010
    %v1123 = vadd.f32 %v730, %v1011
    %v1124 = vadd.f32 %v731, %v1012
    %v1125 = vadd.f32 %v732, %v1013
    %v1126 = vadd.f32 %v733, %v1014
    %v1127 = vadd.f32 %v734, %v1015
    %v1128 = vadd.f32 %v735, %v1016
    %v1129 = vadd.f32 %v736, %v1017
    %v1130 = vadd.f32 %v737, %v1018
    %v1131 = vadd.f32 %v738, %v1019
    %v1132 = vadd.f32 %v739, %v1020
    %v1133 = vadd.f32 %v740, %v1021
    %v1134 = vadd.f32 %v741, %v1022
    %v1135 = vadd.f32 %v742, %v1023
    %v1136 = vadd.f32 %v743, %v1024
    %v1137 = vadd.f32 %v744, %v1025
    %v1138 = vadd.f32 %v745, %v1026
    %v1139 = vadd.f32 %v746, %v1027
    %v1140 = vadd.f32 %v747, %v1028
    %v1141 = vadd.f32 %v748, %v1029
    %v1142 = vadd.f32 %v749, %v1030
    %v1143 = vadd.f32 %v750, %v1031
    %v1144 = vadd.f32 %v751, %v1032
    %v1145 = vadd.f32 %v752, %v1033
    %v1146 = vadd.f32 %v753, %v1034
    %v1147 = vadd.f32 %v754, %v1035
    %v1148 = vadd.f32 %v755, %v1036
    %v1149 = vadd.f32 %v756, %v1037
    %v1150 = vadd.f32 %v757, %v1038
    %v1151 = vadd.f32 %v758, %v1039
    %v1152 = vadd.f32 %v759, %v1040
    %v1153 = vadd.f32 %v760, %v1041
    %v1154 = vmul.f32 %v115, 2.0
    %v1155 = vmul.f32 %v116, 2.0
    %v1156 = vmul.f32 %v117, 2.0
    %v1157 = vmul.f32 %v118, 2.0
    %v1158 = vmul.f32 %v119, 2.0
    %v1159 = vmul.f32 %v120, 2.0
    %v1160 = vmul.f32 %v121, 2.0
    %v1161 = vmul.f32 %v122, 2.0
    %v1162 = vmul.f32 %v123, 2.0
    %v1163 = vmul.f32 %v124, 2.0
    %v1164 = vmul.f32 %v125, 2.0
    %v1165 = vmul.f32 %v126, 2.0
    %v1166 = vmul.f32 %v127, 2.0
    %v1167 = vmul.f32 %v128, 2.0
    %v1168 = vmul.f32 %v129, 2.0
    %v1169 = vmul.f32 %v130, 2.0
    %v1170 = vmul.f32 %v131, 2.0
    %v1171 = vmul.f32 %v132, 2.0
    %v1172 = vmul.f32 %v133, 2.0
    %v1173 = vmul.f32 %v134, 2.0
    %v1174 = vmul.f32 %v135, 2.0
    %v1175 = vmul.f32 %v136, 2.0
    %v1176 = vmul.f32 %v137, 2.0
    %v1177 = vmul.f32 %v138, 2.0
    %v1178 = vmul.f32 %v139, 2.0
    %v1179 = vmul.f32 %v140, 2.0
    %v1180 = vmul.f32 %v141, 2.0
    %v1181 = vmul.f32 %v142, 2.0
    %v1182 = vmul.f32 %v143, 2.0
    %v1183 = vmul.f32 %v144, 2.0
    %v1184 = vmul.f32 %v145, 2.0
    %v1185 = vmul.f32 %v146, 2.0
    %v1186 = vmul.f32 %v147, 2.0
    %v1187 = vmul.f32 %v148, 2.0
    %v1188 = vmul.f32 %v149, 2.0
    %v1189 = vmul.f32 %v150, 2.0
    %v1190 = vmul.f32 %v151, 2.0
    %v1191 = vmul.f32 %v152, 2.0
    %v1192 = vmul.f32 %v153, 2.0
    %v1193 = vmul.f32 %v154, 2.0
    %v1194 = vmul.f32 %v155, 2.0
    %v1195 = vmul.f32 %v156, 2.0
    %v1196 = vmul.f32 %v157, 2.0
    %v1197 = vmul.f32 %v158, 2.0
    %v1198 = vmul.f32 %v159, 2.0
    %v1199 = vmul.f32 %v160, 2.0
    %v1200 = vmul.f32 %v161, 2.0
    %v1201 = vmul.f32 %v162, 2.0
    %v1202 = vmul.f32 %v163, 2.0
    %v1203 = vmul.f32 %v164, 2.0
    %v1204 = vmul.f32 %v165, 2.0
    %v1205 = vmul.f32 %v166, 2.0
    %v1206 = vmul.f32 %v167, 2.0
    %v1207 = vmul.f32 %v168, 2.0
    %v1208 = vmul.f32 %v169, 2.0
    %v1209 = vmul.f32 %v170, 2.0
    %v1210 = vadd.f32 %v1098, %v1154
    %v1211 = vadd.f32 %v1099, %v1155
    %v1212 = vadd.f32 %v1100, %v1156
    %v1213 = vadd.f32 %v1101, %v1157
    %v1214 = vadd.f32 %v1102, %v1158
    %v1215 = vadd.f32 %v1103, %v1159
    %v1216 = vadd.f32 %v1104, %v1160
    %v1217 = vadd.f32 %v1105, %v1161
    %v1218 = vadd.f32 %v1106, %v1162
    %v1219 = vadd.f32 %v1107, %v1163
    %v1220 = vadd.f32 %v1108, %v1164
    %v1221 = vadd.f32 %v1109, %v1165
    %v1222 = vadd.f32 %v1110, %v1166
    %v1223 = vadd.f32 %v1111, %v1167
    %v1224 = vadd.f32 %v1112, %v1168
    %v1225 = vadd.f32 %v1113, %v1169
    %v1226 = vadd.f32 %v1114, %v1170
    %v1227 = vadd.f32 %v1115, %v1171
    %v1228 = vadd.f32 %v1116, %v1172
    %v1229 = vadd.f32 %v1117, %v1173
    %v1230 = vadd.f32 %v1118, %v1174
    %v1231 = vadd.f32 %v1119, %v1175
    %v1232 = vadd.f32 %v1120, %v1176
    %v1233 = vadd.f32 %v1121, %v1177
    %v1234 = vadd.f32 %v1122, %v1178
    %v1235 = vadd.f32 %v1123, %v1179
    %v1236 = vadd.f32 %v1124, %v1180
    %v1237 = vadd.f32 %v1125, %v1181
    %v1238 = vadd.f32 %v1126, %v1182
    %v1239 = vadd.f32 %v1127, %v1183
    %v1240 = vadd.f32 %v1128, %v1184
    %v1241 = vadd.f32 %v1129, %v1185
    %v1242 = vadd.f32 %v1130, %v1186
    %v1243 = vadd.f32 %v1131, %v1187
    %v1244 = vadd.f32 %v1132, %v1188
    %v1245 = vadd.f32 %v1133, %v1189
    %v1246 = vadd.f32 %v1134, %v1190
    %v1247 = vadd.f32 %v1135, %v1191
    %v1248 = vadd.f32 %v1136, %v1192
    %v1249 = vadd.f32 %v1137, %v1193
    %v1250 = vadd.f32 %v1138, %v1194
    %v1251 = vadd.f32 %v1139, %v1195
    %v1252 = vadd.f32 %v1140, %v1196
    %v1253 = vadd.f32 %v1141, %v1197
    %v1254 = vadd.f32 %v1142, %v1198
    %v1255 = vadd.f32 %v1143, %v1199
    %v1256 = vadd.f32 %v1144, %v1200
    %v1257 = vadd.f32 %v1145, %v1201
    %v1258 = vadd.f32 %v1146, %v1202
    %v1259 = vadd.f32 %v1147, %v1203
    %v1260 = vadd.f32 %v1148, %v1204
    %v1261 = vadd.f32 %v1149, %v1205
    %v1262 = vadd.f32 %v1150, %v1206
    %v1263 = vadd.f32 %v1151, %v1207
    %v1264 = vadd.f32 %v1152, %v1208
    %v1265 = vadd.f32 %v1153, %v1209
    %v1266 = vrot.slane %v1042, 7
    %v1267 = vrot.slane %v1043, 7
    %v1268 = vrot.slane %v1044, 7
    %v1269 = vrot.slane %v1045, 7
    %v1270 = vrot.slane %v1046, 7
    %v1271 = vrot.slane %v1047, 7
    %v1272 = vrot.slane %v1048, 7
    %v1273 = vrot.slane %v1049, 7
    %v1274 = vrot.slane %v1050, 7
    %v1275 = vrot.slane %v1051, 7
    %v1276 = vrot.slane %v1052, 7
    %v1277 = vrot.slane %v1053, 7
    %v1278 = vrot.slane %v1054, 7
    %v1279 = vrot.slane %v1055, 7
    %v1280 = vrot.slane %v1056, 7
    %v1281 = vrot.slane %v1057, 7
    %v1282 = vrot.slane %v1058, 7
    %v1283 = vrot.slane %v1059, 7
    %v1284 = vrot.slane %v1060, 7
    %v1285 = vrot.slane %v1061, 7
    %v1286 = vrot.slane %v1062, 7
    %v1287 = vrot.slane %v1063, 7
    %v1288 = vrot.slane %v1064, 7
    %v1289 = vrot.slane %v1065, 7
    %v1290 = vrot.slane %v1066, 7
    %v1291 = vrot.slane %v1067, 7
    %v1292 = vrot.slane %v1068, 7
    %v1293 = vrot.slane %v1069, 7
    %v1294 = vrot.slane %v1070, 7
    %v1295 = vrot.slane %v1071, 7
    %v1296 = vrot.slane %v1072, 7
    %v1297 = vrot.slane %v1073, 7
    %v1298 = vrot.slane %v1074, 7
    %v1299 = vrot.slane %v1075, 7
    %v1300 = vrot.slane %v1076, 7
    %v1301 = vrot.slane %v1077, 7
    %v1302 = vrot.slane %v1078, 7
    %v1303 = vrot.slane %v1079, 7
    %v1304 = vrot.slane %v1080, 7
    %v1305 = vrot.slane %v1081, 7
    %v1306 = vrot.slane %v1082, 7
    %v1307 = vrot.slane %v1083, 7
    %v1308 = vrot.slane %v1084, 7
    %v1309 = vrot.slane %v1085, 7
    %v1310 = vrot.slane %v1086, 7
    %v1311 = vrot.slane %v1087, 7
    %v1312 = vrot.slane %v1088, 7
    %v1313 = vrot.slane %v1089, 7
    %v1314 = vrot.slane %v1090, 7
    %v1315 = vrot.slane %v1091, 7
    %v1316 = vrot.slane %v1092, 7
    %v1317 = vrot.slane %v1093, 7
    %v1318 = vrot.slane %v1094, 7
    %v1319 = vrot.slane %v1095, 7
    %v1320 = vrot.slane %v1096, 7
    %v1321 = vrot.slane %v1097, 7
    %vm1322 = vcmp.lt.s32.totalorder %v24, 1
    %v1323 = vsel %vm1322, %v1318, %v1320
    %v1324 = vsel %vm1322, %v1319, %v1321
    %v1325 = vsel %vm1322, %v1316, %v1318
    %v1326 = vsel %vm1322, %v1317, %v1319
    %v1327 = vsel %vm1322, %v1314, %v1316
    %v1328 = vsel %vm1322, %v1315, %v1317
    %v1329 = vsel %vm1322, %v1312, %v1314
    %v1330 = vsel %vm1322, %v1313, %v1315
    %v1331 = vsel %vm1322, %v1310, %v1312
    %v1332 = vsel %vm1322, %v1311, %v1313
    %v1333 = vsel %vm1322, %v1308, %v1310
    %v1334 = vsel %vm1322, %v1309, %v1311
    %v1335 = vsel %vm1322, %v1306, %v1308
    %v1336 = vsel %vm1322, %v1307, %v1309
    %v1337 = vsel %vm1322, %v1304, %v1306
    %v1338 = vsel %vm1322, %v1305, %v1307
    %v1339 = vsel %vm1322, %v1302, %v1304
    %v1340 = vsel %vm1322, %v1303, %v1305
    %v1341 = vsel %vm1322, %v1300, %v1302
    %v1342 = vsel %vm1322, %v1301, %v1303
    %v1343 = vsel %vm1322, %v1298, %v1300
    %v1344 = vsel %vm1322, %v1299, %v1301
    %v1345 = vsel %vm1322, %v1296, %v1298
    %v1346 = vsel %vm1322, %v1297, %v1299
    %v1347 = vsel %vm1322, %v1294, %v1296
    %v1348 = vsel %vm1322, %v1295, %v1297
    %v1349 = vsel %vm1322, %v1292, %v1294
    %v1350 = vsel %vm1322, %v1293, %v1295
    %v1351 = vsel %vm1322, %v1290, %v1292
    %v1352 = vsel %vm1322, %v1291, %v1293
    %v1353 = vsel %vm1322, %v1288, %v1290
    %v1354 = vsel %vm1322, %v1289, %v1291
    %v1355 = vsel %vm1322, %v1286, %v1288
    %v1356 = vsel %vm1322, %v1287, %v1289
    %v1357 = vsel %vm1322, %v1284, %v1286
    %v1358 = vsel %vm1322, %v1285, %v1287
    %v1359 = vsel %vm1322, %v1282, %v1284
    %v1360 = vsel %vm1322, %v1283, %v1285
    %v1361 = vsel %vm1322, %v1280, %v1282
    %v1362 = vsel %vm1322, %v1281, %v1283
    %v1363 = vsel %vm1322, %v1278, %v1280
    %v1364 = vsel %vm1322, %v1279, %v1281
    %v1365 = vsel %vm1322, %v1276, %v1278
    %v1366 = vsel %vm1322, %v1277, %v1279
    %v1367 = vsel %vm1322, %v1274, %v1276
    %v1368 = vsel %vm1322, %v1275, %v1277
    %v1369 = vsel %vm1322, %v1272, %v1274
    %v1370 = vsel %vm1322, %v1273, %v1275
    %v1371 = vsel %vm1322, %v1270, %v1272
    %v1372 = vsel %vm1322, %v1271, %v1273
    %v1373 = vsel %vm1322, %v1268, %v1270
    %v1374 = vsel %vm1322, %v1269, %v1271
    %v1375 = vsel %vm1322, %v1266, %v1268
    %v1376 = vsel %vm1322, %v1267, %v1269
    %v1377 = vsel %vm1322, %v1320, %v1266
    %v1378 = vsel %vm1322, %v1321, %v1267
    %v1379 = vsel %vm59, %v1377, 0.0
    %v1380 = vsel %vm59, %v1378, 0.0
    %v1381 = vsel %vm60, %v1375, 0.0
    %v1382 = vsel %vm60, %v1376, 0.0
    %v1383 = vsel %vm61, %v1373, 0.0
    %v1384 = vsel %vm61, %v1374, 0.0
    %v1385 = vsel %vm62, %v1371, 0.0
    %v1386 = vsel %vm62, %v1372, 0.0
    %v1387 = vsel %vm63, %v1369, 0.0
    %v1388 = vsel %vm63, %v1370, 0.0
    %v1389 = vsel %vm64, %v1367, 0.0
    %v1390 = vsel %vm64, %v1368, 0.0
    %v1391 = vsel %vm65, %v1365, 0.0
    %v1392 = vsel %vm65, %v1366, 0.0
    %v1393 = vsel %vm66, %v1363, 0.0
    %v1394 = vsel %vm66, %v1364, 0.0
    %v1395 = vsel %vm67, %v1361, 0.0
    %v1396 = vsel %vm67, %v1362, 0.0
    %v1397 = vsel %vm68, %v1359, 0.0
    %v1398 = vsel %vm68, %v1360, 0.0
    %v1399 = vsel %vm69, %v1357, 0.0
    %v1400 = vsel %vm69, %v1358, 0.0
    %v1401 = vsel %vm70, %v1355, 0.0
    %v1402 = vsel %vm70, %v1356, 0.0
    %v1403 = vsel %vm71, %v1353, 0.0
    %v1404 = vsel %vm71, %v1354, 0.0
    %v1405 = vsel %vm72, %v1351, 0.0
    %v1406 = vsel %vm72, %v1352, 0.0
    %v1407 = vsel %vm73, %v1349, 0.0
    %v1408 = vsel %vm73, %v1350, 0.0
    %v1409 = vsel %vm74, %v1347, 0.0
    %v1410 = vsel %vm74, %v1348, 0.0
    %v1411 = vsel %vm75, %v1345, 0.0
    %v1412 = vsel %vm75, %v1346, 0.0
    %v1413 = vsel %vm76, %v1343, 0.0
    %v1414 = vsel %vm76, %v1344, 0.0
    %v1415 = vsel %vm77, %v1341, 0.0
    %v1416 = vsel %vm77, %v1342, 0.0
    %v1417 = vsel %vm78, %v1339, 0.0
    %v1418 = vsel %vm78, %v1340, 0.0
    %v1419 = vsel %vm79, %v1337, 0.0
    %v1420 = vsel %vm79, %v1338, 0.0
    %v1421 = vsel %vm80, %v1335, 0.0
    %v1422 = vsel %vm80, %v1336, 0.0
    %v1423 = vsel %vm81, %v1333, 0.0
    %v1424 = vsel %vm81, %v1334, 0.0
    %v1425 = vsel %vm82, %v1331, 0.0
    %v1426 = vsel %vm82, %v1332, 0.0
    %v1427 = vsel %vm83, %v1329, 0.0
    %v1428 = vsel %vm83, %v1330, 0.0
    %v1429 = vsel %vm84, %v1327, 0.0
    %v1430 = vsel %vm84, %v1328, 0.0
    %v1431 = vsel %vm85, %v1325, 0.0
    %v1432 = vsel %vm85, %v1326, 0.0
    %v1433 = vsel %vm86, %v1323, 0.0
    %v1434 = vsel %vm86, %v1324, 0.0
    %v1435 = vrot.slane %v1042, 1
    %v1436 = vrot.slane %v1043, 1
    %v1437 = vrot.slane %v1044, 1
    %v1438 = vrot.slane %v1045, 1
    %v1439 = vrot.slane %v1046, 1
    %v1440 = vrot.slane %v1047, 1
    %v1441 = vrot.slane %v1048, 1
    %v1442 = vrot.slane %v1049, 1
    %v1443 = vrot.slane %v1050, 1
    %v1444 = vrot.slane %v1051, 1
    %v1445 = vrot.slane %v1052, 1
    %v1446 = vrot.slane %v1053, 1
    %v1447 = vrot.slane %v1054, 1
    %v1448 = vrot.slane %v1055, 1
    %v1449 = vrot.slane %v1056, 1
    %v1450 = vrot.slane %v1057, 1
    %v1451 = vrot.slane %v1058, 1
    %v1452 = vrot.slane %v1059, 1
    %v1453 = vrot.slane %v1060, 1
    %v1454 = vrot.slane %v1061, 1
    %v1455 = vrot.slane %v1062, 1
    %v1456 = vrot.slane %v1063, 1
    %v1457 = vrot.slane %v1064, 1
    %v1458 = vrot.slane %v1065, 1
    %v1459 = vrot.slane %v1066, 1
    %v1460 = vrot.slane %v1067, 1
    %v1461 = vrot.slane %v1068, 1
    %v1462 = vrot.slane %v1069, 1
    %v1463 = vrot.slane %v1070, 1
    %v1464 = vrot.slane %v1071, 1
    %v1465 = vrot.slane %v1072, 1
    %v1466 = vrot.slane %v1073, 1
    %v1467 = vrot.slane %v1074, 1
    %v1468 = vrot.slane %v1075, 1
    %v1469 = vrot.slane %v1076, 1
    %v1470 = vrot.slane %v1077, 1
    %v1471 = vrot.slane %v1078, 1
    %v1472 = vrot.slane %v1079, 1
    %v1473 = vrot.slane %v1080, 1
    %v1474 = vrot.slane %v1081, 1
    %v1475 = vrot.slane %v1082, 1
    %v1476 = vrot.slane %v1083, 1
    %v1477 = vrot.slane %v1084, 1
    %v1478 = vrot.slane %v1085, 1
    %v1479 = vrot.slane %v1086, 1
    %v1480 = vrot.slane %v1087, 1
    %v1481 = vrot.slane %v1088, 1
    %v1482 = vrot.slane %v1089, 1
    %v1483 = vrot.slane %v1090, 1
    %v1484 = vrot.slane %v1091, 1
    %v1485 = vrot.slane %v1092, 1
    %v1486 = vrot.slane %v1093, 1
    %v1487 = vrot.slane %v1094, 1
    %v1488 = vrot.slane %v1095, 1
    %v1489 = vrot.slane %v1096, 1
    %v1490 = vrot.slane %v1097, 1
    %vm1491 = vcmp.lt.s32.totalorder %v24, 7
    %v1492 = vsel %vm1491, %v1487, %v1489
    %v1493 = vsel %vm1491, %v1488, %v1490
    %v1494 = vsel %vm1491, %v1485, %v1487
    %v1495 = vsel %vm1491, %v1486, %v1488
    %v1496 = vsel %vm1491, %v1483, %v1485
    %v1497 = vsel %vm1491, %v1484, %v1486
    %v1498 = vsel %vm1491, %v1481, %v1483
    %v1499 = vsel %vm1491, %v1482, %v1484
    %v1500 = vsel %vm1491, %v1479, %v1481
    %v1501 = vsel %vm1491, %v1480, %v1482
    %v1502 = vsel %vm1491, %v1477, %v1479
    %v1503 = vsel %vm1491, %v1478, %v1480
    %v1504 = vsel %vm1491, %v1475, %v1477
    %v1505 = vsel %vm1491, %v1476, %v1478
    %v1506 = vsel %vm1491, %v1473, %v1475
    %v1507 = vsel %vm1491, %v1474, %v1476
    %v1508 = vsel %vm1491, %v1471, %v1473
    %v1509 = vsel %vm1491, %v1472, %v1474
    %v1510 = vsel %vm1491, %v1469, %v1471
    %v1511 = vsel %vm1491, %v1470, %v1472
    %v1512 = vsel %vm1491, %v1467, %v1469
    %v1513 = vsel %vm1491, %v1468, %v1470
    %v1514 = vsel %vm1491, %v1465, %v1467
    %v1515 = vsel %vm1491, %v1466, %v1468
    %v1516 = vsel %vm1491, %v1463, %v1465
    %v1517 = vsel %vm1491, %v1464, %v1466
    %v1518 = vsel %vm1491, %v1461, %v1463
    %v1519 = vsel %vm1491, %v1462, %v1464
    %v1520 = vsel %vm1491, %v1459, %v1461
    %v1521 = vsel %vm1491, %v1460, %v1462
    %v1522 = vsel %vm1491, %v1457, %v1459
    %v1523 = vsel %vm1491, %v1458, %v1460
    %v1524 = vsel %vm1491, %v1455, %v1457
    %v1525 = vsel %vm1491, %v1456, %v1458
    %v1526 = vsel %vm1491, %v1453, %v1455
    %v1527 = vsel %vm1491, %v1454, %v1456
    %v1528 = vsel %vm1491, %v1451, %v1453
    %v1529 = vsel %vm1491, %v1452, %v1454
    %v1530 = vsel %vm1491, %v1449, %v1451
    %v1531 = vsel %vm1491, %v1450, %v1452
    %v1532 = vsel %vm1491, %v1447, %v1449
    %v1533 = vsel %vm1491, %v1448, %v1450
    %v1534 = vsel %vm1491, %v1445, %v1447
    %v1535 = vsel %vm1491, %v1446, %v1448
    %v1536 = vsel %vm1491, %v1443, %v1445
    %v1537 = vsel %vm1491, %v1444, %v1446
    %v1538 = vsel %vm1491, %v1441, %v1443
    %v1539 = vsel %vm1491, %v1442, %v1444
    %v1540 = vsel %vm1491, %v1439, %v1441
    %v1541 = vsel %vm1491, %v1440, %v1442
    %v1542 = vsel %vm1491, %v1437, %v1439
    %v1543 = vsel %vm1491, %v1438, %v1440
    %v1544 = vsel %vm1491, %v1435, %v1437
    %v1545 = vsel %vm1491, %v1436, %v1438
    %v1546 = vsel %vm1491, %v1489, %v1435
    %v1547 = vsel %vm1491, %v1490, %v1436
    %v1548 = vsel %vm87, %v1544, 0.0
    %v1549 = vsel %vm87, %v1545, 0.0
    %v1550 = vsel %vm88, %v1542, 0.0
    %v1551 = vsel %vm88, %v1543, 0.0
    %v1552 = vsel %vm89, %v1540, 0.0
    %v1553 = vsel %vm89, %v1541, 0.0
    %v1554 = vsel %vm90, %v1538, 0.0
    %v1555 = vsel %vm90, %v1539, 0.0
    %v1556 = vsel %vm91, %v1536, 0.0
    %v1557 = vsel %vm91, %v1537, 0.0
    %v1558 = vsel %vm92, %v1534, 0.0
    %v1559 = vsel %vm92, %v1535, 0.0
    %v1560 = vsel %vm93, %v1532, 0.0
    %v1561 = vsel %vm93, %v1533, 0.0
    %v1562 = vsel %vm94, %v1530, 0.0
    %v1563 = vsel %vm94, %v1531, 0.0
    %v1564 = vsel %vm95, %v1528, 0.0
    %v1565 = vsel %vm95, %v1529, 0.0
    %v1566 = vsel %vm96, %v1526, 0.0
    %v1567 = vsel %vm96, %v1527, 0.0
    %v1568 = vsel %vm97, %v1524, 0.0
    %v1569 = vsel %vm97, %v1525, 0.0
    %v1570 = vsel %vm98, %v1522, 0.0
    %v1571 = vsel %vm98, %v1523, 0.0
    %v1572 = vsel %vm99, %v1520, 0.0
    %v1573 = vsel %vm99, %v1521, 0.0
    %v1574 = vsel %vm100, %v1518, 0.0
    %v1575 = vsel %vm100, %v1519, 0.0
    %v1576 = vsel %vm101, %v1516, 0.0
    %v1577 = vsel %vm101, %v1517, 0.0
    %v1578 = vsel %vm102, %v1514, 0.0
    %v1579 = vsel %vm102, %v1515, 0.0
    %v1580 = vsel %vm103, %v1512, 0.0
    %v1581 = vsel %vm103, %v1513, 0.0
    %v1582 = vsel %vm104, %v1510, 0.0
    %v1583 = vsel %vm104, %v1511, 0.0
    %v1584 = vsel %vm105, %v1508, 0.0
    %v1585 = vsel %vm105, %v1509, 0.0
    %v1586 = vsel %vm106, %v1506, 0.0
    %v1587 = vsel %vm106, %v1507, 0.0
    %v1588 = vsel %vm107, %v1504, 0.0
    %v1589 = vsel %vm107, %v1505, 0.0
    %v1590 = vsel %vm108, %v1502, 0.0
    %v1591 = vsel %vm108, %v1503, 0.0
    %v1592 = vsel %vm109, %v1500, 0.0
    %v1593 = vsel %vm109, %v1501, 0.0
    %v1594 = vsel %vm110, %v1498, 0.0
    %v1595 = vsel %vm110, %v1499, 0.0
    %v1596 = vsel %vm111, %v1496, 0.0
    %v1597 = vsel %vm111, %v1497, 0.0
    %v1598 = vsel %vm112, %v1494, 0.0
    %v1599 = vsel %vm112, %v1495, 0.0
    %v1600 = vsel %vm113, %v1492, 0.0
    %v1601 = vsel %vm113, %v1493, 0.0
    %v1602 = vsel %vm114, %v1546, 0.0
    %v1603 = vsel %vm114, %v1547, 0.0
    %v1604 = vmul.f32 %v1042, 2.0
    %v1605 = vmul.f32 %v1043, 2.0
    %v1606 = vmul.f32 %v1044, 2.0
    %v1607 = vmul.f32 %v1045, 2.0
    %v1608 = vmul.f32 %v1046, 2.0
    %v1609 = vmul.f32 %v1047, 2.0
    %v1610 = vmul.f32 %v1048, 2.0
    %v1611 = vmul.f32 %v1049, 2.0
    %v1612 = vmul.f32 %v1050, 2.0
    %v1613 = vmul.f32 %v1051, 2.0
    %v1614 = vmul.f32 %v1052, 2.0
    %v1615 = vmul.f32 %v1053, 2.0
    %v1616 = vmul.f32 %v1054, 2.0
    %v1617 = vmul.f32 %v1055, 2.0
    %v1618 = vmul.f32 %v1056, 2.0
    %v1619 = vmul.f32 %v1057, 2.0
    %v1620 = vmul.f32 %v1058, 2.0
    %v1621 = vmul.f32 %v1059, 2.0
    %v1622 = vmul.f32 %v1060, 2.0
    %v1623 = vmul.f32 %v1061, 2.0
    %v1624 = vmul.f32 %v1062, 2.0
    %v1625 = vmul.f32 %v1063, 2.0
    %v1626 = vmul.f32 %v1064, 2.0
    %v1627 = vmul.f32 %v1065, 2.0
    %v1628 = vmul.f32 %v1066, 2.0
    %v1629 = vmul.f32 %v1067, 2.0
    %v1630 = vmul.f32 %v1068, 2.0
    %v1631 = vmul.f32 %v1069, 2.0
    %v1632 = vmul.f32 %v1070, 2.0
    %v1633 = vmul.f32 %v1071, 2.0
    %v1634 = vmul.f32 %v1072, 2.0
    %v1635 = vmul.f32 %v1073, 2.0
    %v1636 = vmul.f32 %v1074, 2.0
    %v1637 = vmul.f32 %v1075, 2.0
    %v1638 = vmul.f32 %v1076, 2.0
    %v1639 = vmul.f32 %v1077, 2.0
    %v1640 = vmul.f32 %v1078, 2.0
    %v1641 = vmul.f32 %v1079, 2.0
    %v1642 = vmul.f32 %v1080, 2.0
    %v1643 = vmul.f32 %v1081, 2.0
    %v1644 = vmul.f32 %v1082, 2.0
    %v1645 = vmul.f32 %v1083, 2.0
    %v1646 = vmul.f32 %v1084, 2.0
    %v1647 = vmul.f32 %v1085, 2.0
    %v1648 = vmul.f32 %v1086, 2.0
    %v1649 = vmul.f32 %v1087, 2.0
    %v1650 = vmul.f32 %v1088, 2.0
    %v1651 = vmul.f32 %v1089, 2.0
    %v1652 = vmul.f32 %v1090, 2.0
    %v1653 = vmul.f32 %v1091, 2.0
    %v1654 = vmul.f32 %v1092, 2.0
    %v1655 = vmul.f32 %v1093, 2.0
    %v1656 = vmul.f32 %v1094, 2.0
    %v1657 = vmul.f32 %v1095, 2.0
    %v1658 = vmul.f32 %v1096, 2.0
    %v1659 = vmul.f32 %v1097, 2.0
    %v1660 = vadd.f32 %v1379, %v1604
    %v1661 = vadd.f32 %v1380, %v1605
    %v1662 = vadd.f32 %v1381, %v1606
    %v1663 = vadd.f32 %v1382, %v1607
    %v1664 = vadd.f32 %v1383, %v1608
    %v1665 = vadd.f32 %v1384, %v1609
    %v1666 = vadd.f32 %v1385, %v1610
    %v1667 = vadd.f32 %v1386, %v1611
    %v1668 = vadd.f32 %v1387, %v1612
    %v1669 = vadd.f32 %v1388, %v1613
    %v1670 = vadd.f32 %v1389, %v1614
    %v1671 = vadd.f32 %v1390, %v1615
    %v1672 = vadd.f32 %v1391, %v1616
    %v1673 = vadd.f32 %v1392, %v1617
    %v1674 = vadd.f32 %v1393, %v1618
    %v1675 = vadd.f32 %v1394, %v1619
    %v1676 = vadd.f32 %v1395, %v1620
    %v1677 = vadd.f32 %v1396, %v1621
    %v1678 = vadd.f32 %v1397, %v1622
    %v1679 = vadd.f32 %v1398, %v1623
    %v1680 = vadd.f32 %v1399, %v1624
    %v1681 = vadd.f32 %v1400, %v1625
    %v1682 = vadd.f32 %v1401, %v1626
    %v1683 = vadd.f32 %v1402, %v1627
    %v1684 = vadd.f32 %v1403, %v1628
    %v1685 = vadd.f32 %v1404, %v1629
    %v1686 = vadd.f32 %v1405, %v1630
    %v1687 = vadd.f32 %v1406, %v1631
    %v1688 = vadd.f32 %v1407, %v1632
    %v1689 = vadd.f32 %v1408, %v1633
    %v1690 = vadd.f32 %v1409, %v1634
    %v1691 = vadd.f32 %v1410, %v1635
    %v1692 = vadd.f32 %v1411, %v1636
    %v1693 = vadd.f32 %v1412, %v1637
    %v1694 = vadd.f32 %v1413, %v1638
    %v1695 = vadd.f32 %v1414, %v1639
    %v1696 = vadd.f32 %v1415, %v1640
    %v1697 = vadd.f32 %v1416, %v1641
    %v1698 = vadd.f32 %v1417, %v1642
    %v1699 = vadd.f32 %v1418, %v1643
    %v1700 = vadd.f32 %v1419, %v1644
    %v1701 = vadd.f32 %v1420, %v1645
    %v1702 = vadd.f32 %v1421, %v1646
    %v1703 = vadd.f32 %v1422, %v1647
    %v1704 = vadd.f32 %v1423, %v1648
    %v1705 = vadd.f32 %v1424, %v1649
    %v1706 = vadd.f32 %v1425, %v1650
    %v1707 = vadd.f32 %v1426, %v1651
    %v1708 = vadd.f32 %v1427, %v1652
    %v1709 = vadd.f32 %v1428, %v1653
    %v1710 = vadd.f32 %v1429, %v1654
    %v1711 = vadd.f32 %v1430, %v1655
    %v1712 = vadd.f32 %v1431, %v1656
    %v1713 = vadd.f32 %v1432, %v1657
    %v1714 = vadd.f32 %v1433, %v1658
    %v1715 = vadd.f32 %v1434, %v1659
    %v1716 = vadd.f32 %v1660, %v1548
    %v1717 = vadd.f32 %v1661, %v1549
    %v1718 = vadd.f32 %v1662, %v1550
    %v1719 = vadd.f32 %v1663, %v1551
    %v1720 = vadd.f32 %v1664, %v1552
    %v1721 = vadd.f32 %v1665, %v1553
    %v1722 = vadd.f32 %v1666, %v1554
    %v1723 = vadd.f32 %v1667, %v1555
    %v1724 = vadd.f32 %v1668, %v1556
    %v1725 = vadd.f32 %v1669, %v1557
    %v1726 = vadd.f32 %v1670, %v1558
    %v1727 = vadd.f32 %v1671, %v1559
    %v1728 = vadd.f32 %v1672, %v1560
    %v1729 = vadd.f32 %v1673, %v1561
    %v1730 = vadd.f32 %v1674, %v1562
    %v1731 = vadd.f32 %v1675, %v1563
    %v1732 = vadd.f32 %v1676, %v1564
    %v1733 = vadd.f32 %v1677, %v1565
    %v1734 = vadd.f32 %v1678, %v1566
    %v1735 = vadd.f32 %v1679, %v1567
    %v1736 = vadd.f32 %v1680, %v1568
    %v1737 = vadd.f32 %v1681, %v1569
    %v1738 = vadd.f32 %v1682, %v1570
    %v1739 = vadd.f32 %v1683, %v1571
    %v1740 = vadd.f32 %v1684, %v1572
    %v1741 = vadd.f32 %v1685, %v1573
    %v1742 = vadd.f32 %v1686, %v1574
    %v1743 = vadd.f32 %v1687, %v1575
    %v1744 = vadd.f32 %v1688, %v1576
    %v1745 = vadd.f32 %v1689, %v1577
    %v1746 = vadd.f32 %v1690, %v1578
    %v1747 = vadd.f32 %v1691, %v1579
    %v1748 = vadd.f32 %v1692, %v1580
    %v1749 = vadd.f32 %v1693, %v1581
    %v1750 = vadd.f32 %v1694, %v1582
    %v1751 = vadd.f32 %v1695, %v1583
    %v1752 = vadd.f32 %v1696, %v1584
    %v1753 = vadd.f32 %v1697, %v1585
    %v1754 = vadd.f32 %v1698, %v1586
    %v1755 = vadd.f32 %v1699, %v1587
    %v1756 = vadd.f32 %v1700, %v1588
    %v1757 = vadd.f32 %v1701, %v1589
    %v1758 = vadd.f32 %v1702, %v1590
    %v1759 = vadd.f32 %v1703, %v1591
    %v1760 = vadd.f32 %v1704, %v1592
    %v1761 = vadd.f32 %v1705, %v1593
    %v1762 = vadd.f32 %v1706, %v1594
    %v1763 = vadd.f32 %v1707, %v1595
    %v1764 = vadd.f32 %v1708, %v1596
    %v1765 = vadd.f32 %v1709, %v1597
    %v1766 = vadd.f32 %v1710, %v1598
    %v1767 = vadd.f32 %v1711, %v1599
    %v1768 = vadd.f32 %v1712, %v1600
    %v1769 = vadd.f32 %v1713, %v1601
    %v1770 = vadd.f32 %v1714, %v1602
    %v1771 = vadd.f32 %v1715, %v1603
    %v1772 = vmul.f32 %v1716, %v1716
    %v1773 = vmul.f32 %v1717, %v1717
    %v1774 = vmul.f32 %v1718, %v1718
    %v1775 = vmul.f32 %v1719, %v1719
    %v1776 = vmul.f32 %v1720, %v1720
    %v1777 = vmul.f32 %v1721, %v1721
    %v1778 = vmul.f32 %v1722, %v1722
    %v1779 = vmul.f32 %v1723, %v1723
    %v1780 = vmul.f32 %v1724, %v1724
    %v1781 = vmul.f32 %v1725, %v1725
    %v1782 = vmul.f32 %v1726, %v1726
    %v1783 = vmul.f32 %v1727, %v1727
    %v1784 = vmul.f32 %v1728, %v1728
    %v1785 = vmul.f32 %v1729, %v1729
    %v1786 = vmul.f32 %v1730, %v1730
    %v1787 = vmul.f32 %v1731, %v1731
    %v1788 = vmul.f32 %v1732, %v1732
    %v1789 = vmul.f32 %v1733, %v1733
    %v1790 = vmul.f32 %v1734, %v1734
    %v1791 = vmul.f32 %v1735, %v1735
    %v1792 = vmul.f32 %v1736, %v1736
    %v1793 = vmul.f32 %v1737, %v1737
    %v1794 = vmul.f32 %v1738, %v1738
    %v1795 = vmul.f32 %v1739, %v1739
    %v1796 = vmul.f32 %v1740, %v1740
    %v1797 = vmul.f32 %v1741, %v1741
    %v1798 = vmul.f32 %v1742, %v1742
    %v1799 = vmul.f32 %v1743, %v1743
    %v1800 = vmul.f32 %v1744, %v1744
    %v1801 = vmul.f32 %v1745, %v1745
    %v1802 = vmul.f32 %v1746, %v1746
    %v1803 = vmul.f32 %v1747, %v1747
    %v1804 = vmul.f32 %v1748, %v1748
    %v1805 = vmul.f32 %v1749, %v1749
    %v1806 = vmul.f32 %v1750, %v1750
    %v1807 = vmul.f32 %v1751, %v1751
    %v1808 = vmul.f32 %v1752, %v1752
    %v1809 = vmul.f32 %v1753, %v1753
    %v1810 = vmul.f32 %v1754, %v1754
    %v1811 = vmul.f32 %v1755, %v1755
    %v1812 = vmul.f32 %v1756, %v1756
    %v1813 = vmul.f32 %v1757, %v1757
    %v1814 = vmul.f32 %v1758, %v1758
    %v1815 = vmul.f32 %v1759, %v1759
    %v1816 = vmul.f32 %v1760, %v1760
    %v1817 = vmul.f32 %v1761, %v1761
    %v1818 = vmul.f32 %v1762, %v1762
    %v1819 = vmul.f32 %v1763, %v1763
    %v1820 = vmul.f32 %v1764, %v1764
    %v1821 = vmul.f32 %v1765, %v1765
    %v1822 = vmul.f32 %v1766, %v1766
    %v1823 = vmul.f32 %v1767, %v1767
    %v1824 = vmul.f32 %v1768, %v1768
    %v1825 = vmul.f32 %v1769, %v1769
    %v1826 = vmul.f32 %v1770, %v1770
    %v1827 = vmul.f32 %v1771, %v1771
    %v1828 = vrot.slane %v1210, 7
    %v1829 = vrot.slane %v1211, 7
    %v1830 = vrot.slane %v1212, 7
    %v1831 = vrot.slane %v1213, 7
    %v1832 = vrot.slane %v1214, 7
    %v1833 = vrot.slane %v1215, 7
    %v1834 = vrot.slane %v1216, 7
    %v1835 = vrot.slane %v1217, 7
    %v1836 = vrot.slane %v1218, 7
    %v1837 = vrot.slane %v1219, 7
    %v1838 = vrot.slane %v1220, 7
    %v1839 = vrot.slane %v1221, 7
    %v1840 = vrot.slane %v1222, 7
    %v1841 = vrot.slane %v1223, 7
    %v1842 = vrot.slane %v1224, 7
    %v1843 = vrot.slane %v1225, 7
    %v1844 = vrot.slane %v1226, 7
    %v1845 = vrot.slane %v1227, 7
    %v1846 = vrot.slane %v1228, 7
    %v1847 = vrot.slane %v1229, 7
    %v1848 = vrot.slane %v1230, 7
    %v1849 = vrot.slane %v1231, 7
    %v1850 = vrot.slane %v1232, 7
    %v1851 = vrot.slane %v1233, 7
    %v1852 = vrot.slane %v1234, 7
    %v1853 = vrot.slane %v1235, 7
    %v1854 = vrot.slane %v1236, 7
    %v1855 = vrot.slane %v1237, 7
    %v1856 = vrot.slane %v1238, 7
    %v1857 = vrot.slane %v1239, 7
    %v1858 = vrot.slane %v1240, 7
    %v1859 = vrot.slane %v1241, 7
    %v1860 = vrot.slane %v1242, 7
    %v1861 = vrot.slane %v1243, 7
    %v1862 = vrot.slane %v1244, 7
    %v1863 = vrot.slane %v1245, 7
    %v1864 = vrot.slane %v1246, 7
    %v1865 = vrot.slane %v1247, 7
    %v1866 = vrot.slane %v1248, 7
    %v1867 = vrot.slane %v1249, 7
    %v1868 = vrot.slane %v1250, 7
    %v1869 = vrot.slane %v1251, 7
    %v1870 = vrot.slane %v1252, 7
    %v1871 = vrot.slane %v1253, 7
    %v1872 = vrot.slane %v1254, 7
    %v1873 = vrot.slane %v1255, 7
    %v1874 = vrot.slane %v1256, 7
    %v1875 = vrot.slane %v1257, 7
    %v1876 = vrot.slane %v1258, 7
    %v1877 = vrot.slane %v1259, 7
    %v1878 = vrot.slane %v1260, 7
    %v1879 = vrot.slane %v1261, 7
    %v1880 = vrot.slane %v1262, 7
    %v1881 = vrot.slane %v1263, 7
    %v1882 = vrot.slane %v1264, 7
    %v1883 = vrot.slane %v1265, 7
    %v1884 = vsel %vm1322, %v1880, %v1882
    %v1885 = vsel %vm1322, %v1881, %v1883
    %v1886 = vsel %vm1322, %v1878, %v1880
    %v1887 = vsel %vm1322, %v1879, %v1881
    %v1888 = vsel %vm1322, %v1876, %v1878
    %v1889 = vsel %vm1322, %v1877, %v1879
    %v1890 = vsel %vm1322, %v1874, %v1876
    %v1891 = vsel %vm1322, %v1875, %v1877
    %v1892 = vsel %vm1322, %v1872, %v1874
    %v1893 = vsel %vm1322, %v1873, %v1875
    %v1894 = vsel %vm1322, %v1870, %v1872
    %v1895 = vsel %vm1322, %v1871, %v1873
    %v1896 = vsel %vm1322, %v1868, %v1870
    %v1897 = vsel %vm1322, %v1869, %v1871
    %v1898 = vsel %vm1322, %v1866, %v1868
    %v1899 = vsel %vm1322, %v1867, %v1869
    %v1900 = vsel %vm1322, %v1864, %v1866
    %v1901 = vsel %vm1322, %v1865, %v1867
    %v1902 = vsel %vm1322, %v1862, %v1864
    %v1903 = vsel %vm1322, %v1863, %v1865
    %v1904 = vsel %vm1322, %v1860, %v1862
    %v1905 = vsel %vm1322, %v1861, %v1863
    %v1906 = vsel %vm1322, %v1858, %v1860
    %v1907 = vsel %vm1322, %v1859, %v1861
    %v1908 = vsel %vm1322, %v1856, %v1858
    %v1909 = vsel %vm1322, %v1857, %v1859
    %v1910 = vsel %vm1322, %v1854, %v1856
    %v1911 = vsel %vm1322, %v1855, %v1857
    %v1912 = vsel %vm1322, %v1852, %v1854
    %v1913 = vsel %vm1322, %v1853, %v1855
    %v1914 = vsel %vm1322, %v1850, %v1852
    %v1915 = vsel %vm1322, %v1851, %v1853
    %v1916 = vsel %vm1322, %v1848, %v1850
    %v1917 = vsel %vm1322, %v1849, %v1851
    %v1918 = vsel %vm1322, %v1846, %v1848
    %v1919 = vsel %vm1322, %v1847, %v1849
    %v1920 = vsel %vm1322, %v1844, %v1846
    %v1921 = vsel %vm1322, %v1845, %v1847
    %v1922 = vsel %vm1322, %v1842, %v1844
    %v1923 = vsel %vm1322, %v1843, %v1845
    %v1924 = vsel %vm1322, %v1840, %v1842
    %v1925 = vsel %vm1322, %v1841, %v1843
    %v1926 = vsel %vm1322, %v1838, %v1840
    %v1927 = vsel %vm1322, %v1839, %v1841
    %v1928 = vsel %vm1322, %v1836, %v1838
    %v1929 = vsel %vm1322, %v1837, %v1839
    %v1930 = vsel %vm1322, %v1834, %v1836
    %v1931 = vsel %vm1322, %v1835, %v1837
    %v1932 = vsel %vm1322, %v1832, %v1834
    %v1933 = vsel %vm1322, %v1833, %v1835
    %v1934 = vsel %vm1322, %v1830, %v1832
    %v1935 = vsel %vm1322, %v1831, %v1833
    %v1936 = vsel %vm1322, %v1828, %v1830
    %v1937 = vsel %vm1322, %v1829, %v1831
    %v1938 = vsel %vm1322, %v1882, %v1828
    %v1939 = vsel %vm1322, %v1883, %v1829
    %v1940 = vsel %vm59, %v1938, 0.0
    %v1941 = vsel %vm59, %v1939, 0.0
    %v1942 = vsel %vm60, %v1936, 0.0
    %v1943 = vsel %vm60, %v1937, 0.0
    %v1944 = vsel %vm61, %v1934, 0.0
    %v1945 = vsel %vm61, %v1935, 0.0
    %v1946 = vsel %vm62, %v1932, 0.0
    %v1947 = vsel %vm62, %v1933, 0.0
    %v1948 = vsel %vm63, %v1930, 0.0
    %v1949 = vsel %vm63, %v1931, 0.0
    %v1950 = vsel %vm64, %v1928, 0.0
    %v1951 = vsel %vm64, %v1929, 0.0
    %v1952 = vsel %vm65, %v1926, 0.0
    %v1953 = vsel %vm65, %v1927, 0.0
    %v1954 = vsel %vm66, %v1924, 0.0
    %v1955 = vsel %vm66, %v1925, 0.0
    %v1956 = vsel %vm67, %v1922, 0.0
    %v1957 = vsel %vm67, %v1923, 0.0
    %v1958 = vsel %vm68, %v1920, 0.0
    %v1959 = vsel %vm68, %v1921, 0.0
    %v1960 = vsel %vm69, %v1918, 0.0
    %v1961 = vsel %vm69, %v1919, 0.0
    %v1962 = vsel %vm70, %v1916, 0.0
    %v1963 = vsel %vm70, %v1917, 0.0
    %v1964 = vsel %vm71, %v1914, 0.0
    %v1965 = vsel %vm71, %v1915, 0.0
    %v1966 = vsel %vm72, %v1912, 0.0
    %v1967 = vsel %vm72, %v1913, 0.0
    %v1968 = vsel %vm73, %v1910, 0.0
    %v1969 = vsel %vm73, %v1911, 0.0
    %v1970 = vsel %vm74, %v1908, 0.0
    %v1971 = vsel %vm74, %v1909, 0.0
    %v1972 = vsel %vm75, %v1906, 0.0
    %v1973 = vsel %vm75, %v1907, 0.0
    %v1974 = vsel %vm76, %v1904, 0.0
    %v1975 = vsel %vm76, %v1905, 0.0
    %v1976 = vsel %vm77, %v1902, 0.0
    %v1977 = vsel %vm77, %v1903, 0.0
    %v1978 = vsel %vm78, %v1900, 0.0
    %v1979 = vsel %vm78, %v1901, 0.0
    %v1980 = vsel %vm79, %v1898, 0.0
    %v1981 = vsel %vm79, %v1899, 0.0
    %v1982 = vsel %vm80, %v1896, 0.0
    %v1983 = vsel %vm80, %v1897, 0.0
    %v1984 = vsel %vm81, %v1894, 0.0
    %v1985 = vsel %vm81, %v1895, 0.0
    %v1986 = vsel %vm82, %v1892, 0.0
    %v1987 = vsel %vm82, %v1893, 0.0
    %v1988 = vsel %vm83, %v1890, 0.0
    %v1989 = vsel %vm83, %v1891, 0.0
    %v1990 = vsel %vm84, %v1888, 0.0
    %v1991 = vsel %vm84, %v1889, 0.0
    %v1992 = vsel %vm85, %v1886, 0.0
    %v1993 = vsel %vm85, %v1887, 0.0
    %v1994 = vsel %vm86, %v1884, 0.0
    %v1995 = vsel %vm86, %v1885, 0.0
    %v1996 = vrot.slane %v1210, 1
    %v1997 = vrot.slane %v1211, 1
    %v1998 = vrot.slane %v1212, 1
    %v1999 = vrot.slane %v1213, 1
    %v2000 = vrot.slane %v1214, 1
    %v2001 = vrot.slane %v1215, 1
    %v2002 = vrot.slane %v1216, 1
    %v2003 = vrot.slane %v1217, 1
    %v2004 = vrot.slane %v1218, 1
    %v2005 = vrot.slane %v1219, 1
    %v2006 = vrot.slane %v1220, 1
    %v2007 = vrot.slane %v1221, 1
    %v2008 = vrot.slane %v1222, 1
    %v2009 = vrot.slane %v1223, 1
    %v2010 = vrot.slane %v1224, 1
    %v2011 = vrot.slane %v1225, 1
    %v2012 = vrot.slane %v1226, 1
    %v2013 = vrot.slane %v1227, 1
    %v2014 = vrot.slane %v1228, 1
    %v2015 = vrot.slane %v1229, 1
    %v2016 = vrot.slane %v1230, 1
    %v2017 = vrot.slane %v1231, 1
    %v2018 = vrot.slane %v1232, 1
    %v2019 = vrot.slane %v1233, 1
    %v2020 = vrot.slane %v1234, 1
    %v2021 = vrot.slane %v1235, 1
    %v2022 = vrot.slane %v1236, 1
    %v2023 = vrot.slane %v1237, 1
    %v2024 = vrot.slane %v1238, 1
    %v2025 = vrot.slane %v1239, 1
    %v2026 = vrot.slane %v1240, 1
    %v2027 = vrot.slane %v1241, 1
    %v2028 = vrot.slane %v1242, 1
    %v2029 = vrot.slane %v1243, 1
    %v2030 = vrot.slane %v1244, 1
    %v2031 = vrot.slane %v1245, 1
    %v2032 = vrot.slane %v1246, 1
    %v2033 = vrot.slane %v1247, 1
    %v2034 = vrot.slane %v1248, 1
    %v2035 = vrot.slane %v1249, 1
    %v2036 = vrot.slane %v1250, 1
    %v2037 = vrot.slane %v1251, 1
    %v2038 = vrot.slane %v1252, 1
    %v2039 = vrot.slane %v1253, 1
    %v2040 = vrot.slane %v1254, 1
    %v2041 = vrot.slane %v1255, 1
    %v2042 = vrot.slane %v1256, 1
    %v2043 = vrot.slane %v1257, 1
    %v2044 = vrot.slane %v1258, 1
    %v2045 = vrot.slane %v1259, 1
    %v2046 = vrot.slane %v1260, 1
    %v2047 = vrot.slane %v1261, 1
    %v2048 = vrot.slane %v1262, 1
    %v2049 = vrot.slane %v1263, 1
    %v2050 = vrot.slane %v1264, 1
    %v2051 = vrot.slane %v1265, 1
    %v2052 = vsel %vm1491, %v2048, %v2050
    %v2053 = vsel %vm1491, %v2049, %v2051
    %v2054 = vsel %vm1491, %v2046, %v2048
    %v2055 = vsel %vm1491, %v2047, %v2049
    %v2056 = vsel %vm1491, %v2044, %v2046
    %v2057 = vsel %vm1491, %v2045, %v2047
    %v2058 = vsel %vm1491, %v2042, %v2044
    %v2059 = vsel %vm1491, %v2043, %v2045
    %v2060 = vsel %vm1491, %v2040, %v2042
    %v2061 = vsel %vm1491, %v2041, %v2043
    %v2062 = vsel %vm1491, %v2038, %v2040
    %v2063 = vsel %vm1491, %v2039, %v2041
    %v2064 = vsel %vm1491, %v2036, %v2038
    %v2065 = vsel %vm1491, %v2037, %v2039
    %v2066 = vsel %vm1491, %v2034, %v2036
    %v2067 = vsel %vm1491, %v2035, %v2037
    %v2068 = vsel %vm1491, %v2032, %v2034
    %v2069 = vsel %vm1491, %v2033, %v2035
    %v2070 = vsel %vm1491, %v2030, %v2032
    %v2071 = vsel %vm1491, %v2031, %v2033
    %v2072 = vsel %vm1491, %v2028, %v2030
    %v2073 = vsel %vm1491, %v2029, %v2031
    %v2074 = vsel %vm1491, %v2026, %v2028
    %v2075 = vsel %vm1491, %v2027, %v2029
    %v2076 = vsel %vm1491, %v2024, %v2026
    %v2077 = vsel %vm1491, %v2025, %v2027
    %v2078 = vsel %vm1491, %v2022, %v2024
    %v2079 = vsel %vm1491, %v2023, %v2025
    %v2080 = vsel %vm1491, %v2020, %v2022
    %v2081 = vsel %vm1491, %v2021, %v2023
    %v2082 = vsel %vm1491, %v2018, %v2020
    %v2083 = vsel %vm1491, %v2019, %v2021
    %v2084 = vsel %vm1491, %v2016, %v2018
    %v2085 = vsel %vm1491, %v2017, %v2019
    %v2086 = vsel %vm1491, %v2014, %v2016
    %v2087 = vsel %vm1491, %v2015, %v2017
    %v2088 = vsel %vm1491, %v2012, %v2014
    %v2089 = vsel %vm1491, %v2013, %v2015
    %v2090 = vsel %vm1491, %v2010, %v2012
    %v2091 = vsel %vm1491, %v2011, %v2013
    %v2092 = vsel %vm1491, %v2008, %v2010
    %v2093 = vsel %vm1491, %v2009, %v2011
    %v2094 = vsel %vm1491, %v2006, %v2008
    %v2095 = vsel %vm1491, %v2007, %v2009
    %v2096 = vsel %vm1491, %v2004, %v2006
    %v2097 = vsel %vm1491, %v2005, %v2007
    %v2098 = vsel %vm1491, %v2002, %v2004
    %v2099 = vsel %vm1491, %v2003, %v2005
    %v2100 = vsel %vm1491, %v2000, %v2002
    %v2101 = vsel %vm1491, %v2001, %v2003
    %v2102 = vsel %vm1491, %v1998, %v2000
    %v2103 = vsel %vm1491, %v1999, %v2001
    %v2104 = vsel %vm1491, %v1996, %v1998
    %v2105 = vsel %vm1491, %v1997, %v1999
    %v2106 = vsel %vm1491, %v2050, %v1996
    %v2107 = vsel %vm1491, %v2051, %v1997
    %v2108 = vsel %vm87, %v2104, 0.0
    %v2109 = vsel %vm87, %v2105, 0.0
    %v2110 = vsel %vm88, %v2102, 0.0
    %v2111 = vsel %vm88, %v2103, 0.0
    %v2112 = vsel %vm89, %v2100, 0.0
    %v2113 = vsel %vm89, %v2101, 0.0
    %v2114 = vsel %vm90, %v2098, 0.0
    %v2115 = vsel %vm90, %v2099, 0.0
    %v2116 = vsel %vm91, %v2096, 0.0
    %v2117 = vsel %vm91, %v2097, 0.0
    %v2118 = vsel %vm92, %v2094, 0.0
    %v2119 = vsel %vm92, %v2095, 0.0
    %v2120 = vsel %vm93, %v2092, 0.0
    %v2121 = vsel %vm93, %v2093, 0.0
    %v2122 = vsel %vm94, %v2090, 0.0
    %v2123 = vsel %vm94, %v2091, 0.0
    %v2124 = vsel %vm95, %v2088, 0.0
    %v2125 = vsel %vm95, %v2089, 0.0
    %v2126 = vsel %vm96, %v2086, 0.0
    %v2127 = vsel %vm96, %v2087, 0.0
    %v2128 = vsel %vm97, %v2084, 0.0
    %v2129 = vsel %vm97, %v2085, 0.0
    %v2130 = vsel %vm98, %v2082, 0.0
    %v2131 = vsel %vm98, %v2083, 0.0
    %v2132 = vsel %vm99, %v2080, 0.0
    %v2133 = vsel %vm99, %v2081, 0.0
    %v2134 = vsel %vm100, %v2078, 0.0
    %v2135 = vsel %vm100, %v2079, 0.0
    %v2136 = vsel %vm101, %v2076, 0.0
    %v2137 = vsel %vm101, %v2077, 0.0
    %v2138 = vsel %vm102, %v2074, 0.0
    %v2139 = vsel %vm102, %v2075, 0.0
    %v2140 = vsel %vm103, %v2072, 0.0
    %v2141 = vsel %vm103, %v2073, 0.0
    %v2142 = vsel %vm104, %v2070, 0.0
    %v2143 = vsel %vm104, %v2071, 0.0
    %v2144 = vsel %vm105, %v2068, 0.0
    %v2145 = vsel %vm105, %v2069, 0.0
    %v2146 = vsel %vm106, %v2066, 0.0
    %v2147 = vsel %vm106, %v2067, 0.0
    %v2148 = vsel %vm107, %v2064, 0.0
    %v2149 = vsel %vm107, %v2065, 0.0
    %v2150 = vsel %vm108, %v2062, 0.0
    %v2151 = vsel %vm108, %v2063, 0.0
    %v2152 = vsel %vm109, %v2060, 0.0
    %v2153 = vsel %vm109, %v2061, 0.0
    %v2154 = vsel %vm110, %v2058, 0.0
    %v2155 = vsel %vm110, %v2059, 0.0
    %v2156 = vsel %vm111, %v2056, 0.0
    %v2157 = vsel %vm111, %v2057, 0.0
    %v2158 = vsel %vm112, %v2054, 0.0
    %v2159 = vsel %vm112, %v2055, 0.0
    %v2160 = vsel %vm113, %v2052, 0.0
    %v2161 = vsel %vm113, %v2053, 0.0
    %v2162 = vsel %vm114, %v2106, 0.0
    %v2163 = vsel %vm114, %v2107, 0.0
    %v2164 = vsub.f32 %v1940, %v2108
    %v2165 = vsub.f32 %v1941, %v2109
    %v2166 = vsub.f32 %v1942, %v2110
    %v2167 = vsub.f32 %v1943, %v2111
    %v2168 = vsub.f32 %v1944, %v2112
    %v2169 = vsub.f32 %v1945, %v2113
    %v2170 = vsub.f32 %v1946, %v2114
    %v2171 = vsub.f32 %v1947, %v2115
    %v2172 = vsub.f32 %v1948, %v2116
    %v2173 = vsub.f32 %v1949, %v2117
    %v2174 = vsub.f32 %v1950, %v2118
    %v2175 = vsub.f32 %v1951, %v2119
    %v2176 = vsub.f32 %v1952, %v2120
    %v2177 = vsub.f32 %v1953, %v2121
    %v2178 = vsub.f32 %v1954, %v2122
    %v2179 = vsub.f32 %v1955, %v2123
    %v2180 = vsub.f32 %v1956, %v2124
    %v2181 = vsub.f32 %v1957, %v2125
    %v2182 = vsub.f32 %v1958, %v2126
    %v2183 = vsub.f32 %v1959, %v2127
    %v2184 = vsub.f32 %v1960, %v2128
    %v2185 = vsub.f32 %v1961, %v2129
    %v2186 = vsub.f32 %v1962, %v2130
    %v2187 = vsub.f32 %v1963, %v2131
    %v2188 = vsub.f32 %v1964, %v2132
    %v2189 = vsub.f32 %v1965, %v2133
    %v2190 = vsub.f32 %v1966, %v2134
    %v2191 = vsub.f32 %v1967, %v2135
    %v2192 = vsub.f32 %v1968, %v2136
    %v2193 = vsub.f32 %v1969, %v2137
    %v2194 = vsub.f32 %v1970, %v2138
    %v2195 = vsub.f32 %v1971, %v2139
    %v2196 = vsub.f32 %v1972, %v2140
    %v2197 = vsub.f32 %v1973, %v2141
    %v2198 = vsub.f32 %v1974, %v2142
    %v2199 = vsub.f32 %v1975, %v2143
    %v2200 = vsub.f32 %v1976, %v2144
    %v2201 = vsub.f32 %v1977, %v2145
    %v2202 = vsub.f32 %v1978, %v2146
    %v2203 = vsub.f32 %v1979, %v2147
    %v2204 = vsub.f32 %v1980, %v2148
    %v2205 = vsub.f32 %v1981, %v2149
    %v2206 = vsub.f32 %v1982, %v2150
    %v2207 = vsub.f32 %v1983, %v2151
    %v2208 = vsub.f32 %v1984, %v2152
    %v2209 = vsub.f32 %v1985, %v2153
    %v2210 = vsub.f32 %v1986, %v2154
    %v2211 = vsub.f32 %v1987, %v2155
    %v2212 = vsub.f32 %v1988, %v2156
    %v2213 = vsub.f32 %v1989, %v2157
    %v2214 = vsub.f32 %v1990, %v2158
    %v2215 = vsub.f32 %v1991, %v2159
    %v2216 = vsub.f32 %v1992, %v2160
    %v2217 = vsub.f32 %v1993, %v2161
    %v2218 = vsub.f32 %v1994, %v2162
    %v2219 = vsub.f32 %v1995, %v2163
    %v2220 = vmul.f32 %v2164, %v2164
    %v2221 = vmul.f32 %v2165, %v2165
    %v2222 = vmul.f32 %v2166, %v2166
    %v2223 = vmul.f32 %v2167, %v2167
    %v2224 = vmul.f32 %v2168, %v2168
    %v2225 = vmul.f32 %v2169, %v2169
    %v2226 = vmul.f32 %v2170, %v2170
    %v2227 = vmul.f32 %v2171, %v2171
    %v2228 = vmul.f32 %v2172, %v2172
    %v2229 = vmul.f32 %v2173, %v2173
    %v2230 = vmul.f32 %v2174, %v2174
    %v2231 = vmul.f32 %v2175, %v2175
    %v2232 = vmul.f32 %v2176, %v2176
    %v2233 = vmul.f32 %v2177, %v2177
    %v2234 = vmul.f32 %v2178, %v2178
    %v2235 = vmul.f32 %v2179, %v2179
    %v2236 = vmul.f32 %v2180, %v2180
    %v2237 = vmul.f32 %v2181, %v2181
    %v2238 = vmul.f32 %v2182, %v2182
    %v2239 = vmul.f32 %v2183, %v2183
    %v2240 = vmul.f32 %v2184, %v2184
    %v2241 = vmul.f32 %v2185, %v2185
    %v2242 = vmul.f32 %v2186, %v2186
    %v2243 = vmul.f32 %v2187, %v2187
    %v2244 = vmul.f32 %v2188, %v2188
    %v2245 = vmul.f32 %v2189, %v2189
    %v2246 = vmul.f32 %v2190, %v2190
    %v2247 = vmul.f32 %v2191, %v2191
    %v2248 = vmul.f32 %v2192, %v2192
    %v2249 = vmul.f32 %v2193, %v2193
    %v2250 = vmul.f32 %v2194, %v2194
    %v2251 = vmul.f32 %v2195, %v2195
    %v2252 = vmul.f32 %v2196, %v2196
    %v2253 = vmul.f32 %v2197, %v2197
    %v2254 = vmul.f32 %v2198, %v2198
    %v2255 = vmul.f32 %v2199, %v2199
    %v2256 = vmul.f32 %v2200, %v2200
    %v2257 = vmul.f32 %v2201, %v2201
    %v2258 = vmul.f32 %v2202, %v2202
    %v2259 = vmul.f32 %v2203, %v2203
    %v2260 = vmul.f32 %v2204, %v2204
    %v2261 = vmul.f32 %v2205, %v2205
    %v2262 = vmul.f32 %v2206, %v2206
    %v2263 = vmul.f32 %v2207, %v2207
    %v2264 = vmul.f32 %v2208, %v2208
    %v2265 = vmul.f32 %v2209, %v2209
    %v2266 = vmul.f32 %v2210, %v2210
    %v2267 = vmul.f32 %v2211, %v2211
    %v2268 = vmul.f32 %v2212, %v2212
    %v2269 = vmul.f32 %v2213, %v2213
    %v2270 = vmul.f32 %v2214, %v2214
    %v2271 = vmul.f32 %v2215, %v2215
    %v2272 = vmul.f32 %v2216, %v2216
    %v2273 = vmul.f32 %v2217, %v2217
    %v2274 = vmul.f32 %v2218, %v2218
    %v2275 = vmul.f32 %v2219, %v2219
    %v2276 = vadd.f32 %v1772, %v2220
    %v2277 = vadd.f32 %v1773, %v2221
    %v2278 = vadd.f32 %v1774, %v2222
    %v2279 = vadd.f32 %v1775, %v2223
    %v2280 = vadd.f32 %v1776, %v2224
    %v2281 = vadd.f32 %v1777, %v2225
    %v2282 = vadd.f32 %v1778, %v2226
    %v2283 = vadd.f32 %v1779, %v2227
    %v2284 = vadd.f32 %v1780, %v2228
    %v2285 = vadd.f32 %v1781, %v2229
    %v2286 = vadd.f32 %v1782, %v2230
    %v2287 = vadd.f32 %v1783, %v2231
    %v2288 = vadd.f32 %v1784, %v2232
    %v2289 = vadd.f32 %v1785, %v2233
    %v2290 = vadd.f32 %v1786, %v2234
    %v2291 = vadd.f32 %v1787, %v2235
    %v2292 = vadd.f32 %v1788, %v2236
    %v2293 = vadd.f32 %v1789, %v2237
    %v2294 = vadd.f32 %v1790, %v2238
    %v2295 = vadd.f32 %v1791, %v2239
    %v2296 = vadd.f32 %v1792, %v2240
    %v2297 = vadd.f32 %v1793, %v2241
    %v2298 = vadd.f32 %v1794, %v2242
    %v2299 = vadd.f32 %v1795, %v2243
    %v2300 = vadd.f32 %v1796, %v2244
    %v2301 = vadd.f32 %v1797, %v2245
    %v2302 = vadd.f32 %v1798, %v2246
    %v2303 = vadd.f32 %v1799, %v2247
    %v2304 = vadd.f32 %v1800, %v2248
    %v2305 = vadd.f32 %v1801, %v2249
    %v2306 = vadd.f32 %v1802, %v2250
    %v2307 = vadd.f32 %v1803, %v2251
    %v2308 = vadd.f32 %v1804, %v2252
    %v2309 = vadd.f32 %v1805, %v2253
    %v2310 = vadd.f32 %v1806, %v2254
    %v2311 = vadd.f32 %v1807, %v2255
    %v2312 = vadd.f32 %v1808, %v2256
    %v2313 = vadd.f32 %v1809, %v2257
    %v2314 = vadd.f32 %v1810, %v2258
    %v2315 = vadd.f32 %v1811, %v2259
    %v2316 = vadd.f32 %v1812, %v2260
    %v2317 = vadd.f32 %v1813, %v2261
    %v2318 = vadd.f32 %v1814, %v2262
    %v2319 = vadd.f32 %v1815, %v2263
    %v2320 = vadd.f32 %v1816, %v2264
    %v2321 = vadd.f32 %v1817, %v2265
    %v2322 = vadd.f32 %v1818, %v2266
    %v2323 = vadd.f32 %v1819, %v2267
    %v2324 = vadd.f32 %v1820, %v2268
    %v2325 = vadd.f32 %v1821, %v2269
    %v2326 = vadd.f32 %v1822, %v2270
    %v2327 = vadd.f32 %v1823, %v2271
    %v2328 = vadd.f32 %v1824, %v2272
    %v2329 = vadd.f32 %v1825, %v2273
    %v2330 = vadd.f32 %v1826, %v2274
    %v2331 = vadd.f32 %v1827, %v2275
    %v2332 = vrsqrt.pop %v2276
    %v2333 = vmul.f32 %v2276, %v2332
    %vm2334 = vcmp.eq.f32.partialorder %v2276, inf
    %v2335 = vsel %vm2334, %v2276, %v2333
    %vm2336 = vcmp.eq.f32.partialorder %v2276, 0.0
    %v2337 = vand.u32 %v2276, 2147483648
    %v2338 = vsel %vm2336, %v2337, %v2335
    %v2339 = vrsqrt.pop %v2277
    %v2340 = vmul.f32 %v2277, %v2339
    %vm2341 = vcmp.eq.f32.partialorder %v2277, inf
    %v2342 = vsel %vm2341, %v2277, %v2340
    %vm2343 = vcmp.eq.f32.partialorder %v2277, 0.0
    %v2344 = vand.u32 %v2277, 2147483648
    %v2345 = vsel %vm2343, %v2344, %v2342
    %v2346 = vrsqrt.pop %v2278
    %v2347 = vmul.f32 %v2278, %v2346
    %vm2348 = vcmp.eq.f32.partialorder %v2278, inf
    %v2349 = vsel %vm2348, %v2278, %v2347
    %vm2350 = vcmp.eq.f32.partialorder %v2278, 0.0
    %v2351 = vand.u32 %v2278, 2147483648
    %v2352 = vsel %vm2350, %v2351, %v2349
    %v2353 = vrsqrt.pop %v2279
    %v2354 = vmul.f32 %v2279, %v2353
    %vm2355 = vcmp.eq.f32.partialorder %v2279, inf
    %v2356 = vsel %vm2355, %v2279, %v2354
    %vm2357 = vcmp.eq.f32.partialorder %v2279, 0.0
    %v2358 = vand.u32 %v2279, 2147483648
    %v2359 = vsel %vm2357, %v2358, %v2356
    %v2360 = vrsqrt.pop %v2280
    %v2361 = vmul.f32 %v2280, %v2360
    %vm2362 = vcmp.eq.f32.partialorder %v2280, inf
    %v2363 = vsel %vm2362, %v2280, %v2361
    %vm2364 = vcmp.eq.f32.partialorder %v2280, 0.0
    %v2365 = vand.u32 %v2280, 2147483648
    %v2366 = vsel %vm2364, %v2365, %v2363
    %v2367 = vrsqrt.pop %v2281
    %v2368 = vmul.f32 %v2281, %v2367
    %vm2369 = vcmp.eq.f32.partialorder %v2281, inf
    %v2370 = vsel %vm2369, %v2281, %v2368
    %vm2371 = vcmp.eq.f32.partialorder %v2281, 0.0
    %v2372 = vand.u32 %v2281, 2147483648
    %v2373 = vsel %vm2371, %v2372, %v2370
    %v2374 = vrsqrt.pop %v2282
    %v2375 = vmul.f32 %v2282, %v2374
    %vm2376 = vcmp.eq.f32.partialorder %v2282, inf
    %v2377 = vsel %vm2376, %v2282, %v2375
    %vm2378 = vcmp.eq.f32.partialorder %v2282, 0.0
    %v2379 = vand.u32 %v2282, 2147483648
    %v2380 = vsel %vm2378, %v2379, %v2377
    %v2381 = vrsqrt.pop %v2283
    %v2382 = vmul.f32 %v2283, %v2381
    %vm2383 = vcmp.eq.f32.partialorder %v2283, inf
    %v2384 = vsel %vm2383, %v2283, %v2382
    %vm2385 = vcmp.eq.f32.partialorder %v2283, 0.0
    %v2386 = vand.u32 %v2283, 2147483648
    %v2387 = vsel %vm2385, %v2386, %v2384
    %v2388 = vrsqrt.pop %v2284
    %v2389 = vmul.f32 %v2284, %v2388
    %vm2390 = vcmp.eq.f32.partialorder %v2284, inf
    %v2391 = vsel %vm2390, %v2284, %v2389
    %vm2392 = vcmp.eq.f32.partialorder %v2284, 0.0
    %v2393 = vand.u32 %v2284, 2147483648
    %v2394 = vsel %vm2392, %v2393, %v2391
    %v2395 = vrsqrt.pop %v2285
    %v2396 = vmul.f32 %v2285, %v2395
    %vm2397 = vcmp.eq.f32.partialorder %v2285, inf
    %v2398 = vsel %vm2397, %v2285, %v2396
    %vm2399 = vcmp.eq.f32.partialorder %v2285, 0.0
    %v2400 = vand.u32 %v2285, 2147483648
    %v2401 = vsel %vm2399, %v2400, %v2398
    %v2402 = vrsqrt.pop %v2286
    %v2403 = vmul.f32 %v2286, %v2402
    %vm2404 = vcmp.eq.f32.partialorder %v2286, inf
    %v2405 = vsel %vm2404, %v2286, %v2403
    %vm2406 = vcmp.eq.f32.partialorder %v2286, 0.0
    %v2407 = vand.u32 %v2286, 2147483648
    %v2408 = vsel %vm2406, %v2407, %v2405
    %v2409 = vrsqrt.pop %v2287
    %v2410 = vmul.f32 %v2287, %v2409
    %vm2411 = vcmp.eq.f32.partialorder %v2287, inf
    %v2412 = vsel %vm2411, %v2287, %v2410
    %vm2413 = vcmp.eq.f32.partialorder %v2287, 0.0
    %v2414 = vand.u32 %v2287, 2147483648
    %v2415 = vsel %vm2413, %v2414, %v2412
    %v2416 = vrsqrt.pop %v2288
    %v2417 = vmul.f32 %v2288, %v2416
    %vm2418 = vcmp.eq.f32.partialorder %v2288, inf
    %v2419 = vsel %vm2418, %v2288, %v2417
    %vm2420 = vcmp.eq.f32.partialorder %v2288, 0.0
    %v2421 = vand.u32 %v2288, 2147483648
    %v2422 = vsel %vm2420, %v2421, %v2419
    %v2423 = vrsqrt.pop %v2289
    %v2424 = vmul.f32 %v2289, %v2423
    %vm2425 = vcmp.eq.f32.partialorder %v2289, inf
    %v2426 = vsel %vm2425, %v2289, %v2424
    %vm2427 = vcmp.eq.f32.partialorder %v2289, 0.0
    %v2428 = vand.u32 %v2289, 2147483648
    %v2429 = vsel %vm2427, %v2428, %v2426
    %v2430 = vrsqrt.pop %v2290
    %v2431 = vmul.f32 %v2290, %v2430
    %vm2432 = vcmp.eq.f32.partialorder %v2290, inf
    %v2433 = vsel %vm2432, %v2290, %v2431
    %vm2434 = vcmp.eq.f32.partialorder %v2290, 0.0
    %v2435 = vand.u32 %v2290, 2147483648
    %v2436 = vsel %vm2434, %v2435, %v2433
    %v2437 = vrsqrt.pop %v2291
    %v2438 = vmul.f32 %v2291, %v2437
    %vm2439 = vcmp.eq.f32.partialorder %v2291, inf
    %v2440 = vsel %vm2439, %v2291, %v2438
    %vm2441 = vcmp.eq.f32.partialorder %v2291, 0.0
    %v2442 = vand.u32 %v2291, 2147483648
    %v2443 = vsel %vm2441, %v2442, %v2440
    %v2444 = vrsqrt.pop %v2292
    %v2445 = vmul.f32 %v2292, %v2444
    %vm2446 = vcmp.eq.f32.partialorder %v2292, inf
    %v2447 = vsel %vm2446, %v2292, %v2445
    %vm2448 = vcmp.eq.f32.partialorder %v2292, 0.0
    %v2449 = vand.u32 %v2292, 2147483648
    %v2450 = vsel %vm2448, %v2449, %v2447
    %v2451 = vrsqrt.pop %v2293
    %v2452 = vmul.f32 %v2293, %v2451
    %vm2453 = vcmp.eq.f32.partialorder %v2293, inf
    %v2454 = vsel %vm2453, %v2293, %v2452
    %vm2455 = vcmp.eq.f32.partialorder %v2293, 0.0
    %v2456 = vand.u32 %v2293, 2147483648
    %v2457 = vsel %vm2455, %v2456, %v2454
    %v2458 = vrsqrt.pop %v2294
    %v2459 = vmul.f32 %v2294, %v2458
    %vm2460 = vcmp.eq.f32.partialorder %v2294, inf
    %v2461 = vsel %vm2460, %v2294, %v2459
    %vm2462 = vcmp.eq.f32.partialorder %v2294, 0.0
    %v2463 = vand.u32 %v2294, 2147483648
    %v2464 = vsel %vm2462, %v2463, %v2461
    %v2465 = vrsqrt.pop %v2295
    %v2466 = vmul.f32 %v2295, %v2465
    %vm2467 = vcmp.eq.f32.partialorder %v2295, inf
    %v2468 = vsel %vm2467, %v2295, %v2466
    %vm2469 = vcmp.eq.f32.partialorder %v2295, 0.0
    %v2470 = vand.u32 %v2295, 2147483648
    %v2471 = vsel %vm2469, %v2470, %v2468
    %v2472 = vrsqrt.pop %v2296
    %v2473 = vmul.f32 %v2296, %v2472
    %vm2474 = vcmp.eq.f32.partialorder %v2296, inf
    %v2475 = vsel %vm2474, %v2296, %v2473
    %vm2476 = vcmp.eq.f32.partialorder %v2296, 0.0
    %v2477 = vand.u32 %v2296, 2147483648
    %v2478 = vsel %vm2476, %v2477, %v2475
    %v2479 = vrsqrt.pop %v2297
    %v2480 = vmul.f32 %v2297, %v2479
    %vm2481 = vcmp.eq.f32.partialorder %v2297, inf
    %v2482 = vsel %vm2481, %v2297, %v2480
    %vm2483 = vcmp.eq.f32.partialorder %v2297, 0.0
    %v2484 = vand.u32 %v2297, 2147483648
    %v2485 = vsel %vm2483, %v2484, %v2482
    %v2486 = vrsqrt.pop %v2298
    %v2487 = vmul.f32 %v2298, %v2486
    %vm2488 = vcmp.eq.f32.partialorder %v2298, inf
    %v2489 = vsel %vm2488, %v2298, %v2487
    %vm2490 = vcmp.eq.f32.partialorder %v2298, 0.0
    %v2491 = vand.u32 %v2298, 2147483648
    %v2492 = vsel %vm2490, %v2491, %v2489
    %v2493 = vrsqrt.pop %v2299
    %v2494 = vmul.f32 %v2299, %v2493
    %vm2495 = vcmp.eq.f32.partialorder %v2299, inf
    %v2496 = vsel %vm2495, %v2299, %v2494
    %vm2497 = vcmp.eq.f32.partialorder %v2299, 0.0
    %v2498 = vand.u32 %v2299, 2147483648
    %v2499 = vsel %vm2497, %v2498, %v2496
    %v2500 = vrsqrt.pop %v2300
    %v2501 = vmul.f32 %v2300, %v2500
    %vm2502 = vcmp.eq.f32.partialorder %v2300, inf
    %v2503 = vsel %vm2502, %v2300, %v2501
    %vm2504 = vcmp.eq.f32.partialorder %v2300, 0.0
    %v2505 = vand.u32 %v2300, 2147483648
    %v2506 = vsel %vm2504, %v2505, %v2503
    %v2507 = vrsqrt.pop %v2301
    %v2508 = vmul.f32 %v2301, %v2507
    %vm2509 = vcmp.eq.f32.partialorder %v2301, inf
    %v2510 = vsel %vm2509, %v2301, %v2508
    %vm2511 = vcmp.eq.f32.partialorder %v2301, 0.0
    %v2512 = vand.u32 %v2301, 2147483648
    %v2513 = vsel %vm2511, %v2512, %v2510
    %v2514 = vrsqrt.pop %v2302
    %v2515 = vmul.f32 %v2302, %v2514
    %vm2516 = vcmp.eq.f32.partialorder %v2302, inf
    %v2517 = vsel %vm2516, %v2302, %v2515
    %vm2518 = vcmp.eq.f32.partialorder %v2302, 0.0
    %v2519 = vand.u32 %v2302, 2147483648
    %v2520 = vsel %vm2518, %v2519, %v2517
    %v2521 = vrsqrt.pop %v2303
    %v2522 = vmul.f32 %v2303, %v2521
    %vm2523 = vcmp.eq.f32.partialorder %v2303, inf
    %v2524 = vsel %vm2523, %v2303, %v2522
    %vm2525 = vcmp.eq.f32.partialorder %v2303, 0.0
    %v2526 = vand.u32 %v2303, 2147483648
    %v2527 = vsel %vm2525, %v2526, %v2524
    %v2528 = vrsqrt.pop %v2304
    %v2529 = vmul.f32 %v2304, %v2528
    %vm2530 = vcmp.eq.f32.partialorder %v2304, inf
    %v2531 = vsel %vm2530, %v2304, %v2529
    %vm2532 = vcmp.eq.f32.partialorder %v2304, 0.0
    %v2533 = vand.u32 %v2304, 2147483648
    %v2534 = vsel %vm2532, %v2533, %v2531
    %v2535 = vrsqrt.pop %v2305
    %v2536 = vmul.f32 %v2305, %v2535
    %vm2537 = vcmp.eq.f32.partialorder %v2305, inf
    %v2538 = vsel %vm2537, %v2305, %v2536
    %vm2539 = vcmp.eq.f32.partialorder %v2305, 0.0
    %v2540 = vand.u32 %v2305, 2147483648
    %v2541 = vsel %vm2539, %v2540, %v2538
    %v2542 = vrsqrt.pop %v2306
    %v2543 = vmul.f32 %v2306, %v2542
    %vm2544 = vcmp.eq.f32.partialorder %v2306, inf
    %v2545 = vsel %vm2544, %v2306, %v2543
    %vm2546 = vcmp.eq.f32.partialorder %v2306, 0.0
    %v2547 = vand.u32 %v2306, 2147483648
    %v2548 = vsel %vm2546, %v2547, %v2545
    %v2549 = vrsqrt.pop %v2307
    %v2550 = vmul.f32 %v2307, %v2549
    %vm2551 = vcmp.eq.f32.partialorder %v2307, inf
    %v2552 = vsel %vm2551, %v2307, %v2550
    %vm2553 = vcmp.eq.f32.partialorder %v2307, 0.0
    %v2554 = vand.u32 %v2307, 2147483648
    %v2555 = vsel %vm2553, %v2554, %v2552
    %v2556 = vrsqrt.pop %v2308
    %v2557 = vmul.f32 %v2308, %v2556
    %vm2558 = vcmp.eq.f32.partialorder %v2308, inf
    %v2559 = vsel %vm2558, %v2308, %v2557
    %vm2560 = vcmp.eq.f32.partialorder %v2308, 0.0
    %v2561 = vand.u32 %v2308, 2147483648
    %v2562 = vsel %vm2560, %v2561, %v2559
    %v2563 = vrsqrt.pop %v2309
    %v2564 = vmul.f32 %v2309, %v2563
    %vm2565 = vcmp.eq.f32.partialorder %v2309, inf
    %v2566 = vsel %vm2565, %v2309, %v2564
    %vm2567 = vcmp.eq.f32.partialorder %v2309, 0.0
    %v2568 = vand.u32 %v2309, 2147483648
    %v2569 = vsel %vm2567, %v2568, %v2566
    %v2570 = vrsqrt.pop %v2310
    %v2571 = vmul.f32 %v2310, %v2570
    %vm2572 = vcmp.eq.f32.partialorder %v2310, inf
    %v2573 = vsel %vm2572, %v2310, %v2571
    %vm2574 = vcmp.eq.f32.partialorder %v2310, 0.0
    %v2575 = vand.u32 %v2310, 2147483648
    %v2576 = vsel %vm2574, %v2575, %v2573
    %v2577 = vrsqrt.pop %v2311
    %v2578 = vmul.f32 %v2311, %v2577
    %vm2579 = vcmp.eq.f32.partialorder %v2311, inf
    %v2580 = vsel %vm2579, %v2311, %v2578
    %vm2581 = vcmp.eq.f32.partialorder %v2311, 0.0
    %v2582 = vand.u32 %v2311, 2147483648
    %v2583 = vsel %vm2581, %v2582, %v2580
    %v2584 = vrsqrt.pop %v2312
    %v2585 = vmul.f32 %v2312, %v2584
    %vm2586 = vcmp.eq.f32.partialorder %v2312, inf
    %v2587 = vsel %vm2586, %v2312, %v2585
    %vm2588 = vcmp.eq.f32.partialorder %v2312, 0.0
    %v2589 = vand.u32 %v2312, 2147483648
    %v2590 = vsel %vm2588, %v2589, %v2587
    %v2591 = vrsqrt.pop %v2313
    %v2592 = vmul.f32 %v2313, %v2591
    %vm2593 = vcmp.eq.f32.partialorder %v2313, inf
    %v2594 = vsel %vm2593, %v2313, %v2592
    %vm2595 = vcmp.eq.f32.partialorder %v2313, 0.0
    %v2596 = vand.u32 %v2313, 2147483648
    %v2597 = vsel %vm2595, %v2596, %v2594
    %v2598 = vrsqrt.pop %v2314
    %v2599 = vmul.f32 %v2314, %v2598
    %vm2600 = vcmp.eq.f32.partialorder %v2314, inf
    %v2601 = vsel %vm2600, %v2314, %v2599
    %vm2602 = vcmp.eq.f32.partialorder %v2314, 0.0
    %v2603 = vand.u32 %v2314, 2147483648
    %v2604 = vsel %vm2602, %v2603, %v2601
    %v2605 = vrsqrt.pop %v2315
    %v2606 = vmul.f32 %v2315, %v2605
    %vm2607 = vcmp.eq.f32.partialorder %v2315, inf
    %v2608 = vsel %vm2607, %v2315, %v2606
    %vm2609 = vcmp.eq.f32.partialorder %v2315, 0.0
    %v2610 = vand.u32 %v2315, 2147483648
    %v2611 = vsel %vm2609, %v2610, %v2608
    %v2612 = vrsqrt.pop %v2316
    %v2613 = vmul.f32 %v2316, %v2612
    %vm2614 = vcmp.eq.f32.partialorder %v2316, inf
    %v2615 = vsel %vm2614, %v2316, %v2613
    %vm2616 = vcmp.eq.f32.partialorder %v2316, 0.0
    %v2617 = vand.u32 %v2316, 2147483648
    %v2618 = vsel %vm2616, %v2617, %v2615
    %v2619 = vrsqrt.pop %v2317
    %v2620 = vmul.f32 %v2317, %v2619
    %vm2621 = vcmp.eq.f32.partialorder %v2317, inf
    %v2622 = vsel %vm2621, %v2317, %v2620
    %vm2623 = vcmp.eq.f32.partialorder %v2317, 0.0
    %v2624 = vand.u32 %v2317, 2147483648
    %v2625 = vsel %vm2623, %v2624, %v2622
    %v2626 = vrsqrt.pop %v2318
    %v2627 = vmul.f32 %v2318, %v2626
    %vm2628 = vcmp.eq.f32.partialorder %v2318, inf
    %v2629 = vsel %vm2628, %v2318, %v2627
    %vm2630 = vcmp.eq.f32.partialorder %v2318, 0.0
    %v2631 = vand.u32 %v2318, 2147483648
    %v2632 = vsel %vm2630, %v2631, %v2629
    %v2633 = vrsqrt.pop %v2319
    %v2634 = vmul.f32 %v2319, %v2633
    %vm2635 = vcmp.eq.f32.partialorder %v2319, inf
    %v2636 = vsel %vm2635, %v2319, %v2634
    %vm2637 = vcmp.eq.f32.partialorder %v2319, 0.0
    %v2638 = vand.u32 %v2319, 2147483648
    %v2639 = vsel %vm2637, %v2638, %v2636
    %v2640 = vrsqrt.pop %v2320
    %v2641 = vmul.f32 %v2320, %v2640
    %vm2642 = vcmp.eq.f32.partialorder %v2320, inf
    %v2643 = vsel %vm2642, %v2320, %v2641
    %vm2644 = vcmp.eq.f32.partialorder %v2320, 0.0
    %v2645 = vand.u32 %v2320, 2147483648
    %v2646 = vsel %vm2644, %v2645, %v2643
    %v2647 = vrsqrt.pop %v2321
    %v2648 = vmul.f32 %v2321, %v2647
    %vm2649 = vcmp.eq.f32.partialorder %v2321, inf
    %v2650 = vsel %vm2649, %v2321, %v2648
    %vm2651 = vcmp.eq.f32.partialorder %v2321, 0.0
    %v2652 = vand.u32 %v2321, 2147483648
    %v2653 = vsel %vm2651, %v2652, %v2650
    %v2654 = vrsqrt.pop %v2322
    %v2655 = vmul.f32 %v2322, %v2654
    %vm2656 = vcmp.eq.f32.partialorder %v2322, inf
    %v2657 = vsel %vm2656, %v2322, %v2655
    %vm2658 = vcmp.eq.f32.partialorder %v2322, 0.0
    %v2659 = vand.u32 %v2322, 2147483648
    %v2660 = vsel %vm2658, %v2659, %v2657
    %v2661 = vrsqrt.pop %v2323
    %v2662 = vmul.f32 %v2323, %v2661
    %vm2663 = vcmp.eq.f32.partialorder %v2323, inf
    %v2664 = vsel %vm2663, %v2323, %v2662
    %vm2665 = vcmp.eq.f32.partialorder %v2323, 0.0
    %v2666 = vand.u32 %v2323, 2147483648
    %v2667 = vsel %vm2665, %v2666, %v2664
    %v2668 = vrsqrt.pop %v2324
    %v2669 = vmul.f32 %v2324, %v2668
    %vm2670 = vcmp.eq.f32.partialorder %v2324, inf
    %v2671 = vsel %vm2670, %v2324, %v2669
    %vm2672 = vcmp.eq.f32.partialorder %v2324, 0.0
    %v2673 = vand.u32 %v2324, 2147483648
    %v2674 = vsel %vm2672, %v2673, %v2671
    %v2675 = vrsqrt.pop %v2325
    %v2676 = vmul.f32 %v2325, %v2675
    %vm2677 = vcmp.eq.f32.partialorder %v2325, inf
    %v2678 = vsel %vm2677, %v2325, %v2676
    %vm2679 = vcmp.eq.f32.partialorder %v2325, 0.0
    %v2680 = vand.u32 %v2325, 2147483648
    %v2681 = vsel %vm2679, %v2680, %v2678
    %v2682 = vrsqrt.pop %v2326
    %v2683 = vmul.f32 %v2326, %v2682
    %vm2684 = vcmp.eq.f32.partialorder %v2326, inf
    %v2685 = vsel %vm2684, %v2326, %v2683
    %vm2686 = vcmp.eq.f32.partialorder %v2326, 0.0
    %v2687 = vand.u32 %v2326, 2147483648
    %v2688 = vsel %vm2686, %v2687, %v2685
    %v2689 = vrsqrt.pop %v2327
    %v2690 = vmul.f32 %v2327, %v2689
    %vm2691 = vcmp.eq.f32.partialorder %v2327, inf
    %v2692 = vsel %vm2691, %v2327, %v2690
    %vm2693 = vcmp.eq.f32.partialorder %v2327, 0.0
    %v2694 = vand.u32 %v2327, 2147483648
    %v2695 = vsel %vm2693, %v2694, %v2692
    %v2696 = vrsqrt.pop %v2328
    %v2697 = vmul.f32 %v2328, %v2696
    %vm2698 = vcmp.eq.f32.partialorder %v2328, inf
    %v2699 = vsel %vm2698, %v2328, %v2697
    %vm2700 = vcmp.eq.f32.partialorder %v2328, 0.0
    %v2701 = vand.u32 %v2328, 2147483648
    %v2702 = vsel %vm2700, %v2701, %v2699
    %v2703 = vrsqrt.pop %v2329
    %v2704 = vmul.f32 %v2329, %v2703
    %vm2705 = vcmp.eq.f32.partialorder %v2329, inf
    %v2706 = vsel %vm2705, %v2329, %v2704
    %vm2707 = vcmp.eq.f32.partialorder %v2329, 0.0
    %v2708 = vand.u32 %v2329, 2147483648
    %v2709 = vsel %vm2707, %v2708, %v2706
    %v2710 = vrsqrt.pop %v2330
    %v2711 = vmul.f32 %v2330, %v2710
    %vm2712 = vcmp.eq.f32.partialorder %v2330, inf
    %v2713 = vsel %vm2712, %v2330, %v2711
    %vm2714 = vcmp.eq.f32.partialorder %v2330, 0.0
    %v2715 = vand.u32 %v2330, 2147483648
    %v2716 = vsel %vm2714, %v2715, %v2713
    %v2717 = vrsqrt.pop %v2331
    %v2718 = vmul.f32 %v2331, %v2717
    %vm2719 = vcmp.eq.f32.partialorder %v2331, inf
    %v2720 = vsel %vm2719, %v2331, %v2718
    %vm2721 = vcmp.eq.f32.partialorder %v2331, 0.0
    %v2722 = vand.u32 %v2331, 2147483648
    %v2723 = vsel %vm2721, %v2722, %v2720
    %2724 = vst [vmem:[#allocation5] sm:$0xff] %v2338
    %vm2725 = vcmask 785408
    %2726 = vst.msk [vmem:[#allocation5 + $0x8] sm:$0xff] %vm2725, %v2345
    %2727 = vst [vmem:[#allocation5 + $0x10] sm:$0xff] %v2352
    %2728 = vst.msk [vmem:[#allocation5 + $0x18] sm:$0xff] %vm2725, %v2359
    %2729 = vst [vmem:[#allocation5 + $0x20] sm:$0xff] %v2366
    %2730 = vst.msk [vmem:[#allocation5 + $0x28] sm:$0xff] %vm2725, %v2373
    %2731 = vst [vmem:[#allocation5 + $0x30] sm:$0xff] %v2380
    %2732 = vst.msk [vmem:[#allocation5 + $0x38] sm:$0xff] %vm2725, %v2387
    %2733 = vst [vmem:[#allocation5 + $0x40] sm:$0xff] %v2394
    %2734 = vst.msk [vmem:[#allocation5 + $0x48] sm:$0xff] %vm2725, %v2401
    %2735 = vst [vmem:[#allocation5 + $0x50] sm:$0xff] %v2408
    %2736 = vst.msk [vmem:[#allocation5 + $0x58] sm:$0xff] %vm2725, %v2415
    %2737 = vst [vmem:[#allocation5 + $0x60] sm:$0xff] %v2422
    %2738 = vst.msk [vmem:[#allocation5 + $0x68] sm:$0xff] %vm2725, %v2429
    %2739 = vst [vmem:[#allocation5 + $0x70] sm:$0xff] %v2436
    %2740 = vst.msk [vmem:[#allocation5 + $0x78] sm:$0xff] %vm2725, %v2443
    %2741 = vst [vmem:[#allocation5 + $0x80] sm:$0xff] %v2450
    %2742 = vst.msk [vmem:[#allocation5 + $0x88] sm:$0xff] %vm2725, %v2457
    %2743 = vst [vmem:[#allocation5 + $0x90] sm:$0xff] %v2464
    %2744 = vst.msk [vmem:[#allocation5 + $0x98] sm:$0xff] %vm2725, %v2471
    %2745 = vst [vmem:[#allocation5 + $0xa0] sm:$0xff] %v2478
    %2746 = vst.msk [vmem:[#allocation5 + $0xa8] sm:$0xff] %vm2725, %v2485
    %2747 = vst [vmem:[#allocation5 + $0xb0] sm:$0xff] %v2492
    %2748 = vst.msk [vmem:[#allocation5 + $0xb8] sm:$0xff] %vm2725, %v2499
    %2749 = vst [vmem:[#allocation5 + $0xc0] sm:$0xff] %v2506
    %2750 = vst.msk [vmem:[#allocation5 + $0xc8] sm:$0xff] %vm2725, %v2513
    %2751 = vst [vmem:[#allocation5 + $0xd0] sm:$0xff] %v2520
    %2752 = vst.msk [vmem:[#allocation5 + $0xd8] sm:$0xff] %vm2725, %v2527
    %2753 = vst [vmem:[#allocation5 + $0xe0] sm:$0xff] %v2534
    %2754 = vst.msk [vmem:[#allocation5 + $0xe8] sm:$0xff] %vm2725, %v2541
    %2755 = vst [vmem:[#allocation5 + $0xf0] sm:$0xff] %v2548
    %2756 = vst.msk [vmem:[#allocation5 + $0xf8] sm:$0xff] %vm2725, %v2555
    %2757 = vst [vmem:[#allocation5 + $0x100] sm:$0xff] %v2562
    %2758 = vst.msk [vmem:[#allocation5 + $0x108] sm:$0xff] %vm2725, %v2569
    %2759 = vst [vmem:[#allocation5 + $0x110] sm:$0xff] %v2576
    %2760 = vst.msk [vmem:[#allocation5 + $0x118] sm:$0xff] %vm2725, %v2583
    %2761 = vst [vmem:[#allocation5 + $0x120] sm:$0xff] %v2590
    %2762 = vst.msk [vmem:[#allocation5 + $0x128] sm:$0xff] %vm2725, %v2597
    %2763 = vst [vmem:[#allocation5 + $0x130] sm:$0xff] %v2604
    %2764 = vst.msk [vmem:[#allocation5 + $0x138] sm:$0xff] %vm2725, %v2611
    %2765 = vst [vmem:[#allocation5 + $0x140] sm:$0xff] %v2618
    %2766 = vst.msk [vmem:[#allocation5 + $0x148] sm:$0xff] %vm2725, %v2625
    %2767 = vst [vmem:[#allocation5 + $0x150] sm:$0xff] %v2632
    %2768 = vst.msk [vmem:[#allocation5 + $0x158] sm:$0xff] %vm2725, %v2639
    %2769 = vst [vmem:[#allocation5 + $0x160] sm:$0xff] %v2646
    %2770 = vst.msk [vmem:[#allocation5 + $0x168] sm:$0xff] %vm2725, %v2653
    %2771 = vst [vmem:[#allocation5 + $0x170] sm:$0xff] %v2660
    %2772 = vst.msk [vmem:[#allocation5 + $0x178] sm:$0xff] %vm2725, %v2667
    %2773 = vst [vmem:[#allocation5 + $0x180] sm:$0xff] %v2674
    %2774 = vst.msk [vmem:[#allocation5 + $0x188] sm:$0xff] %vm2725, %v2681
    %2775 = vst [vmem:[#allocation5 + $0x190] sm:$0xff] %v2688
    %2776 = vst.msk [vmem:[#allocation5 + $0x198] sm:$0xff] %vm2725, %v2695
    %2777 = vst [vmem:[#allocation5 + $0x1a0] sm:$0xff] %v2702
    %2778 = vst.msk [vmem:[#allocation5 + $0x1a8] sm:$0xff] %vm2725, %v2709
    %2779 = vst [vmem:[#allocation5 + $0x1b0] sm:$0xff] %v2716
    %2780 = vst.msk [vmem:[#allocation5 + $0x1b8] sm:$0xff] %vm2725, %v2723
    %s2781 = scalar_lea.vmem [#allocation2], 448
    %v2782 = vld [vmem:[%s2781] sm:$0xff]
    %v2783 = vld [vmem:[%s2781 + $0x8] sm:$0xff]
    %v2784 = vld [vmem:[%s2781 + $0x10] sm:$0xff]
    %v2785 = vld [vmem:[%s2781 + $0x18] sm:$0xff]
    %v2786 = vld [vmem:[%s2781 + $0x20] sm:$0xff]
    %v2787 = vld [vmem:[%s2781 + $0x28] sm:$0xff]
    %v2788 = vld [vmem:[%s2781 + $0x30] sm:$0xff]
    %v2789 = vld [vmem:[%s2781 + $0x38] sm:$0xff]
    %v2790 = vld [vmem:[%s2781 + $0x40] sm:$0xff]
    %v2791 = vld [vmem:[%s2781 + $0x48] sm:$0xff]
    %v2792 = vld [vmem:[%s2781 + $0x50] sm:$0xff]
    %v2793 = vld [vmem:[%s2781 + $0x58] sm:$0xff]
    %v2794 = vld [vmem:[%s2781 + $0x60] sm:$0xff]
    %v2795 = vld [vmem:[%s2781 + $0x68] sm:$0xff]
    %v2796 = vld [vmem:[%s2781 + $0x70] sm:$0xff]
    %v2797 = vld [vmem:[%s2781 + $0x78] sm:$0xff]
    %v2798 = vld [vmem:[%s2781 + $0x80] sm:$0xff]
    %v2799 = vld [vmem:[%s2781 + $0x88] sm:$0xff]
    %v2800 = vld [vmem:[%s2781 + $0x90] sm:$0xff]
    %v2801 = vld [vmem:[%s2781 + $0x98] sm:$0xff]
    %v2802 = vld [vmem:[%s2781 + $0xa0] sm:$0xff]
    %v2803 = vld [vmem:[%s2781 + $0xa8] sm:$0xff]
    %v2804 = vld [vmem:[%s2781 + $0xb0] sm:$0xff]
    %v2805 = vld [vmem:[%s2781 + $0xb8] sm:$0xff]
    %v2806 = vld [vmem:[%s2781 + $0xc0] sm:$0xff]
    %v2807 = vld [vmem:[%s2781 + $0xc8] sm:$0xff]
    %v2808 = vld [vmem:[%s2781 + $0xd0] sm:$0xff]
    %v2809 = vld [vmem:[%s2781 + $0xd8] sm:$0xff]
    %v2810 = vld [vmem:[%s2781 + $0xe0] sm:$0xff]
    %v2811 = vld [vmem:[%s2781 + $0xe8] sm:$0xff]
    %v2812 = vld [vmem:[%s2781 + $0xf0] sm:$0xff]
    %v2813 = vld [vmem:[%s2781 + $0xf8] sm:$0xff]
    %v2814 = vld [vmem:[%s2781 + $0x100] sm:$0xff]
    %v2815 = vld [vmem:[%s2781 + $0x108] sm:$0xff]
    %v2816 = vld [vmem:[%s2781 + $0x110] sm:$0xff]
    %v2817 = vld [vmem:[%s2781 + $0x118] sm:$0xff]
    %v2818 = vld [vmem:[%s2781 + $0x120] sm:$0xff]
    %v2819 = vld [vmem:[%s2781 + $0x128] sm:$0xff]
    %v2820 = vld [vmem:[%s2781 + $0x130] sm:$0xff]
    %v2821 = vld [vmem:[%s2781 + $0x138] sm:$0xff]
    %v2822 = vld [vmem:[%s2781 + $0x140] sm:$0xff]
    %v2823 = vld [vmem:[%s2781 + $0x148] sm:$0xff]
    %v2824 = vld [vmem:[%s2781 + $0x150] sm:$0xff]
    %v2825 = vld [vmem:[%s2781 + $0x158] sm:$0xff]
    %v2826 = vld [vmem:[%s2781 + $0x160] sm:$0xff]
    %v2827 = vld [vmem:[%s2781 + $0x168] sm:$0xff]
    %v2828 = vld [vmem:[%s2781 + $0x170] sm:$0xff]
    %v2829 = vld [vmem:[%s2781 + $0x178] sm:$0xff]
    %v2830 = vld [vmem:[%s2781 + $0x180] sm:$0xff]
    %v2831 = vld [vmem:[%s2781 + $0x188] sm:$0xff]
    %v2832 = vld [vmem:[%s2781 + $0x190] sm:$0xff]
    %v2833 = vld [vmem:[%s2781 + $0x198] sm:$0xff]
    %v2834 = vld [vmem:[%s2781 + $0x1a0] sm:$0xff]
    %v2835 = vld [vmem:[%s2781 + $0x1a8] sm:$0xff]
    %v2836 = vld [vmem:[%s2781 + $0x1b0] sm:$0xff]
    %v2837 = vld [vmem:[%s2781 + $0x1b8] sm:$0xff]
    %2838 = vrot.lane.b32.xlu0 %v2782, 96
    %v2839 = vpop.permute.xlu0 %2838
    %v2840 = vsel %vm171, %v2839, %v2783
    %2841 = vrot.lane.b32.xlu0 %v2784, 96
    %v2842 = vpop.permute.xlu0 %2841
    %v2843 = vsel %vm171, %v2842, %v2785
    %2844 = vrot.lane.b32.xlu0 %v2786, 96
    %v2845 = vpop.permute.xlu0 %2844
    %v2846 = vsel %vm171, %v2845, %v2787
    %2847 = vrot.lane.b32.xlu0 %v2788, 96
    %v2848 = vpop.permute.xlu0 %2847
    %v2849 = vsel %vm171, %v2848, %v2789
    %2850 = vrot.lane.b32.xlu0 %v2790, 96
    %v2851 = vpop.permute.xlu0 %2850
    %v2852 = vsel %vm171, %v2851, %v2791
    %2853 = vrot.lane.b32.xlu0 %v2792, 96
    %v2854 = vpop.permute.xlu0 %2853
    %v2855 = vsel %vm171, %v2854, %v2793
    %2856 = vrot.lane.b32.xlu0 %v2794, 96
    %v2857 = vpop.permute.xlu0 %2856
    %v2858 = vsel %vm171, %v2857, %v2795
    %2859 = vrot.lane.b32.xlu0 %v2796, 96
    %v2860 = vpop.permute.xlu0 %2859
    %v2861 = vsel %vm171, %v2860, %v2797
    %2862 = vrot.lane.b32.xlu0 %v2798, 96
    %v2863 = vpop.permute.xlu0 %2862
    %v2864 = vsel %vm171, %v2863, %v2799
    %2865 = vrot.lane.b32.xlu0 %v2800, 96
    %v2866 = vpop.permute.xlu0 %2865
    %v2867 = vsel %vm171, %v2866, %v2801
    %2868 = vrot.lane.b32.xlu0 %v2802, 96
    %v2869 = vpop.permute.xlu0 %2868
    %v2870 = vsel %vm171, %v2869, %v2803
    %2871 = vrot.lane.b32.xlu0 %v2804, 96
    %v2872 = vpop.permute.xlu0 %2871
    %v2873 = vsel %vm171, %v2872, %v2805
    %2874 = vrot.lane.b32.xlu0 %v2806, 96
    %v2875 = vpop.permute.xlu0 %2874
    %v2876 = vsel %vm171, %v2875, %v2807
    %2877 = vrot.lane.b32.xlu0 %v2808, 96
    %v2878 = vpop.permute.xlu0 %2877
    %v2879 = vsel %vm171, %v2878, %v2809
    %2880 = vrot.lane.b32.xlu0 %v2810, 96
    %v2881 = vpop.permute.xlu0 %2880
    %v2882 = vsel %vm171, %v2881, %v2811
    %2883 = vrot.lane.b32.xlu0 %v2812, 96
    %v2884 = vpop.permute.xlu0 %2883
    %v2885 = vsel %vm171, %v2884, %v2813
    %2886 = vrot.lane.b32.xlu0 %v2814, 96
    %v2887 = vpop.permute.xlu0 %2886
    %v2888 = vsel %vm171, %v2887, %v2815
    %2889 = vrot.lane.b32.xlu0 %v2816, 96
    %v2890 = vpop.permute.xlu0 %2889
    %v2891 = vsel %vm171, %v2890, %v2817
    %2892 = vrot.lane.b32.xlu0 %v2818, 96
    %v2893 = vpop.permute.xlu0 %2892
    %v2894 = vsel %vm171, %v2893, %v2819
    %2895 = vrot.lane.b32.xlu0 %v2820, 96
    %v2896 = vpop.permute.xlu0 %2895
    %v2897 = vsel %vm171, %v2896, %v2821
    %2898 = vrot.lane.b32.xlu0 %v2822, 96
    %v2899 = vpop.permute.xlu0 %2898
    %v2900 = vsel %vm171, %v2899, %v2823
    %2901 = vrot.lane.b32.xlu0 %v2824, 96
    %v2902 = vpop.permute.xlu0 %2901
    %v2903 = vsel %vm171, %v2902, %v2825
    %2904 = vrot.lane.b32.xlu0 %v2826, 96
    %v2905 = vpop.permute.xlu0 %2904
    %v2906 = vsel %vm171, %v2905, %v2827
    %2907 = vrot.lane.b32.xlu0 %v2828, 96
    %v2908 = vpop.permute.xlu0 %2907
    %v2909 = vsel %vm171, %v2908, %v2829
    %2910 = vrot.lane.b32.xlu0 %v2830, 96
    %v2911 = vpop.permute.xlu0 %2910
    %v2912 = vsel %vm171, %v2911, %v2831
    %2913 = vrot.lane.b32.xlu0 %v2832, 96
    %v2914 = vpop.permute.xlu0 %2913
    %v2915 = vsel %vm171, %v2914, %v2833
    %2916 = vrot.lane.b32.xlu0 %v2834, 96
    %v2917 = vpop.permute.xlu0 %2916
    %v2918 = vsel %vm171, %v2917, %v2835
    %2919 = vrot.lane.b32.xlu0 %v2836, 96
    %v2920 = vpop.permute.xlu0 %2919
    %v2921 = vsel %vm171, %v2920, %v2837
    %2922 = vrot.lane.b32.xlu0 %v2840, 96
    %v2923 = vpop.permute.xlu0 %2922
    %2924 = vrot.lane.b32.xlu0 %v2843, 96
    %v2925 = vpop.permute.xlu0 %2924
    %2926 = vrot.lane.b32.xlu0 %v2846, 96
    %v2927 = vpop.permute.xlu0 %2926
    %2928 = vrot.lane.b32.xlu0 %v2849, 96
    %v2929 = vpop.permute.xlu0 %2928
    %2930 = vrot.lane.b32.xlu0 %v2852, 96
    %v2931 = vpop.permute.xlu0 %2930
    %2932 = vrot.lane.b32.xlu0 %v2855, 96
    %v2933 = vpop.permute.xlu0 %2932
    %2934 = vrot.lane.b32.xlu0 %v2858, 96
    %v2935 = vpop.permute.xlu0 %2934
    %2936 = vrot.lane.b32.xlu0 %v2861, 96
    %v2937 = vpop.permute.xlu0 %2936
    %2938 = vrot.lane.b32.xlu0 %v2864, 96
    %v2939 = vpop.permute.xlu0 %2938
    %2940 = vrot.lane.b32.xlu0 %v2867, 96
    %v2941 = vpop.permute.xlu0 %2940
    %2942 = vrot.lane.b32.xlu0 %v2870, 96
    %v2943 = vpop.permute.xlu0 %2942
    %2944 = vrot.lane.b32.xlu0 %v2873, 96
    %v2945 = vpop.permute.xlu0 %2944
    %2946 = vrot.lane.b32.xlu0 %v2876, 96
    %v2947 = vpop.permute.xlu0 %2946
    %2948 = vrot.lane.b32.xlu0 %v2879, 96
    %v2949 = vpop.permute.xlu0 %2948
    %2950 = vrot.lane.b32.xlu0 %v2882, 96
    %v2951 = vpop.permute.xlu0 %2950
    %2952 = vrot.lane.b32.xlu0 %v2885, 96
    %v2953 = vpop.permute.xlu0 %2952
    %2954 = vrot.lane.b32.xlu0 %v2888, 96
    %v2955 = vpop.permute.xlu0 %2954
    %2956 = vrot.lane.b32.xlu0 %v2891, 96
    %v2957 = vpop.permute.xlu0 %2956
    %2958 = vrot.lane.b32.xlu0 %v2894, 96
    %v2959 = vpop.permute.xlu0 %2958
    %2960 = vrot.lane.b32.xlu0 %v2897, 96
    %v2961 = vpop.permute.xlu0 %2960
    %2962 = vrot.lane.b32.xlu0 %v2900, 96
    %v2963 = vpop.permute.xlu0 %2962
    %2964 = vrot.lane.b32.xlu0 %v2903, 96
    %v2965 = vpop.permute.xlu0 %2964
    %2966 = vrot.lane.b32.xlu0 %v2906, 96
    %v2967 = vpop.permute.xlu0 %2966
    %2968 = vrot.lane.b32.xlu0 %v2909, 96
    %v2969 = vpop.permute.xlu0 %2968
    %2970 = vrot.lane.b32.xlu0 %v2912, 96
    %v2971 = vpop.permute.xlu0 %2970
    %2972 = vrot.lane.b32.xlu0 %v2915, 96
    %v2973 = vpop.permute.xlu0 %2972
    %2974 = vrot.lane.b32.xlu0 %v2918, 96
    %v2975 = vpop.permute.xlu0 %2974
    %2976 = vrot.lane.b32.xlu0 %v2921, 96
    %v2977 = vpop.permute.xlu0 %2976
    %v2978 = vsel %vm171, %v2923, %v2839
    %v2979 = vsel %vm171, %v2925, %v2842
    %v2980 = vsel %vm171, %v2927, %v2845
    %v2981 = vsel %vm171, %v2929, %v2848
    %v2982 = vsel %vm171, %v2931, %v2851
    %v2983 = vsel %vm171, %v2933, %v2854
    %v2984 = vsel %vm171, %v2935, %v2857
    %v2985 = vsel %vm171, %v2937, %v2860
    %v2986 = vsel %vm171, %v2939, %v2863
    %v2987 = vsel %vm171, %v2941, %v2866
    %v2988 = vsel %vm171, %v2943, %v2869
    %v2989 = vsel %vm171, %v2945, %v2872
    %v2990 = vsel %vm171, %v2947, %v2875
    %v2991 = vsel %vm171, %v2949, %v2878
    %v2992 = vsel %vm171, %v2951, %v2881
    %v2993 = vsel %vm171, %v2953, %v2884
    %v2994 = vsel %vm171, %v2955, %v2887
    %v2995 = vsel %vm171, %v2957, %v2890
    %v2996 = vsel %vm171, %v2959, %v2893
    %v2997 = vsel %vm171, %v2961, %v2896
    %v2998 = vsel %vm171, %v2963, %v2899
    %v2999 = vsel %vm171, %v2965, %v2902
    %v3000 = vsel %vm171, %v2967, %v2905
    %v3001 = vsel %vm171, %v2969, %v2908
    %v3002 = vsel %vm171, %v2971, %v2911
    %v3003 = vsel %vm171, %v2973, %v2914
    %v3004 = vsel %vm171, %v2975, %v2917
    %v3005 = vsel %vm171, %v2977, %v2920
    %3090 = vrot.lane.b32.xlu0 %v2840, 33
    %v3091 = vpop.permute.xlu0 %3090
    %3092 = vrot.lane.b32.xlu0 %v2978, 33
    %v3093 = vpop.permute.xlu0 %3092
    %3094 = vrot.lane.b32.xlu0 %v2923, 33
    %v3095 = vpop.permute.xlu0 %3094
    %3096 = vrot.lane.b32.xlu0 %v2843, 33
    %v3097 = vpop.permute.xlu0 %3096
    %3098 = vrot.lane.b32.xlu0 %v2979, 33
    %v3099 = vpop.permute.xlu0 %3098
    %3100 = vrot.lane.b32.xlu0 %v2925, 33
    %v3101 = vpop.permute.xlu0 %3100
    %3102 = vrot.lane.b32.xlu0 %v2846, 33
    %v3103 = vpop.permute.xlu0 %3102
    %3104 = vrot.lane.b32.xlu0 %v2980, 33
    %v3105 = vpop.permute.xlu0 %3104
    %3106 = vrot.lane.b32.xlu0 %v2927, 33
    %v3107 = vpop.permute.xlu0 %3106
    %3108 = vrot.lane.b32.xlu0 %v2849, 33
    %v3109 = vpop.permute.xlu0 %3108
    %3110 = vrot.lane.b32.xlu0 %v2981, 33
    %v3111 = vpop.permute.xlu0 %3110
    %3112 = vrot.lane.b32.xlu0 %v2929, 33
    %v3113 = vpop.permute.xlu0 %3112
    %3114 = vrot.lane.b32.xlu0 %v2852, 33
    %v3115 = vpop.permute.xlu0 %3114
    %3116 = vrot.lane.b32.xlu0 %v2982, 33
    %v3117 = vpop.permute.xlu0 %3116
    %3118 = vrot.lane.b32.xlu0 %v2931, 33
    %v3119 = vpop.permute.xlu0 %3118
    %3120 = vrot.lane.b32.xlu0 %v2855, 33
    %v3121 = vpop.permute.xlu0 %3120
    %3122 = vrot.lane.b32.xlu0 %v2983, 33
    %v3123 = vpop.permute.xlu0 %3122
    %3124 = vrot.lane.b32.xlu0 %v2933, 33
    %v3125 = vpop.permute.xlu0 %3124
    %3126 = vrot.lane.b32.xlu0 %v2858, 33
    %v3127 = vpop.permute.xlu0 %3126
    %3128 = vrot.lane.b32.xlu0 %v2984, 33
    %v3129 = vpop.permute.xlu0 %3128
    %3130 = vrot.lane.b32.xlu0 %v2935, 33
    %v3131 = vpop.permute.xlu0 %3130
    %3132 = vrot.lane.b32.xlu0 %v2861, 33
    %v3133 = vpop.permute.xlu0 %3132
    %3134 = vrot.lane.b32.xlu0 %v2985, 33
    %v3135 = vpop.permute.xlu0 %3134
    %3136 = vrot.lane.b32.xlu0 %v2937, 33
    %v3137 = vpop.permute.xlu0 %3136
    %3138 = vrot.lane.b32.xlu0 %v2864, 33
    %v3139 = vpop.permute.xlu0 %3138
    %3140 = vrot.lane.b32.xlu0 %v2986, 33
    %v3141 = vpop.permute.xlu0 %3140
    %3142 = vrot.lane.b32.xlu0 %v2939, 33
    %v3143 = vpop.permute.xlu0 %3142
    %3144 = vrot.lane.b32.xlu0 %v2867, 33
    %v3145 = vpop.permute.xlu0 %3144
    %3146 = vrot.lane.b32.xlu0 %v2987, 33
    %v3147 = vpop.permute.xlu0 %3146
    %3148 = vrot.lane.b32.xlu0 %v2941, 33
    %v3149 = vpop.permute.xlu0 %3148
    %3150 = vrot.lane.b32.xlu0 %v2870, 33
    %v3151 = vpop.permute.xlu0 %3150
    %3152 = vrot.lane.b32.xlu0 %v2988, 33
    %v3153 = vpop.permute.xlu0 %3152
    %3154 = vrot.lane.b32.xlu0 %v2943, 33
    %v3155 = vpop.permute.xlu0 %3154
    %3156 = vrot.lane.b32.xlu0 %v2873, 33
    %v3157 = vpop.permute.xlu0 %3156
    %3158 = vrot.lane.b32.xlu0 %v2989, 33
    %v3159 = vpop.permute.xlu0 %3158
    %3160 = vrot.lane.b32.xlu0 %v2945, 33
    %v3161 = vpop.permute.xlu0 %3160
    %3162 = vrot.lane.b32.xlu0 %v2876, 33
    %v3163 = vpop.permute.xlu0 %3162
    %3164 = vrot.lane.b32.xlu0 %v2990, 33
    %v3165 = vpop.permute.xlu0 %3164
    %3166 = vrot.lane.b32.xlu0 %v2947, 33
    %v3167 = vpop.permute.xlu0 %3166
    %3168 = vrot.lane.b32.xlu0 %v2879, 33
    %v3169 = vpop.permute.xlu0 %3168
    %3170 = vrot.lane.b32.xlu0 %v2991, 33
    %v3171 = vpop.permute.xlu0 %3170
    %3172 = vrot.lane.b32.xlu0 %v2949, 33
    %v3173 = vpop.permute.xlu0 %3172
    %3174 = vrot.lane.b32.xlu0 %v2882, 33
    %v3175 = vpop.permute.xlu0 %3174
    %3176 = vrot.lane.b32.xlu0 %v2992, 33
    %v3177 = vpop.permute.xlu0 %3176
    %3178 = vrot.lane.b32.xlu0 %v2951, 33
    %v3179 = vpop.permute.xlu0 %3178
    %3180 = vrot.lane.b32.xlu0 %v2885, 33
    %v3181 = vpop.permute.xlu0 %3180
    %3182 = vrot.lane.b32.xlu0 %v2993, 33
    %v3183 = vpop.permute.xlu0 %3182
    %3184 = vrot.lane.b32.xlu0 %v2953, 33
    %v3185 = vpop.permute.xlu0 %3184
    %3186 = vrot.lane.b32.xlu0 %v2888, 33
    %v3187 = vpop.permute.xlu0 %3186
    %3188 = vrot.lane.b32.xlu0 %v2994, 33
    %v3189 = vpop.permute.xlu0 %3188
    %3190 = vrot.lane.b32.xlu0 %v2955, 33
    %v3191 = vpop.permute.xlu0 %3190
    %3192 = vrot.lane.b32.xlu0 %v2891, 33
    %v3193 = vpop.permute.xlu0 %3192
    %3194 = vrot.lane.b32.xlu0 %v2995, 33
    %v3195 = vpop.permute.xlu0 %3194
    %3196 = vrot.lane.b32.xlu0 %v2957, 33
    %v3197 = vpop.permute.xlu0 %3196
    %3198 = vrot.lane.b32.xlu0 %v2894, 33
    %v3199 = vpop.permute.xlu0 %3198
    %3200 = vrot.lane.b32.xlu0 %v2996, 33
    %v3201 = vpop.permute.xlu0 %3200
    %3202 = vrot.lane.b32.xlu0 %v2959, 33
    %v3203 = vpop.permute.xlu0 %3202
    %3204 = vrot.lane.b32.xlu0 %v2897, 33
    %v3205 = vpop.permute.xlu0 %3204
    %3206 = vrot.lane.b32.xlu0 %v2997, 33
    %v3207 = vpop.permute.xlu0 %3206
    %3208 = vrot.lane.b32.xlu0 %v2961, 33
    %v3209 = vpop.permute.xlu0 %3208
    %3210 = vrot.lane.b32.xlu0 %v2900, 33
    %v3211 = vpop.permute.xlu0 %3210
    %3212 = vrot.lane.b32.xlu0 %v2998, 33
    %v3213 = vpop.permute.xlu0 %3212
    %3214 = vrot.lane.b32.xlu0 %v2963, 33
    %v3215 = vpop.permute.xlu0 %3214
    %3216 = vrot.lane.b32.xlu0 %v2903, 33
    %v3217 = vpop.permute.xlu0 %3216
    %3218 = vrot.lane.b32.xlu0 %v2999, 33
    %v3219 = vpop.permute.xlu0 %3218
    %3220 = vrot.lane.b32.xlu0 %v2965, 33
    %v3221 = vpop.permute.xlu0 %3220
    %3222 = vrot.lane.b32.xlu0 %v2906, 33
    %v3223 = vpop.permute.xlu0 %3222
    %3224 = vrot.lane.b32.xlu0 %v3000, 33
    %v3225 = vpop.permute.xlu0 %3224
    %3226 = vrot.lane.b32.xlu0 %v2967, 33
    %v3227 = vpop.permute.xlu0 %3226
    %3228 = vrot.lane.b32.xlu0 %v2909, 33
    %v3229 = vpop.permute.xlu0 %3228
    %3230 = vrot.lane.b32.xlu0 %v3001, 33
    %v3231 = vpop.permute.xlu0 %3230
    %3232 = vrot.lane.b32.xlu0 %v2969, 33
    %v3233 = vpop.permute.xlu0 %3232
    %3234 = vrot.lane.b32.xlu0 %v2912, 33
    %v3235 = vpop.permute.xlu0 %3234
    %3236 = vrot.lane.b32.xlu0 %v3002, 33
    %v3237 = vpop.permute.xlu0 %3236
    %3238 = vrot.lane.b32.xlu0 %v2971, 33
    %v3239 = vpop.permute.xlu0 %3238
    %3240 = vrot.lane.b32.xlu0 %v2915, 33
    %v3241 = vpop.permute.xlu0 %3240
    %3242 = vrot.lane.b32.xlu0 %v3003, 33
    %v3243 = vpop.permute.xlu0 %3242
    %3244 = vrot.lane.b32.xlu0 %v2973, 33
    %v3245 = vpop.permute.xlu0 %3244
    %3246 = vrot.lane.b32.xlu0 %v2918, 33
    %v3247 = vpop.permute.xlu0 %3246
    %3248 = vrot.lane.b32.xlu0 %v3004, 33
    %v3249 = vpop.permute.xlu0 %3248
    %3250 = vrot.lane.b32.xlu0 %v2975, 33
    %v3251 = vpop.permute.xlu0 %3250
    %3252 = vrot.lane.b32.xlu0 %v2921, 33
    %v3253 = vpop.permute.xlu0 %3252
    %3254 = vrot.lane.b32.xlu0 %v3005, 33
    %v3255 = vpop.permute.xlu0 %3254
    %3256 = vrot.lane.b32.xlu0 %v2977, 33
    %v3257 = vpop.permute.xlu0 %3256
    %v3258 = vsel %vm592, %v3091, %v3093
    %v3259 = vsel %vm592, %v3093, %v3095
    %v3260 = vsel %vm592, %v3097, %v3099
    %v3261 = vsel %vm592, %v3099, %v3101
    %v3262 = vsel %vm592, %v3103, %v3105
    %v3263 = vsel %vm592, %v3105, %v3107
    %v3264 = vsel %vm592, %v3109, %v3111
    %v3265 = vsel %vm592, %v3111, %v3113
    %v3266 = vsel %vm592, %v3115, %v3117
    %v3267 = vsel %vm592, %v3117, %v3119
    %v3268 = vsel %vm592, %v3121, %v3123
    %v3269 = vsel %vm592, %v3123, %v3125
    %v3270 = vsel %vm592, %v3127, %v3129
    %v3271 = vsel %vm592, %v3129, %v3131
    %v3272 = vsel %vm592, %v3133, %v3135
    %v3273 = vsel %vm592, %v3135, %v3137
    %v3274 = vsel %vm592, %v3139, %v3141
    %v3275 = vsel %vm592, %v3141, %v3143
    %v3276 = vsel %vm592, %v3145, %v3147
    %v3277 = vsel %vm592, %v3147, %v3149
    %v3278 = vsel %vm592, %v3151, %v3153
    %v3279 = vsel %vm592, %v3153, %v3155
    %v3280 = vsel %vm592, %v3157, %v3159
    %v3281 = vsel %vm592, %v3159, %v3161
    %v3282 = vsel %vm592, %v3163, %v3165
    %v3283 = vsel %vm592, %v3165, %v3167
    %v3284 = vsel %vm592, %v3169, %v3171
    %v3285 = vsel %vm592, %v3171, %v3173
    %v3286 = vsel %vm592, %v3175, %v3177
    %v3287 = vsel %vm592, %v3177, %v3179
    %v3288 = vsel %vm592, %v3181, %v3183
    %v3289 = vsel %vm592, %v3183, %v3185
    %v3290 = vsel %vm592, %v3187, %v3189
    %v3291 = vsel %vm592, %v3189, %v3191
    %v3292 = vsel %vm592, %v3193, %v3195
    %v3293 = vsel %vm592, %v3195, %v3197
    %v3294 = vsel %vm592, %v3199, %v3201
    %v3295 = vsel %vm592, %v3201, %v3203
    %v3296 = vsel %vm592, %v3205, %v3207
    %v3297 = vsel %vm592, %v3207, %v3209
    %v3298 = vsel %vm592, %v3211, %v3213
    %v3299 = vsel %vm592, %v3213, %v3215
    %v3300 = vsel %vm592, %v3217, %v3219
    %v3301 = vsel %vm592, %v3219, %v3221
    %v3302 = vsel %vm592, %v3223, %v3225
    %v3303 = vsel %vm592, %v3225, %v3227
    %v3304 = vsel %vm592, %v3229, %v3231
    %v3305 = vsel %vm592, %v3231, %v3233
    %v3306 = vsel %vm592, %v3235, %v3237
    %v3307 = vsel %vm592, %v3237, %v3239
    %v3308 = vsel %vm592, %v3241, %v3243
    %v3309 = vsel %vm592, %v3243, %v3245
    %v3310 = vsel %vm592, %v3247, %v3249
    %v3311 = vsel %vm592, %v3249, %v3251
    %v3312 = vsel %vm592, %v3253, %v3255
    %v3313 = vsel %vm592, %v3255, %v3257
    %v3370 = vsel %vm55, %v3258, 0.0
    %v3371 = vsel %vm56, %v3259, 0.0
    %v3372 = vsel %vm55, %v3260, 0.0
    %v3373 = vsel %vm56, %v3261, 0.0
    %v3374 = vsel %vm55, %v3262, 0.0
    %v3375 = vsel %vm56, %v3263, 0.0
    %v3376 = vsel %vm55, %v3264, 0.0
    %v3377 = vsel %vm56, %v3265, 0.0
    %v3378 = vsel %vm55, %v3266, 0.0
    %v3379 = vsel %vm56, %v3267, 0.0
    %v3380 = vsel %vm55, %v3268, 0.0
    %v3381 = vsel %vm56, %v3269, 0.0
    %v3382 = vsel %vm55, %v3270, 0.0
    %v3383 = vsel %vm56, %v3271, 0.0
    %v3384 = vsel %vm55, %v3272, 0.0
    %v3385 = vsel %vm56, %v3273, 0.0
    %v3386 = vsel %vm55, %v3274, 0.0
    %v3387 = vsel %vm56, %v3275, 0.0
    %v3388 = vsel %vm55, %v3276, 0.0
    %v3389 = vsel %vm56, %v3277, 0.0
    %v3390 = vsel %vm55, %v3278, 0.0
    %v3391 = vsel %vm56, %v3279, 0.0
    %v3392 = vsel %vm55, %v3280, 0.0
    %v3393 = vsel %vm56, %v3281, 0.0
    %v3394 = vsel %vm55, %v3282, 0.0
    %v3395 = vsel %vm56, %v3283, 0.0
    %v3396 = vsel %vm55, %v3284, 0.0
    %v3397 = vsel %vm56, %v3285, 0.0
    %v3398 = vsel %vm55, %v3286, 0.0
    %v3399 = vsel %vm56, %v3287, 0.0
    %v3400 = vsel %vm55, %v3288, 0.0
    %v3401 = vsel %vm56, %v3289, 0.0
    %v3402 = vsel %vm55, %v3290, 0.0
    %v3403 = vsel %vm56, %v3291, 0.0
    %v3404 = vsel %vm55, %v3292, 0.0
    %v3405 = vsel %vm56, %v3293, 0.0
    %v3406 = vsel %vm55, %v3294, 0.0
    %v3407 = vsel %vm56, %v3295, 0.0
    %v3408 = vsel %vm55, %v3296, 0.0
    %v3409 = vsel %vm56, %v3297, 0.0
    %v3410 = vsel %vm55, %v3298, 0.0
    %v3411 = vsel %vm56, %v3299, 0.0
    %v3412 = vsel %vm55, %v3300, 0.0
    %v3413 = vsel %vm56, %v3301, 0.0
    %v3414 = vsel %vm55, %v3302, 0.0
    %v3415 = vsel %vm56, %v3303, 0.0
    %v3416 = vsel %vm55, %v3304, 0.0
    %v3417 = vsel %vm56, %v3305, 0.0
    %v3418 = vsel %vm55, %v3306, 0.0
    %v3419 = vsel %vm56, %v3307, 0.0
    %v3420 = vsel %vm55, %v3308, 0.0
    %v3421 = vsel %vm56, %v3309, 0.0
    %v3422 = vsel %vm55, %v3310, 0.0
    %v3423 = vsel %vm56, %v3311, 0.0
    %v3424 = vsel %vm55, %v3312, 0.0
    %v3425 = vsel %vm56, %v3313, 0.0
    %3454 = vrot.lane.b32.xlu0 %v2782, 127
    %v3455 = vpop.permute.xlu0 %3454
    %3456 = vrot.lane.b32.xlu0 %v2840, 127
    %v3457 = vpop.permute.xlu0 %3456
    %3458 = vrot.lane.b32.xlu0 %v2784, 127
    %v3459 = vpop.permute.xlu0 %3458
    %3460 = vrot.lane.b32.xlu0 %v2843, 127
    %v3461 = vpop.permute.xlu0 %3460
    %3462 = vrot.lane.b32.xlu0 %v2786, 127
    %v3463 = vpop.permute.xlu0 %3462
    %3464 = vrot.lane.b32.xlu0 %v2846, 127
    %v3465 = vpop.permute.xlu0 %3464
    %3466 = vrot.lane.b32.xlu0 %v2788, 127
    %v3467 = vpop.permute.xlu0 %3466
    %3468 = vrot.lane.b32.xlu0 %v2849, 127
    %v3469 = vpop.permute.xlu0 %3468
    %3470 = vrot.lane.b32.xlu0 %v2790, 127
    %v3471 = vpop.permute.xlu0 %3470
    %3472 = vrot.lane.b32.xlu0 %v2852, 127
    %v3473 = vpop.permute.xlu0 %3472
    %3474 = vrot.lane.b32.xlu0 %v2792, 127
    %v3475 = vpop.permute.xlu0 %3474
    %3476 = vrot.lane.b32.xlu0 %v2855, 127
    %v3477 = vpop.permute.xlu0 %3476
    %3478 = vrot.lane.b32.xlu0 %v2794, 127
    %v3479 = vpop.permute.xlu0 %3478
    %3480 = vrot.lane.b32.xlu0 %v2858, 127
    %v3481 = vpop.permute.xlu0 %3480
    %3482 = vrot.lane.b32.xlu0 %v2796, 127
    %v3483 = vpop.permute.xlu0 %3482
    %3484 = vrot.lane.b32.xlu0 %v2861, 127
    %v3485 = vpop.permute.xlu0 %3484
    %3486 = vrot.lane.b32.xlu0 %v2798, 127
    %v3487 = vpop.permute.xlu0 %3486
    %3488 = vrot.lane.b32.xlu0 %v2864, 127
    %v3489 = vpop.permute.xlu0 %3488
    %3490 = vrot.lane.b32.xlu0 %v2800, 127
    %v3491 = vpop.permute.xlu0 %3490
    %3492 = vrot.lane.b32.xlu0 %v2867, 127
    %v3493 = vpop.permute.xlu0 %3492
    %3494 = vrot.lane.b32.xlu0 %v2802, 127
    %v3495 = vpop.permute.xlu0 %3494
    %3496 = vrot.lane.b32.xlu0 %v2870, 127
    %v3497 = vpop.permute.xlu0 %3496
    %3498 = vrot.lane.b32.xlu0 %v2804, 127
    %v3499 = vpop.permute.xlu0 %3498
    %3500 = vrot.lane.b32.xlu0 %v2873, 127
    %v3501 = vpop.permute.xlu0 %3500
    %3502 = vrot.lane.b32.xlu0 %v2806, 127
    %v3503 = vpop.permute.xlu0 %3502
    %3504 = vrot.lane.b32.xlu0 %v2876, 127
    %v3505 = vpop.permute.xlu0 %3504
    %3506 = vrot.lane.b32.xlu0 %v2808, 127
    %v3507 = vpop.permute.xlu0 %3506
    %3508 = vrot.lane.b32.xlu0 %v2879, 127
    %v3509 = vpop.permute.xlu0 %3508
    %3510 = vrot.lane.b32.xlu0 %v2810, 127
    %v3511 = vpop.permute.xlu0 %3510
    %3512 = vrot.lane.b32.xlu0 %v2882, 127
    %v3513 = vpop.permute.xlu0 %3512
    %3514 = vrot.lane.b32.xlu0 %v2812, 127
    %v3515 = vpop.permute.xlu0 %3514
    %3516 = vrot.lane.b32.xlu0 %v2885, 127
    %v3517 = vpop.permute.xlu0 %3516
    %3518 = vrot.lane.b32.xlu0 %v2814, 127
    %v3519 = vpop.permute.xlu0 %3518
    %3520 = vrot.lane.b32.xlu0 %v2888, 127
    %v3521 = vpop.permute.xlu0 %3520
    %3522 = vrot.lane.b32.xlu0 %v2816, 127
    %v3523 = vpop.permute.xlu0 %3522
    %3524 = vrot.lane.b32.xlu0 %v2891, 127
    %v3525 = vpop.permute.xlu0 %3524
    %3526 = vrot.lane.b32.xlu0 %v2818, 127
    %v3527 = vpop.permute.xlu0 %3526
    %3528 = vrot.lane.b32.xlu0 %v2894, 127
    %v3529 = vpop.permute.xlu0 %3528
    %3530 = vrot.lane.b32.xlu0 %v2820, 127
    %v3531 = vpop.permute.xlu0 %3530
    %3532 = vrot.lane.b32.xlu0 %v2897, 127
    %v3533 = vpop.permute.xlu0 %3532
    %3534 = vrot.lane.b32.xlu0 %v2822, 127
    %v3535 = vpop.permute.xlu0 %3534
    %3536 = vrot.lane.b32.xlu0 %v2900, 127
    %v3537 = vpop.permute.xlu0 %3536
    %3538 = vrot.lane.b32.xlu0 %v2824, 127
    %v3539 = vpop.permute.xlu0 %3538
    %3540 = vrot.lane.b32.xlu0 %v2903, 127
    %v3541 = vpop.permute.xlu0 %3540
    %3542 = vrot.lane.b32.xlu0 %v2826, 127
    %v3543 = vpop.permute.xlu0 %3542
    %3544 = vrot.lane.b32.xlu0 %v2906, 127
    %v3545 = vpop.permute.xlu0 %3544
    %3546 = vrot.lane.b32.xlu0 %v2828, 127
    %v3547 = vpop.permute.xlu0 %3546
    %3548 = vrot.lane.b32.xlu0 %v2909, 127
    %v3549 = vpop.permute.xlu0 %3548
    %3550 = vrot.lane.b32.xlu0 %v2830, 127
    %v3551 = vpop.permute.xlu0 %3550
    %3552 = vrot.lane.b32.xlu0 %v2912, 127
    %v3553 = vpop.permute.xlu0 %3552
    %3554 = vrot.lane.b32.xlu0 %v2832, 127
    %v3555 = vpop.permute.xlu0 %3554
    %3556 = vrot.lane.b32.xlu0 %v2915, 127
    %v3557 = vpop.permute.xlu0 %3556
    %3558 = vrot.lane.b32.xlu0 %v2834, 127
    %v3559 = vpop.permute.xlu0 %3558
    %3560 = vrot.lane.b32.xlu0 %v2918, 127
    %v3561 = vpop.permute.xlu0 %3560
    %3562 = vrot.lane.b32.xlu0 %v2836, 127
    %v3563 = vpop.permute.xlu0 %3562
    %3564 = vrot.lane.b32.xlu0 %v2921, 127
    %v3565 = vpop.permute.xlu0 %3564
    %v3566 = vsel %vm901, %v3455, %v3457
    %v3567 = vsel %vm901, %v3459, %v3461
    %v3568 = vsel %vm901, %v3463, %v3465
    %v3569 = vsel %vm901, %v3467, %v3469
    %v3570 = vsel %vm901, %v3471, %v3473
    %v3571 = vsel %vm901, %v3475, %v3477
    %v3572 = vsel %vm901, %v3479, %v3481
    %v3573 = vsel %vm901, %v3483, %v3485
    %v3574 = vsel %vm901, %v3487, %v3489
    %v3575 = vsel %vm901, %v3491, %v3493
    %v3576 = vsel %vm901, %v3495, %v3497
    %v3577 = vsel %vm901, %v3499, %v3501
    %v3578 = vsel %vm901, %v3503, %v3505
    %v3579 = vsel %vm901, %v3507, %v3509
    %v3580 = vsel %vm901, %v3511, %v3513
    %v3581 = vsel %vm901, %v3515, %v3517
    %v3582 = vsel %vm901, %v3519, %v3521
    %v3583 = vsel %vm901, %v3523, %v3525
    %v3584 = vsel %vm901, %v3527, %v3529
    %v3585 = vsel %vm901, %v3531, %v3533
    %v3586 = vsel %vm901, %v3535, %v3537
    %v3587 = vsel %vm901, %v3539, %v3541
    %v3588 = vsel %vm901, %v3543, %v3545
    %v3589 = vsel %vm901, %v3547, %v3549
    %v3590 = vsel %vm901, %v3551, %v3553
    %v3591 = vsel %vm901, %v3555, %v3557
    %v3592 = vsel %vm901, %v3559, %v3561
    %v3593 = vsel %vm901, %v3563, %v3565
    %v3650 = vsel %vm57, %v3566, 0.0
    %v3651 = vsel %vm58, %v3457, 0.0
    %v3652 = vsel %vm57, %v3567, 0.0
    %v3653 = vsel %vm58, %v3461, 0.0
    %v3654 = vsel %vm57, %v3568, 0.0
    %v3655 = vsel %vm58, %v3465, 0.0
    %v3656 = vsel %vm57, %v3569, 0.0
    %v3657 = vsel %vm58, %v3469, 0.0
    %v3658 = vsel %vm57, %v3570, 0.0
    %v3659 = vsel %vm58, %v3473, 0.0
    %v3660 = vsel %vm57, %v3571, 0.0
    %v3661 = vsel %vm58, %v3477, 0.0
    %v3662 = vsel %vm57, %v3572, 0.0
    %v3663 = vsel %vm58, %v3481, 0.0
    %v3664 = vsel %vm57, %v3573, 0.0
    %v3665 = vsel %vm58, %v3485, 0.0
    %v3666 = vsel %vm57, %v3574, 0.0
    %v3667 = vsel %vm58, %v3489, 0.0
    %v3668 = vsel %vm57, %v3575, 0.0
    %v3669 = vsel %vm58, %v3493, 0.0
    %v3670 = vsel %vm57, %v3576, 0.0
    %v3671 = vsel %vm58, %v3497, 0.0
    %v3672 = vsel %vm57, %v3577, 0.0
    %v3673 = vsel %vm58, %v3501, 0.0
    %v3674 = vsel %vm57, %v3578, 0.0
    %v3675 = vsel %vm58, %v3505, 0.0
    %v3676 = vsel %vm57, %v3579, 0.0
    %v3677 = vsel %vm58, %v3509, 0.0
    %v3678 = vsel %vm57, %v3580, 0.0
    %v3679 = vsel %vm58, %v3513, 0.0
    %v3680 = vsel %vm57, %v3581, 0.0
    %v3681 = vsel %vm58, %v3517, 0.0
    %v3682 = vsel %vm57, %v3582, 0.0
    %v3683 = vsel %vm58, %v3521, 0.0
    %v3684 = vsel %vm57, %v3583, 0.0
    %v3685 = vsel %vm58, %v3525, 0.0
    %v3686 = vsel %vm57, %v3584, 0.0
    %v3687 = vsel %vm58, %v3529, 0.0
    %v3688 = vsel %vm57, %v3585, 0.0
    %v3689 = vsel %vm58, %v3533, 0.0
    %v3690 = vsel %vm57, %v3586, 0.0
    %v3691 = vsel %vm58, %v3537, 0.0
    %v3692 = vsel %vm57, %v3587, 0.0
    %v3693 = vsel %vm58, %v3541, 0.0
    %v3694 = vsel %vm57, %v3588, 0.0
    %v3695 = vsel %vm58, %v3545, 0.0
    %v3696 = vsel %vm57, %v3589, 0.0
    %v3697 = vsel %vm58, %v3549, 0.0
    %v3698 = vsel %vm57, %v3590, 0.0
    %v3699 = vsel %vm58, %v3553, 0.0
    %v3700 = vsel %vm57, %v3591, 0.0
    %v3701 = vsel %vm58, %v3557, 0.0
    %v3702 = vsel %vm57, %v3592, 0.0
    %v3703 = vsel %vm58, %v3561, 0.0
    %v3704 = vsel %vm57, %v3593, 0.0
    %v3705 = vsel %vm58, %v3565, 0.0
    %v3706 = vsub.f32 %v3370, %v3650
    %v3707 = vsub.f32 %v3371, %v3651
    %v3708 = vsub.f32 %v3372, %v3652
    %v3709 = vsub.f32 %v3373, %v3653
    %v3710 = vsub.f32 %v3374, %v3654
    %v3711 = vsub.f32 %v3375, %v3655
    %v3712 = vsub.f32 %v3376, %v3656
    %v3713 = vsub.f32 %v3377, %v3657
    %v3714 = vsub.f32 %v3378, %v3658
    %v3715 = vsub.f32 %v3379, %v3659
    %v3716 = vsub.f32 %v3380, %v3660
    %v3717 = vsub.f32 %v3381, %v3661
    %v3718 = vsub.f32 %v3382, %v3662
    %v3719 = vsub.f32 %v3383, %v3663
    %v3720 = vsub.f32 %v3384, %v3664
    %v3721 = vsub.f32 %v3385, %v3665
    %v3722 = vsub.f32 %v3386, %v3666
    %v3723 = vsub.f32 %v3387, %v3667
    %v3724 = vsub.f32 %v3388, %v3668
    %v3725 = vsub.f32 %v3389, %v3669
    %v3726 = vsub.f32 %v3390, %v3670
    %v3727 = vsub.f32 %v3391, %v3671
    %v3728 = vsub.f32 %v3392, %v3672
    %v3729 = vsub.f32 %v3393, %v3673
    %v3730 = vsub.f32 %v3394, %v3674
    %v3731 = vsub.f32 %v3395, %v3675
    %v3732 = vsub.f32 %v3396, %v3676
    %v3733 = vsub.f32 %v3397, %v3677
    %v3734 = vsub.f32 %v3398, %v3678
    %v3735 = vsub.f32 %v3399, %v3679
    %v3736 = vsub.f32 %v3400, %v3680
    %v3737 = vsub.f32 %v3401, %v3681
    %v3738 = vsub.f32 %v3402, %v3682
    %v3739 = vsub.f32 %v3403, %v3683
    %v3740 = vsub.f32 %v3404, %v3684
    %v3741 = vsub.f32 %v3405, %v3685
    %v3742 = vsub.f32 %v3406, %v3686
    %v3743 = vsub.f32 %v3407, %v3687
    %v3744 = vsub.f32 %v3408, %v3688
    %v3745 = vsub.f32 %v3409, %v3689
    %v3746 = vsub.f32 %v3410, %v3690
    %v3747 = vsub.f32 %v3411, %v3691
    %v3748 = vsub.f32 %v3412, %v3692
    %v3749 = vsub.f32 %v3413, %v3693
    %v3750 = vsub.f32 %v3414, %v3694
    %v3751 = vsub.f32 %v3415, %v3695
    %v3752 = vsub.f32 %v3416, %v3696
    %v3753 = vsub.f32 %v3417, %v3697
    %v3754 = vsub.f32 %v3418, %v3698
    %v3755 = vsub.f32 %v3419, %v3699
    %v3756 = vsub.f32 %v3420, %v3700
    %v3757 = vsub.f32 %v3421, %v3701
    %v3758 = vsub.f32 %v3422, %v3702
    %v3759 = vsub.f32 %v3423, %v3703
    %v3760 = vsub.f32 %v3424, %v3704
    %v3761 = vsub.f32 %v3425, %v3705
    %v3762 = vadd.f32 %v3370, %v3650
    %v3763 = vadd.f32 %v3371, %v3651
    %v3764 = vadd.f32 %v3372, %v3652
    %v3765 = vadd.f32 %v3373, %v3653
    %v3766 = vadd.f32 %v3374, %v3654
    %v3767 = vadd.f32 %v3375, %v3655
    %v3768 = vadd.f32 %v3376, %v3656
    %v3769 = vadd.f32 %v3377, %v3657
    %v3770 = vadd.f32 %v3378, %v3658
    %v3771 = vadd.f32 %v3379, %v3659
    %v3772 = vadd.f32 %v3380, %v3660
    %v3773 = vadd.f32 %v3381, %v3661
    %v3774 = vadd.f32 %v3382, %v3662
    %v3775 = vadd.f32 %v3383, %v3663
    %v3776 = vadd.f32 %v3384, %v3664
    %v3777 = vadd.f32 %v3385, %v3665
    %v3778 = vadd.f32 %v3386, %v3666
    %v3779 = vadd.f32 %v3387, %v3667
    %v3780 = vadd.f32 %v3388, %v3668
    %v3781 = vadd.f32 %v3389, %v3669
    %v3782 = vadd.f32 %v3390, %v3670
    %v3783 = vadd.f32 %v3391, %v3671
    %v3784 = vadd.f32 %v3392, %v3672
    %v3785 = vadd.f32 %v3393, %v3673
    %v3786 = vadd.f32 %v3394, %v3674
    %v3787 = vadd.f32 %v3395, %v3675
    %v3788 = vadd.f32 %v3396, %v3676
    %v3789 = vadd.f32 %v3397, %v3677
    %v3790 = vadd.f32 %v3398, %v3678
    %v3791 = vadd.f32 %v3399, %v3679
    %v3792 = vadd.f32 %v3400, %v3680
    %v3793 = vadd.f32 %v3401, %v3681
    %v3794 = vadd.f32 %v3402, %v3682
    %v3795 = vadd.f32 %v3403, %v3683
    %v3796 = vadd.f32 %v3404, %v3684
    %v3797 = vadd.f32 %v3405, %v3685
    %v3798 = vadd.f32 %v3406, %v3686
    %v3799 = vadd.f32 %v3407, %v3687
    %v3800 = vadd.f32 %v3408, %v3688
    %v3801 = vadd.f32 %v3409, %v3689
    %v3802 = vadd.f32 %v3410, %v3690
    %v3803 = vadd.f32 %v3411, %v3691
    %v3804 = vadd.f32 %v3412, %v3692
    %v3805 = vadd.f32 %v3413, %v3693
    %v3806 = vadd.f32 %v3414, %v3694
    %v3807 = vadd.f32 %v3415, %v3695
    %v3808 = vadd.f32 %v3416, %v3696
    %v3809 = vadd.f32 %v3417, %v3697
    %v3810 = vadd.f32 %v3418, %v3698
    %v3811 = vadd.f32 %v3419, %v3699
    %v3812 = vadd.f32 %v3420, %v3700
    %v3813 = vadd.f32 %v3421, %v3701
    %v3814 = vadd.f32 %v3422, %v3702
    %v3815 = vadd.f32 %v3423, %v3703
    %v3816 = vadd.f32 %v3424, %v3704
    %v3817 = vadd.f32 %v3425, %v3705
    %v3818 = vmul.f32 %v2782, 2.0
    %v3819 = vmul.f32 %v2783, 2.0
    %v3820 = vmul.f32 %v2784, 2.0
    %v3821 = vmul.f32 %v2785, 2.0
    %v3822 = vmul.f32 %v2786, 2.0
    %v3823 = vmul.f32 %v2787, 2.0
    %v3824 = vmul.f32 %v2788, 2.0
    %v3825 = vmul.f32 %v2789, 2.0
    %v3826 = vmul.f32 %v2790, 2.0
    %v3827 = vmul.f32 %v2791, 2.0
    %v3828 = vmul.f32 %v2792, 2.0
    %v3829 = vmul.f32 %v2793, 2.0
    %v3830 = vmul.f32 %v2794, 2.0
    %v3831 = vmul.f32 %v2795, 2.0
    %v3832 = vmul.f32 %v2796, 2.0
    %v3833 = vmul.f32 %v2797, 2.0
    %v3834 = vmul.f32 %v2798, 2.0
    %v3835 = vmul.f32 %v2799, 2.0
    %v3836 = vmul.f32 %v2800, 2.0
    %v3837 = vmul.f32 %v2801, 2.0
    %v3838 = vmul.f32 %v2802, 2.0
    %v3839 = vmul.f32 %v2803, 2.0
    %v3840 = vmul.f32 %v2804, 2.0
    %v3841 = vmul.f32 %v2805, 2.0
    %v3842 = vmul.f32 %v2806, 2.0
    %v3843 = vmul.f32 %v2807, 2.0
    %v3844 = vmul.f32 %v2808, 2.0
    %v3845 = vmul.f32 %v2809, 2.0
    %v3846 = vmul.f32 %v2810, 2.0
    %v3847 = vmul.f32 %v2811, 2.0
    %v3848 = vmul.f32 %v2812, 2.0
    %v3849 = vmul.f32 %v2813, 2.0
    %v3850 = vmul.f32 %v2814, 2.0
    %v3851 = vmul.f32 %v2815, 2.0
    %v3852 = vmul.f32 %v2816, 2.0
    %v3853 = vmul.f32 %v2817, 2.0
    %v3854 = vmul.f32 %v2818, 2.0
    %v3855 = vmul.f32 %v2819, 2.0
    %v3856 = vmul.f32 %v2820, 2.0
    %v3857 = vmul.f32 %v2821, 2.0
    %v3858 = vmul.f32 %v2822, 2.0
    %v3859 = vmul.f32 %v2823, 2.0
    %v3860 = vmul.f32 %v2824, 2.0
    %v3861 = vmul.f32 %v2825, 2.0
    %v3862 = vmul.f32 %v2826, 2.0
    %v3863 = vmul.f32 %v2827, 2.0
    %v3864 = vmul.f32 %v2828, 2.0
    %v3865 = vmul.f32 %v2829, 2.0
    %v3866 = vmul.f32 %v2830, 2.0
    %v3867 = vmul.f32 %v2831, 2.0
    %v3868 = vmul.f32 %v2832, 2.0
    %v3869 = vmul.f32 %v2833, 2.0
    %v3870 = vmul.f32 %v2834, 2.0
    %v3871 = vmul.f32 %v2835, 2.0
    %v3872 = vmul.f32 %v2836, 2.0
    %v3873 = vmul.f32 %v2837, 2.0
    %v3874 = vadd.f32 %v3762, %v3818
    %v3875 = vadd.f32 %v3763, %v3819
    %v3876 = vadd.f32 %v3764, %v3820
    %v3877 = vadd.f32 %v3765, %v3821
    %v3878 = vadd.f32 %v3766, %v3822
    %v3879 = vadd.f32 %v3767, %v3823
    %v3880 = vadd.f32 %v3768, %v3824
    %v3881 = vadd.f32 %v3769, %v3825
    %v3882 = vadd.f32 %v3770, %v3826
    %v3883 = vadd.f32 %v3771, %v3827
    %v3884 = vadd.f32 %v3772, %v3828
    %v3885 = vadd.f32 %v3773, %v3829
    %v3886 = vadd.f32 %v3774, %v3830
    %v3887 = vadd.f32 %v3775, %v3831
    %v3888 = vadd.f32 %v3776, %v3832
    %v3889 = vadd.f32 %v3777, %v3833
    %v3890 = vadd.f32 %v3778, %v3834
    %v3891 = vadd.f32 %v3779, %v3835
    %v3892 = vadd.f32 %v3780, %v3836
    %v3893 = vadd.f32 %v3781, %v3837
    %v3894 = vadd.f32 %v3782, %v3838
    %v3895 = vadd.f32 %v3783, %v3839
    %v3896 = vadd.f32 %v3784, %v3840
    %v3897 = vadd.f32 %v3785, %v3841
    %v3898 = vadd.f32 %v3786, %v3842
    %v3899 = vadd.f32 %v3787, %v3843
    %v3900 = vadd.f32 %v3788, %v3844
    %v3901 = vadd.f32 %v3789, %v3845
    %v3902 = vadd.f32 %v3790, %v3846
    %v3903 = vadd.f32 %v3791, %v3847
    %v3904 = vadd.f32 %v3792, %v3848
    %v3905 = vadd.f32 %v3793, %v3849
    %v3906 = vadd.f32 %v3794, %v3850
    %v3907 = vadd.f32 %v3795, %v3851
    %v3908 = vadd.f32 %v3796, %v3852
    %v3909 = vadd.f32 %v3797, %v3853
    %v3910 = vadd.f32 %v3798, %v3854
    %v3911 = vadd.f32 %v3799, %v3855
    %v3912 = vadd.f32 %v3800, %v3856
    %v3913 = vadd.f32 %v3801, %v3857
    %v3914 = vadd.f32 %v3802, %v3858
    %v3915 = vadd.f32 %v3803, %v3859
    %v3916 = vadd.f32 %v3804, %v3860
    %v3917 = vadd.f32 %v3805, %v3861
    %v3918 = vadd.f32 %v3806, %v3862
    %v3919 = vadd.f32 %v3807, %v3863
    %v3920 = vadd.f32 %v3808, %v3864
    %v3921 = vadd.f32 %v3809, %v3865
    %v3922 = vadd.f32 %v3810, %v3866
    %v3923 = vadd.f32 %v3811, %v3867
    %v3924 = vadd.f32 %v3812, %v3868
    %v3925 = vadd.f32 %v3813, %v3869
    %v3926 = vadd.f32 %v3814, %v3870
    %v3927 = vadd.f32 %v3815, %v3871
    %v3928 = vadd.f32 %v3816, %v3872
    %v3929 = vadd.f32 %v3817, %v3873
    %v3930 = vrot.slane %v3706, 7
    %v3931 = vrot.slane %v3707, 7
    %v3932 = vrot.slane %v3708, 7
    %v3933 = vrot.slane %v3709, 7
    %v3934 = vrot.slane %v3710, 7
    %v3935 = vrot.slane %v3711, 7
    %v3936 = vrot.slane %v3712, 7
    %v3937 = vrot.slane %v3713, 7
    %v3938 = vrot.slane %v3714, 7
    %v3939 = vrot.slane %v3715, 7
    %v3940 = vrot.slane %v3716, 7
    %v3941 = vrot.slane %v3717, 7
    %v3942 = vrot.slane %v3718, 7
    %v3943 = vrot.slane %v3719, 7
    %v3944 = vrot.slane %v3720, 7
    %v3945 = vrot.slane %v3721, 7
    %v3946 = vrot.slane %v3722, 7
    %v3947 = vrot.slane %v3723, 7
    %v3948 = vrot.slane %v3724, 7
    %v3949 = vrot.slane %v3725, 7
    %v3950 = vrot.slane %v3726, 7
    %v3951 = vrot.slane %v3727, 7
    %v3952 = vrot.slane %v3728, 7
    %v3953 = vrot.slane %v3729, 7
    %v3954 = vrot.slane %v3730, 7
    %v3955 = vrot.slane %v3731, 7
    %v3956 = vrot.slane %v3732, 7
    %v3957 = vrot.slane %v3733, 7
    %v3958 = vrot.slane %v3734, 7
    %v3959 = vrot.slane %v3735, 7
    %v3960 = vrot.slane %v3736, 7
    %v3961 = vrot.slane %v3737, 7
    %v3962 = vrot.slane %v3738, 7
    %v3963 = vrot.slane %v3739, 7
    %v3964 = vrot.slane %v3740, 7
    %v3965 = vrot.slane %v3741, 7
    %v3966 = vrot.slane %v3742, 7
    %v3967 = vrot.slane %v3743, 7
    %v3968 = vrot.slane %v3744, 7
    %v3969 = vrot.slane %v3745, 7
    %v3970 = vrot.slane %v3746, 7
    %v3971 = vrot.slane %v3747, 7
    %v3972 = vrot.slane %v3748, 7
    %v3973 = vrot.slane %v3749, 7
    %v3974 = vrot.slane %v3750, 7
    %v3975 = vrot.slane %v3751, 7
    %v3976 = vrot.slane %v3752, 7
    %v3977 = vrot.slane %v3753, 7
    %v3978 = vrot.slane %v3754, 7
    %v3979 = vrot.slane %v3755, 7
    %v3980 = vrot.slane %v3756, 7
    %v3981 = vrot.slane %v3757, 7
    %v3982 = vrot.slane %v3758, 7
    %v3983 = vrot.slane %v3759, 7
    %v3984 = vrot.slane %v3760, 7
    %v3985 = vrot.slane %v3761, 7
    %v3986 = vsel %vm1322, %v3982, %v3984
    %v3987 = vsel %vm1322, %v3983, %v3985
    %v3988 = vsel %vm1322, %v3980, %v3982
    %v3989 = vsel %vm1322, %v3981, %v3983
    %v3990 = vsel %vm1322, %v3978, %v3980
    %v3991 = vsel %vm1322, %v3979, %v3981
    %v3992 = vsel %vm1322, %v3976, %v3978
    %v3993 = vsel %vm1322, %v3977, %v3979
    %v3994 = vsel %vm1322, %v3974, %v3976
    %v3995 = vsel %vm1322, %v3975, %v3977
    %v3996 = vsel %vm1322, %v3972, %v3974
    %v3997 = vsel %vm1322, %v3973, %v3975
    %v3998 = vsel %vm1322, %v3970, %v3972
    %v3999 = vsel %vm1322, %v3971, %v3973
    %v4000 = vsel %vm1322, %v3968, %v3970
    %v4001 = vsel %vm1322, %v3969, %v3971
    %v4002 = vsel %vm1322, %v3966, %v3968
    %v4003 = vsel %vm1322, %v3967, %v3969
    %v4004 = vsel %vm1322, %v3964, %v3966
    %v4005 = vsel %vm1322, %v3965, %v3967
    %v4006 = vsel %vm1322, %v3962, %v3964
    %v4007 = vsel %vm1322, %v3963, %v3965
    %v4008 = vsel %vm1322, %v3960, %v3962
    %v4009 = vsel %vm1322, %v3961, %v3963
    %v4010 = vsel %vm1322, %v3958, %v3960
    %v4011 = vsel %vm1322, %v3959, %v3961
    %v4012 = vsel %vm1322, %v3956, %v3958
    %v4013 = vsel %vm1322, %v3957, %v3959
    %v4014 = vsel %vm1322, %v3954, %v3956
    %v4015 = vsel %vm1322, %v3955, %v3957
    %v4016 = vsel %vm1322, %v3952, %v3954
    %v4017 = vsel %vm1322, %v3953, %v3955
    %v4018 = vsel %vm1322, %v3950, %v3952
    %v4019 = vsel %vm1322, %v3951, %v3953
    %v4020 = vsel %vm1322, %v3948, %v3950
    %v4021 = vsel %vm1322, %v3949, %v3951
    %v4022 = vsel %vm1322, %v3946, %v3948
    %v4023 = vsel %vm1322, %v3947, %v3949
    %v4024 = vsel %vm1322, %v3944, %v3946
    %v4025 = vsel %vm1322, %v3945, %v3947
    %v4026 = vsel %vm1322, %v3942, %v3944
    %v4027 = vsel %vm1322, %v3943, %v3945
    %v4028 = vsel %vm1322, %v3940, %v3942
    %v4029 = vsel %vm1322, %v3941, %v3943
    %v4030 = vsel %vm1322, %v3938, %v3940
    %v4031 = vsel %vm1322, %v3939, %v3941
    %v4032 = vsel %vm1322, %v3936, %v3938
    %v4033 = vsel %vm1322, %v3937, %v3939
    %v4034 = vsel %vm1322, %v3934, %v3936
    %v4035 = vsel %vm1322, %v3935, %v3937
    %v4036 = vsel %vm1322, %v3932, %v3934
    %v4037 = vsel %vm1322, %v3933, %v3935
    %v4038 = vsel %vm1322, %v3930, %v3932
    %v4039 = vsel %vm1322, %v3931, %v3933
    %v4040 = vsel %vm1322, %v3984, %v3930
    %v4041 = vsel %vm1322, %v3985, %v3931
    %v4042 = vsel %vm59, %v4040, 0.0
    %v4043 = vsel %vm59, %v4041, 0.0
    %v4044 = vsel %vm60, %v4038, 0.0
    %v4045 = vsel %vm60, %v4039, 0.0
    %v4046 = vsel %vm61, %v4036, 0.0
    %v4047 = vsel %vm61, %v4037, 0.0
    %v4048 = vsel %vm62, %v4034, 0.0
    %v4049 = vsel %vm62, %v4035, 0.0
    %v4050 = vsel %vm63, %v4032, 0.0
    %v4051 = vsel %vm63, %v4033, 0.0
    %v4052 = vsel %vm64, %v4030, 0.0
    %v4053 = vsel %vm64, %v4031, 0.0
    %v4054 = vsel %vm65, %v4028, 0.0
    %v4055 = vsel %vm65, %v4029, 0.0
    %v4056 = vsel %vm66, %v4026, 0.0
    %v4057 = vsel %vm66, %v4027, 0.0
    %v4058 = vsel %vm67, %v4024, 0.0
    %v4059 = vsel %vm67, %v4025, 0.0
    %v4060 = vsel %vm68, %v4022, 0.0
    %v4061 = vsel %vm68, %v4023, 0.0
    %v4062 = vsel %vm69, %v4020, 0.0
    %v4063 = vsel %vm69, %v4021, 0.0
    %v4064 = vsel %vm70, %v4018, 0.0
    %v4065 = vsel %vm70, %v4019, 0.0
    %v4066 = vsel %vm71, %v4016, 0.0
    %v4067 = vsel %vm71, %v4017, 0.0
    %v4068 = vsel %vm72, %v4014, 0.0
    %v4069 = vsel %vm72, %v4015, 0.0
    %v4070 = vsel %vm73, %v4012, 0.0
    %v4071 = vsel %vm73, %v4013, 0.0
    %v4072 = vsel %vm74, %v4010, 0.0
    %v4073 = vsel %vm74, %v4011, 0.0
    %v4074 = vsel %vm75, %v4008, 0.0
    %v4075 = vsel %vm75, %v4009, 0.0
    %v4076 = vsel %vm76, %v4006, 0.0
    %v4077 = vsel %vm76, %v4007, 0.0
    %v4078 = vsel %vm77, %v4004, 0.0
    %v4079 = vsel %vm77, %v4005, 0.0
    %v4080 = vsel %vm78, %v4002, 0.0
    %v4081 = vsel %vm78, %v4003, 0.0
    %v4082 = vsel %vm79, %v4000, 0.0
    %v4083 = vsel %vm79, %v4001, 0.0
    %v4084 = vsel %vm80, %v3998, 0.0
    %v4085 = vsel %vm80, %v3999, 0.0
    %v4086 = vsel %vm81, %v3996, 0.0
    %v4087 = vsel %vm81, %v3997, 0.0
    %v4088 = vsel %vm82, %v3994, 0.0
    %v4089 = vsel %vm82, %v3995, 0.0
    %v4090 = vsel %vm83, %v3992, 0.0
    %v4091 = vsel %vm83, %v3993, 0.0
    %v4092 = vsel %vm84, %v3990, 0.0
    %v4093 = vsel %vm84, %v3991, 0.0
    %v4094 = vsel %vm85, %v3988, 0.0
    %v4095 = vsel %vm85, %v3989, 0.0
    %v4096 = vsel %vm86, %v3986, 0.0
    %v4097 = vsel %vm86, %v3987, 0.0
    %v4098 = vrot.slane %v3706, 1
    %v4099 = vrot.slane %v3707, 1
    %v4100 = vrot.slane %v3708, 1
    %v4101 = vrot.slane %v3709, 1
    %v4102 = vrot.slane %v3710, 1
    %v4103 = vrot.slane %v3711, 1
    %v4104 = vrot.slane %v3712, 1
    %v4105 = vrot.slane %v3713, 1
    %v4106 = vrot.slane %v3714, 1
    %v4107 = vrot.slane %v3715, 1
    %v4108 = vrot.slane %v3716, 1
    %v4109 = vrot.slane %v3717, 1
    %v4110 = vrot.slane %v3718, 1
    %v4111 = vrot.slane %v3719, 1
    %v4112 = vrot.slane %v3720, 1
    %v4113 = vrot.slane %v3721, 1
    %v4114 = vrot.slane %v3722, 1
    %v4115 = vrot.slane %v3723, 1
    %v4116 = vrot.slane %v3724, 1
    %v4117 = vrot.slane %v3725, 1
    %v4118 = vrot.slane %v3726, 1
    %v4119 = vrot.slane %v3727, 1
    %v4120 = vrot.slane %v3728, 1
    %v4121 = vrot.slane %v3729, 1
    %v4122 = vrot.slane %v3730, 1
    %v4123 = vrot.slane %v3731, 1
    %v4124 = vrot.slane %v3732, 1
    %v4125 = vrot.slane %v3733, 1
    %v4126 = vrot.slane %v3734, 1
    %v4127 = vrot.slane %v3735, 1
    %v4128 = vrot.slane %v3736, 1
    %v4129 = vrot.slane %v3737, 1
    %v4130 = vrot.slane %v3738, 1
    %v4131 = vrot.slane %v3739, 1
    %v4132 = vrot.slane %v3740, 1
    %v4133 = vrot.slane %v3741, 1
    %v4134 = vrot.slane %v3742, 1
    %v4135 = vrot.slane %v3743, 1
    %v4136 = vrot.slane %v3744, 1
    %v4137 = vrot.slane %v3745, 1
    %v4138 = vrot.slane %v3746, 1
    %v4139 = vrot.slane %v3747, 1
    %v4140 = vrot.slane %v3748, 1
    %v4141 = vrot.slane %v3749, 1
    %v4142 = vrot.slane %v3750, 1
    %v4143 = vrot.slane %v3751, 1
    %v4144 = vrot.slane %v3752, 1
    %v4145 = vrot.slane %v3753, 1
    %v4146 = vrot.slane %v3754, 1
    %v4147 = vrot.slane %v3755, 1
    %v4148 = vrot.slane %v3756, 1
    %v4149 = vrot.slane %v3757, 1
    %v4150 = vrot.slane %v3758, 1
    %v4151 = vrot.slane %v3759, 1
    %v4152 = vrot.slane %v3760, 1
    %v4153 = vrot.slane %v3761, 1
    %v4154 = vsel %vm1491, %v4150, %v4152
    %v4155 = vsel %vm1491, %v4151, %v4153
    %v4156 = vsel %vm1491, %v4148, %v4150
    %v4157 = vsel %vm1491, %v4149, %v4151
    %v4158 = vsel %vm1491, %v4146, %v4148
    %v4159 = vsel %vm1491, %v4147, %v4149
    %v4160 = vsel %vm1491, %v4144, %v4146
    %v4161 = vsel %vm1491, %v4145, %v4147
    %v4162 = vsel %vm1491, %v4142, %v4144
    %v4163 = vsel %vm1491, %v4143, %v4145
    %v4164 = vsel %vm1491, %v4140, %v4142
    %v4165 = vsel %vm1491, %v4141, %v4143
    %v4166 = vsel %vm1491, %v4138, %v4140
    %v4167 = vsel %vm1491, %v4139, %v4141
    %v4168 = vsel %vm1491, %v4136, %v4138
    %v4169 = vsel %vm1491, %v4137, %v4139
    %v4170 = vsel %vm1491, %v4134, %v4136
    %v4171 = vsel %vm1491, %v4135, %v4137
    %v4172 = vsel %vm1491, %v4132, %v4134
    %v4173 = vsel %vm1491, %v4133, %v4135
    %v4174 = vsel %vm1491, %v4130, %v4132
    %v4175 = vsel %vm1491, %v4131, %v4133
    %v4176 = vsel %vm1491, %v4128, %v4130
    %v4177 = vsel %vm1491, %v4129, %v4131
    %v4178 = vsel %vm1491, %v4126, %v4128
    %v4179 = vsel %vm1491, %v4127, %v4129
    %v4180 = vsel %vm1491, %v4124, %v4126
    %v4181 = vsel %vm1491, %v4125, %v4127
    %v4182 = vsel %vm1491, %v4122, %v4124
    %v4183 = vsel %vm1491, %v4123, %v4125
    %v4184 = vsel %vm1491, %v4120, %v4122
    %v4185 = vsel %vm1491, %v4121, %v4123
    %v4186 = vsel %vm1491, %v4118, %v4120
    %v4187 = vsel %vm1491, %v4119, %v4121
    %v4188 = vsel %vm1491, %v4116, %v4118
    %v4189 = vsel %vm1491, %v4117, %v4119
    %v4190 = vsel %vm1491, %v4114, %v4116
    %v4191 = vsel %vm1491, %v4115, %v4117
    %v4192 = vsel %vm1491, %v4112, %v4114
    %v4193 = vsel %vm1491, %v4113, %v4115
    %v4194 = vsel %vm1491, %v4110, %v4112
    %v4195 = vsel %vm1491, %v4111, %v4113
    %v4196 = vsel %vm1491, %v4108, %v4110
    %v4197 = vsel %vm1491, %v4109, %v4111
    %v4198 = vsel %vm1491, %v4106, %v4108
    %v4199 = vsel %vm1491, %v4107, %v4109
    %v4200 = vsel %vm1491, %v4104, %v4106
    %v4201 = vsel %vm1491, %v4105, %v4107
    %v4202 = vsel %vm1491, %v4102, %v4104
    %v4203 = vsel %vm1491, %v4103, %v4105
    %v4204 = vsel %vm1491, %v4100, %v4102
    %v4205 = vsel %vm1491, %v4101, %v4103
    %v4206 = vsel %vm1491, %v4098, %v4100
    %v4207 = vsel %vm1491, %v4099, %v4101
    %v4208 = vsel %vm1491, %v4152, %v4098
    %v4209 = vsel %vm1491, %v4153, %v4099
    %v4210 = vsel %vm87, %v4206, 0.0
    %v4211 = vsel %vm87, %v4207, 0.0
    %v4212 = vsel %vm88, %v4204, 0.0
    %v4213 = vsel %vm88, %v4205, 0.0
    %v4214 = vsel %vm89, %v4202, 0.0
    %v4215 = vsel %vm89, %v4203, 0.0
    %v4216 = vsel %vm90, %v4200, 0.0
    %v4217 = vsel %vm90, %v4201, 0.0
    %v4218 = vsel %vm91, %v4198, 0.0
    %v4219 = vsel %vm91, %v4199, 0.0
    %v4220 = vsel %vm92, %v4196, 0.0
    %v4221 = vsel %vm92, %v4197, 0.0
    %v4222 = vsel %vm93, %v4194, 0.0
    %v4223 = vsel %vm93, %v4195, 0.0
    %v4224 = vsel %vm94, %v4192, 0.0
    %v4225 = vsel %vm94, %v4193, 0.0
    %v4226 = vsel %vm95, %v4190, 0.0
    %v4227 = vsel %vm95, %v4191, 0.0
    %v4228 = vsel %vm96, %v4188, 0.0
    %v4229 = vsel %vm96, %v4189, 0.0
    %v4230 = vsel %vm97, %v4186, 0.0
    %v4231 = vsel %vm97, %v4187, 0.0
    %v4232 = vsel %vm98, %v4184, 0.0
    %v4233 = vsel %vm98, %v4185, 0.0
    %v4234 = vsel %vm99, %v4182, 0.0
    %v4235 = vsel %vm99, %v4183, 0.0
    %v4236 = vsel %vm100, %v4180, 0.0
    %v4237 = vsel %vm100, %v4181, 0.0
    %v4238 = vsel %vm101, %v4178, 0.0
    %v4239 = vsel %vm101, %v4179, 0.0
    %v4240 = vsel %vm102, %v4176, 0.0
    %v4241 = vsel %vm102, %v4177, 0.0
    %v4242 = vsel %vm103, %v4174, 0.0
    %v4243 = vsel %vm103, %v4175, 0.0
    %v4244 = vsel %vm104, %v4172, 0.0
    %v4245 = vsel %vm104, %v4173, 0.0
    %v4246 = vsel %vm105, %v4170, 0.0
    %v4247 = vsel %vm105, %v4171, 0.0
    %v4248 = vsel %vm106, %v4168, 0.0
    %v4249 = vsel %vm106, %v4169, 0.0
    %v4250 = vsel %vm107, %v4166, 0.0
    %v4251 = vsel %vm107, %v4167, 0.0
    %v4252 = vsel %vm108, %v4164, 0.0
    %v4253 = vsel %vm108, %v4165, 0.0
    %v4254 = vsel %vm109, %v4162, 0.0
    %v4255 = vsel %vm109, %v4163, 0.0
    %v4256 = vsel %vm110, %v4160, 0.0
    %v4257 = vsel %vm110, %v4161, 0.0
    %v4258 = vsel %vm111, %v4158, 0.0
    %v4259 = vsel %vm111, %v4159, 0.0
    %v4260 = vsel %vm112, %v4156, 0.0
    %v4261 = vsel %vm112, %v4157, 0.0
    %v4262 = vsel %vm113, %v4154, 0.0
    %v4263 = vsel %vm113, %v4155, 0.0
    %v4264 = vsel %vm114, %v4208, 0.0
    %v4265 = vsel %vm114, %v4209, 0.0
    %v4266 = vmul.f32 %v3706, 2.0
    %v4267 = vmul.f32 %v3707, 2.0
    %v4268 = vmul.f32 %v3708, 2.0
    %v4269 = vmul.f32 %v3709, 2.0
    %v4270 = vmul.f32 %v3710, 2.0
    %v4271 = vmul.f32 %v3711, 2.0
    %v4272 = vmul.f32 %v3712, 2.0
    %v4273 = vmul.f32 %v3713, 2.0
    %v4274 = vmul.f32 %v3714, 2.0
    %v4275 = vmul.f32 %v3715, 2.0
    %v4276 = vmul.f32 %v3716, 2.0
    %v4277 = vmul.f32 %v3717, 2.0
    %v4278 = vmul.f32 %v3718, 2.0
    %v4279 = vmul.f32 %v3719, 2.0
    %v4280 = vmul.f32 %v3720, 2.0
    %v4281 = vmul.f32 %v3721, 2.0
    %v4282 = vmul.f32 %v3722, 2.0
    %v4283 = vmul.f32 %v3723, 2.0
    %v4284 = vmul.f32 %v3724, 2.0
    %v4285 = vmul.f32 %v3725, 2.0
    %v4286 = vmul.f32 %v3726, 2.0
    %v4287 = vmul.f32 %v3727, 2.0
    %v4288 = vmul.f32 %v3728, 2.0
    %v4289 = vmul.f32 %v3729, 2.0
    %v4290 = vmul.f32 %v3730, 2.0
    %v4291 = vmul.f32 %v3731, 2.0
    %v4292 = vmul.f32 %v3732, 2.0
    %v4293 = vmul.f32 %v3733, 2.0
    %v4294 = vmul.f32 %v3734, 2.0
    %v4295 = vmul.f32 %v3735, 2.0
    %v4296 = vmul.f32 %v3736, 2.0
    %v4297 = vmul.f32 %v3737, 2.0
    %v4298 = vmul.f32 %v3738, 2.0
    %v4299 = vmul.f32 %v3739, 2.0
    %v4300 = vmul.f32 %v3740, 2.0
    %v4301 = vmul.f32 %v3741, 2.0
    %v4302 = vmul.f32 %v3742, 2.0
    %v4303 = vmul.f32 %v3743, 2.0
    %v4304 = vmul.f32 %v3744, 2.0
    %v4305 = vmul.f32 %v3745, 2.0
    %v4306 = vmul.f32 %v3746, 2.0
    %v4307 = vmul.f32 %v3747, 2.0
    %v4308 = vmul.f32 %v3748, 2.0
    %v4309 = vmul.f32 %v3749, 2.0
    %v4310 = vmul.f32 %v3750, 2.0
    %v4311 = vmul.f32 %v3751, 2.0
    %v4312 = vmul.f32 %v3752, 2.0
    %v4313 = vmul.f32 %v3753, 2.0
    %v4314 = vmul.f32 %v3754, 2.0
    %v4315 = vmul.f32 %v3755, 2.0
    %v4316 = vmul.f32 %v3756, 2.0
    %v4317 = vmul.f32 %v3757, 2.0
    %v4318 = vmul.f32 %v3758, 2.0
    %v4319 = vmul.f32 %v3759, 2.0
    %v4320 = vmul.f32 %v3760, 2.0
    %v4321 = vmul.f32 %v3761, 2.0
    %v4322 = vadd.f32 %v4042, %v4266
    %v4323 = vadd.f32 %v4043, %v4267
    %v4324 = vadd.f32 %v4044, %v4268
    %v4325 = vadd.f32 %v4045, %v4269
    %v4326 = vadd.f32 %v4046, %v4270
    %v4327 = vadd.f32 %v4047, %v4271
    %v4328 = vadd.f32 %v4048, %v4272
    %v4329 = vadd.f32 %v4049, %v4273
    %v4330 = vadd.f32 %v4050, %v4274
    %v4331 = vadd.f32 %v4051, %v4275
    %v4332 = vadd.f32 %v4052, %v4276
    %v4333 = vadd.f32 %v4053, %v4277
    %v4334 = vadd.f32 %v4054, %v4278
    %v4335 = vadd.f32 %v4055, %v4279
    %v4336 = vadd.f32 %v4056, %v4280
    %v4337 = vadd.f32 %v4057, %v4281
    %v4338 = vadd.f32 %v4058, %v4282
    %v4339 = vadd.f32 %v4059, %v4283
    %v4340 = vadd.f32 %v4060, %v4284
    %v4341 = vadd.f32 %v4061, %v4285
    %v4342 = vadd.f32 %v4062, %v4286
    %v4343 = vadd.f32 %v4063, %v4287
    %v4344 = vadd.f32 %v4064, %v4288
    %v4345 = vadd.f32 %v4065, %v4289
    %v4346 = vadd.f32 %v4066, %v4290
    %v4347 = vadd.f32 %v4067, %v4291
    %v4348 = vadd.f32 %v4068, %v4292
    %v4349 = vadd.f32 %v4069, %v4293
    %v4350 = vadd.f32 %v4070, %v4294
    %v4351 = vadd.f32 %v4071, %v4295
    %v4352 = vadd.f32 %v4072, %v4296
    %v4353 = vadd.f32 %v4073, %v4297
    %v4354 = vadd.f32 %v4074, %v4298
    %v4355 = vadd.f32 %v4075, %v4299
    %v4356 = vadd.f32 %v4076, %v4300
    %v4357 = vadd.f32 %v4077, %v4301
    %v4358 = vadd.f32 %v4078, %v4302
    %v4359 = vadd.f32 %v4079, %v4303
    %v4360 = vadd.f32 %v4080, %v4304
    %v4361 = vadd.f32 %v4081, %v4305
    %v4362 = vadd.f32 %v4082, %v4306
    %v4363 = vadd.f32 %v4083, %v4307
    %v4364 = vadd.f32 %v4084, %v4308
    %v4365 = vadd.f32 %v4085, %v4309
    %v4366 = vadd.f32 %v4086, %v4310
    %v4367 = vadd.f32 %v4087, %v4311
    %v4368 = vadd.f32 %v4088, %v4312
    %v4369 = vadd.f32 %v4089, %v4313
    %v4370 = vadd.f32 %v4090, %v4314
    %v4371 = vadd.f32 %v4091, %v4315
    %v4372 = vadd.f32 %v4092, %v4316
    %v4373 = vadd.f32 %v4093, %v4317
    %v4374 = vadd.f32 %v4094, %v4318
    %v4375 = vadd.f32 %v4095, %v4319
    %v4376 = vadd.f32 %v4096, %v4320
    %v4377 = vadd.f32 %v4097, %v4321
    %v4378 = vadd.f32 %v4322, %v4210
    %v4379 = vadd.f32 %v4323, %v4211
    %v4380 = vadd.f32 %v4324, %v4212
    %v4381 = vadd.f32 %v4325, %v4213
    %v4382 = vadd.f32 %v4326, %v4214
    %v4383 = vadd.f32 %v4327, %v4215
    %v4384 = vadd.f32 %v4328, %v4216
    %v4385 = vadd.f32 %v4329, %v4217
    %v4386 = vadd.f32 %v4330, %v4218
    %v4387 = vadd.f32 %v4331, %v4219
    %v4388 = vadd.f32 %v4332, %v4220
    %v4389 = vadd.f32 %v4333, %v4221
    %v4390 = vadd.f32 %v4334, %v4222
    %v4391 = vadd.f32 %v4335, %v4223
    %v4392 = vadd.f32 %v4336, %v4224
    %v4393 = vadd.f32 %v4337, %v4225
    %v4394 = vadd.f32 %v4338, %v4226
    %v4395 = vadd.f32 %v4339, %v4227
    %v4396 = vadd.f32 %v4340, %v4228
    %v4397 = vadd.f32 %v4341, %v4229
    %v4398 = vadd.f32 %v4342, %v4230
    %v4399 = vadd.f32 %v4343, %v4231
    %v4400 = vadd.f32 %v4344, %v4232
    %v4401 = vadd.f32 %v4345, %v4233
    %v4402 = vadd.f32 %v4346, %v4234
    %v4403 = vadd.f32 %v4347, %v4235
    %v4404 = vadd.f32 %v4348, %v4236
    %v4405 = vadd.f32 %v4349, %v4237
    %v4406 = vadd.f32 %v4350, %v4238
    %v4407 = vadd.f32 %v4351, %v4239
    %v4408 = vadd.f32 %v4352, %v4240
    %v4409 = vadd.f32 %v4353, %v4241
    %v4410 = vadd.f32 %v4354, %v4242
    %v4411 = vadd.f32 %v4355, %v4243
    %v4412 = vadd.f32 %v4356, %v4244
    %v4413 = vadd.f32 %v4357, %v4245
    %v4414 = vadd.f32 %v4358, %v4246
    %v4415 = vadd.f32 %v4359, %v4247
    %v4416 = vadd.f32 %v4360, %v4248
    %v4417 = vadd.f32 %v4361, %v4249
    %v4418 = vadd.f32 %v4362, %v4250
    %v4419 = vadd.f32 %v4363, %v4251
    %v4420 = vadd.f32 %v4364, %v4252
    %v4421 = vadd.f32 %v4365, %v4253
    %v4422 = vadd.f32 %v4366, %v4254
    %v4423 = vadd.f32 %v4367, %v4255
    %v4424 = vadd.f32 %v4368, %v4256
    %v4425 = vadd.f32 %v4369, %v4257
    %v4426 = vadd.f32 %v4370, %v4258
    %v4427 = vadd.f32 %v4371, %v4259
    %v4428 = vadd.f32 %v4372, %v4260
    %v4429 = vadd.f32 %v4373, %v4261
    %v4430 = vadd.f32 %v4374, %v4262
    %v4431 = vadd.f32 %v4375, %v4263
    %v4432 = vadd.f32 %v4376, %v4264
    %v4433 = vadd.f32 %v4377, %v4265
    %v4434 = vmul.f32 %v4378, %v4378
    %v4435 = vmul.f32 %v4379, %v4379
    %v4436 = vmul.f32 %v4380, %v4380
    %v4437 = vmul.f32 %v4381, %v4381
    %v4438 = vmul.f32 %v4382, %v4382
    %v4439 = vmul.f32 %v4383, %v4383
    %v4440 = vmul.f32 %v4384, %v4384
    %v4441 = vmul.f32 %v4385, %v4385
    %v4442 = vmul.f32 %v4386, %v4386
    %v4443 = vmul.f32 %v4387, %v4387
    %v4444 = vmul.f32 %v4388, %v4388
    %v4445 = vmul.f32 %v4389, %v4389
    %v4446 = vmul.f32 %v4390, %v4390
    %v4447 = vmul.f32 %v4391, %v4391
    %v4448 = vmul.f32 %v4392, %v4392
    %v4449 = vmul.f32 %v4393, %v4393
    %v4450 = vmul.f32 %v4394, %v4394
    %v4451 = vmul.f32 %v4395, %v4395
    %v4452 = vmul.f32 %v4396, %v4396
    %v4453 = vmul.f32 %v4397, %v4397
    %v4454 = vmul.f32 %v4398, %v4398
    %v4455 = vmul.f32 %v4399, %v4399
    %v4456 = vmul.f32 %v4400, %v4400
    %v4457 = vmul.f32 %v4401, %v4401
    %v4458 = vmul.f32 %v4402, %v4402
    %v4459 = vmul.f32 %v4403, %v4403
    %v4460 = vmul.f32 %v4404, %v4404
    %v4461 = vmul.f32 %v4405, %v4405
    %v4462 = vmul.f32 %v4406, %v4406
    %v4463 = vmul.f32 %v4407, %v4407
    %v4464 = vmul.f32 %v4408, %v4408
    %v4465 = vmul.f32 %v4409, %v4409
    %v4466 = vmul.f32 %v4410, %v4410
    %v4467 = vmul.f32 %v4411, %v4411
    %v4468 = vmul.f32 %v4412, %v4412
    %v4469 = vmul.f32 %v4413, %v4413
    %v4470 = vmul.f32 %v4414, %v4414
    %v4471 = vmul.f32 %v4415, %v4415
    %v4472 = vmul.f32 %v4416, %v4416
    %v4473 = vmul.f32 %v4417, %v4417
    %v4474 = vmul.f32 %v4418, %v4418
    %v4475 = vmul.f32 %v4419, %v4419
    %v4476 = vmul.f32 %v4420, %v4420
    %v4477 = vmul.f32 %v4421, %v4421
    %v4478 = vmul.f32 %v4422, %v4422
    %v4479 = vmul.f32 %v4423, %v4423
    %v4480 = vmul.f32 %v4424, %v4424
    %v4481 = vmul.f32 %v4425, %v4425
    %v4482 = vmul.f32 %v4426, %v4426
    %v4483 = vmul.f32 %v4427, %v4427
    %v4484 = vmul.f32 %v4428, %v4428
    %v4485 = vmul.f32 %v4429, %v4429
    %v4486 = vmul.f32 %v4430, %v4430
    %v4487 = vmul.f32 %v4431, %v4431
    %v4488 = vmul.f32 %v4432, %v4432
    %v4489 = vmul.f32 %v4433, %v4433
    %v4490 = vrot.slane %v3874, 7
    %v4491 = vrot.slane %v3875, 7
    %v4492 = vrot.slane %v3876, 7
    %v4493 = vrot.slane %v3877, 7
    %v4494 = vrot.slane %v3878, 7
    %v4495 = vrot.slane %v3879, 7
    %v4496 = vrot.slane %v3880, 7
    %v4497 = vrot.slane %v3881, 7
    %v4498 = vrot.slane %v3882, 7
    %v4499 = vrot.slane %v3883, 7
    %v4500 = vrot.slane %v3884, 7
    %v4501 = vrot.slane %v3885, 7
    %v4502 = vrot.slane %v3886, 7
    %v4503 = vrot.slane %v3887, 7
    %v4504 = vrot.slane %v3888, 7
    %v4505 = vrot.slane %v3889, 7
    %v4506 = vrot.slane %v3890, 7
    %v4507 = vrot.slane %v3891, 7
    %v4508 = vrot.slane %v3892, 7
    %v4509 = vrot.slane %v3893, 7
    %v4510 = vrot.slane %v3894, 7
    %v4511 = vrot.slane %v3895, 7
    %v4512 = vrot.slane %v3896, 7
    %v4513 = vrot.slane %v3897, 7
    %v4514 = vrot.slane %v3898, 7
    %v4515 = vrot.slane %v3899, 7
    %v4516 = vrot.slane %v3900, 7
    %v4517 = vrot.slane %v3901, 7
    %v4518 = vrot.slane %v3902, 7
    %v4519 = vrot.slane %v3903, 7
    %v4520 = vrot.slane %v3904, 7
    %v4521 = vrot.slane %v3905, 7
    %v4522 = vrot.slane %v3906, 7
    %v4523 = vrot.slane %v3907, 7
    %v4524 = vrot.slane %v3908, 7
    %v4525 = vrot.slane %v3909, 7
    %v4526 = vrot.slane %v3910, 7
    %v4527 = vrot.slane %v3911, 7
    %v4528 = vrot.slane %v3912, 7
    %v4529 = vrot.slane %v3913, 7
    %v4530 = vrot.slane %v3914, 7
    %v4531 = vrot.slane %v3915, 7
    %v4532 = vrot.slane %v3916, 7
    %v4533 = vrot.slane %v3917, 7
    %v4534 = vrot.slane %v3918, 7
    %v4535 = vrot.slane %v3919, 7
    %v4536 = vrot.slane %v3920, 7
    %v4537 = vrot.slane %v3921, 7
    %v4538 = vrot.slane %v3922, 7
    %v4539 = vrot.slane %v3923, 7
    %v4540 = vrot.slane %v3924, 7
    %v4541 = vrot.slane %v3925, 7
    %v4542 = vrot.slane %v3926, 7
    %v4543 = vrot.slane %v3927, 7
    %v4544 = vrot.slane %v3928, 7
    %v4545 = vrot.slane %v3929, 7
    %v4546 = vsel %vm1322, %v4542, %v4544
    %v4547 = vsel %vm1322, %v4543, %v4545
    %v4548 = vsel %vm1322, %v4540, %v4542
    %v4549 = vsel %vm1322, %v4541, %v4543
    %v4550 = vsel %vm1322, %v4538, %v4540
    %v4551 = vsel %vm1322, %v4539, %v4541
    %v4552 = vsel %vm1322, %v4536, %v4538
    %v4553 = vsel %vm1322, %v4537, %v4539
    %v4554 = vsel %vm1322, %v4534, %v4536
    %v4555 = vsel %vm1322, %v4535, %v4537
    %v4556 = vsel %vm1322, %v4532, %v4534
    %v4557 = vsel %vm1322, %v4533, %v4535
    %v4558 = vsel %vm1322, %v4530, %v4532
    %v4559 = vsel %vm1322, %v4531, %v4533
    %v4560 = vsel %vm1322, %v4528, %v4530
    %v4561 = vsel %vm1322, %v4529, %v4531
    %v4562 = vsel %vm1322, %v4526, %v4528
    %v4563 = vsel %vm1322, %v4527, %v4529
    %v4564 = vsel %vm1322, %v4524, %v4526
    %v4565 = vsel %vm1322, %v4525, %v4527
    %v4566 = vsel %vm1322, %v4522, %v4524
    %v4567 = vsel %vm1322, %v4523, %v4525
    %v4568 = vsel %vm1322, %v4520, %v4522
    %v4569 = vsel %vm1322, %v4521, %v4523
    %v4570 = vsel %vm1322, %v4518, %v4520
    %v4571 = vsel %vm1322, %v4519, %v4521
    %v4572 = vsel %vm1322, %v4516, %v4518
    %v4573 = vsel %vm1322, %v4517, %v4519
    %v4574 = vsel %vm1322, %v4514, %v4516
    %v4575 = vsel %vm1322, %v4515, %v4517
    %v4576 = vsel %vm1322, %v4512, %v4514
    %v4577 = vsel %vm1322, %v4513, %v4515
    %v4578 = vsel %vm1322, %v4510, %v4512
    %v4579 = vsel %vm1322, %v4511, %v4513
    %v4580 = vsel %vm1322, %v4508, %v4510
    %v4581 = vsel %vm1322, %v4509, %v4511
    %v4582 = vsel %vm1322, %v4506, %v4508
    %v4583 = vsel %vm1322, %v4507, %v4509
    %v4584 = vsel %vm1322, %v4504, %v4506
    %v4585 = vsel %vm1322, %v4505, %v4507
    %v4586 = vsel %vm1322, %v4502, %v4504
    %v4587 = vsel %vm1322, %v4503, %v4505
    %v4588 = vsel %vm1322, %v4500, %v4502
    %v4589 = vsel %vm1322, %v4501, %v4503
    %v4590 = vsel %vm1322, %v4498, %v4500
    %v4591 = vsel %vm1322, %v4499, %v4501
    %v4592 = vsel %vm1322, %v4496, %v4498
    %v4593 = vsel %vm1322, %v4497, %v4499
    %v4594 = vsel %vm1322, %v4494, %v4496
    %v4595 = vsel %vm1322, %v4495, %v4497
    %v4596 = vsel %vm1322, %v4492, %v4494
    %v4597 = vsel %vm1322, %v4493, %v4495
    %v4598 = vsel %vm1322, %v4490, %v4492
    %v4599 = vsel %vm1322, %v4491, %v4493
    %v4600 = vsel %vm1322, %v4544, %v4490
    %v4601 = vsel %vm1322, %v4545, %v4491
    %v4602 = vsel %vm59, %v4600, 0.0
    %v4603 = vsel %vm59, %v4601, 0.0
    %v4604 = vsel %vm60, %v4598, 0.0
    %v4605 = vsel %vm60, %v4599, 0.0
    %v4606 = vsel %vm61, %v4596, 0.0
    %v4607 = vsel %vm61, %v4597, 0.0
    %v4608 = vsel %vm62, %v4594, 0.0
    %v4609 = vsel %vm62, %v4595, 0.0
    %v4610 = vsel %vm63, %v4592, 0.0
    %v4611 = vsel %vm63, %v4593, 0.0
    %v4612 = vsel %vm64, %v4590, 0.0
    %v4613 = vsel %vm64, %v4591, 0.0
    %v4614 = vsel %vm65, %v4588, 0.0
    %v4615 = vsel %vm65, %v4589, 0.0
    %v4616 = vsel %vm66, %v4586, 0.0
    %v4617 = vsel %vm66, %v4587, 0.0
    %v4618 = vsel %vm67, %v4584, 0.0
    %v4619 = vsel %vm67, %v4585, 0.0
    %v4620 = vsel %vm68, %v4582, 0.0
    %v4621 = vsel %vm68, %v4583, 0.0
    %v4622 = vsel %vm69, %v4580, 0.0
    %v4623 = vsel %vm69, %v4581, 0.0
    %v4624 = vsel %vm70, %v4578, 0.0
    %v4625 = vsel %vm70, %v4579, 0.0
    %v4626 = vsel %vm71, %v4576, 0.0
    %v4627 = vsel %vm71, %v4577, 0.0
    %v4628 = vsel %vm72, %v4574, 0.0
    %v4629 = vsel %vm72, %v4575, 0.0
    %v4630 = vsel %vm73, %v4572, 0.0
    %v4631 = vsel %vm73, %v4573, 0.0
    %v4632 = vsel %vm74, %v4570, 0.0
    %v4633 = vsel %vm74, %v4571, 0.0
    %v4634 = vsel %vm75, %v4568, 0.0
    %v4635 = vsel %vm75, %v4569, 0.0
    %v4636 = vsel %vm76, %v4566, 0.0
    %v4637 = vsel %vm76, %v4567, 0.0
    %v4638 = vsel %vm77, %v4564, 0.0
    %v4639 = vsel %vm77, %v4565, 0.0
    %v4640 = vsel %vm78, %v4562, 0.0
    %v4641 = vsel %vm78, %v4563, 0.0
    %v4642 = vsel %vm79, %v4560, 0.0
    %v4643 = vsel %vm79, %v4561, 0.0
    %v4644 = vsel %vm80, %v4558, 0.0
    %v4645 = vsel %vm80, %v4559, 0.0
    %v4646 = vsel %vm81, %v4556, 0.0
    %v4647 = vsel %vm81, %v4557, 0.0
    %v4648 = vsel %vm82, %v4554, 0.0
    %v4649 = vsel %vm82, %v4555, 0.0
    %v4650 = vsel %vm83, %v4552, 0.0
    %v4651 = vsel %vm83, %v4553, 0.0
    %v4652 = vsel %vm84, %v4550, 0.0
    %v4653 = vsel %vm84, %v4551, 0.0
    %v4654 = vsel %vm85, %v4548, 0.0
    %v4655 = vsel %vm85, %v4549, 0.0
    %v4656 = vsel %vm86, %v4546, 0.0
    %v4657 = vsel %vm86, %v4547, 0.0
    %v4658 = vrot.slane %v3874, 1
    %v4659 = vrot.slane %v3875, 1
    %v4660 = vrot.slane %v3876, 1
    %v4661 = vrot.slane %v3877, 1
    %v4662 = vrot.slane %v3878, 1
    %v4663 = vrot.slane %v3879, 1
    %v4664 = vrot.slane %v3880, 1
    %v4665 = vrot.slane %v3881, 1
    %v4666 = vrot.slane %v3882, 1
    %v4667 = vrot.slane %v3883, 1
    %v4668 = vrot.slane %v3884, 1
    %v4669 = vrot.slane %v3885, 1
    %v4670 = vrot.slane %v3886, 1
    %v4671 = vrot.slane %v3887, 1
    %v4672 = vrot.slane %v3888, 1
    %v4673 = vrot.slane %v3889, 1
    %v4674 = vrot.slane %v3890, 1
    %v4675 = vrot.slane %v3891, 1
    %v4676 = vrot.slane %v3892, 1
    %v4677 = vrot.slane %v3893, 1
    %v4678 = vrot.slane %v3894, 1
    %v4679 = vrot.slane %v3895, 1
    %v4680 = vrot.slane %v3896, 1
    %v4681 = vrot.slane %v3897, 1
    %v4682 = vrot.slane %v3898, 1
    %v4683 = vrot.slane %v3899, 1
    %v4684 = vrot.slane %v3900, 1
    %v4685 = vrot.slane %v3901, 1
    %v4686 = vrot.slane %v3902, 1
    %v4687 = vrot.slane %v3903, 1
    %v4688 = vrot.slane %v3904, 1
    %v4689 = vrot.slane %v3905, 1
    %v4690 = vrot.slane %v3906, 1
    %v4691 = vrot.slane %v3907, 1
    %v4692 = vrot.slane %v3908, 1
    %v4693 = vrot.slane %v3909, 1
    %v4694 = vrot.slane %v3910, 1
    %v4695 = vrot.slane %v3911, 1
    %v4696 = vrot.slane %v3912, 1
    %v4697 = vrot.slane %v3913, 1
    %v4698 = vrot.slane %v3914, 1
    %v4699 = vrot.slane %v3915, 1
    %v4700 = vrot.slane %v3916, 1
    %v4701 = vrot.slane %v3917, 1
    %v4702 = vrot.slane %v3918, 1
    %v4703 = vrot.slane %v3919, 1
    %v4704 = vrot.slane %v3920, 1
    %v4705 = vrot.slane %v3921, 1
    %v4706 = vrot.slane %v3922, 1
    %v4707 = vrot.slane %v3923, 1
    %v4708 = vrot.slane %v3924, 1
    %v4709 = vrot.slane %v3925, 1
    %v4710 = vrot.slane %v3926, 1
    %v4711 = vrot.slane %v3927, 1
    %v4712 = vrot.slane %v3928, 1
    %v4713 = vrot.slane %v3929, 1
    %v4714 = vsel %vm1491, %v4710, %v4712
    %v4715 = vsel %vm1491, %v4711, %v4713
    %v4716 = vsel %vm1491, %v4708, %v4710
    %v4717 = vsel %vm1491, %v4709, %v4711
    %v4718 = vsel %vm1491, %v4706, %v4708
    %v4719 = vsel %vm1491, %v4707, %v4709
    %v4720 = vsel %vm1491, %v4704, %v4706
    %v4721 = vsel %vm1491, %v4705, %v4707
    %v4722 = vsel %vm1491, %v4702, %v4704
    %v4723 = vsel %vm1491, %v4703, %v4705
    %v4724 = vsel %vm1491, %v4700, %v4702
    %v4725 = vsel %vm1491, %v4701, %v4703
    %v4726 = vsel %vm1491, %v4698, %v4700
    %v4727 = vsel %vm1491, %v4699, %v4701
    %v4728 = vsel %vm1491, %v4696, %v4698
    %v4729 = vsel %vm1491, %v4697, %v4699
    %v4730 = vsel %vm1491, %v4694, %v4696
    %v4731 = vsel %vm1491, %v4695, %v4697
    %v4732 = vsel %vm1491, %v4692, %v4694
    %v4733 = vsel %vm1491, %v4693, %v4695
    %v4734 = vsel %vm1491, %v4690, %v4692
    %v4735 = vsel %vm1491, %v4691, %v4693
    %v4736 = vsel %vm1491, %v4688, %v4690
    %v4737 = vsel %vm1491, %v4689, %v4691
    %v4738 = vsel %vm1491, %v4686, %v4688
    %v4739 = vsel %vm1491, %v4687, %v4689
    %v4740 = vsel %vm1491, %v4684, %v4686
    %v4741 = vsel %vm1491, %v4685, %v4687
    %v4742 = vsel %vm1491, %v4682, %v4684
    %v4743 = vsel %vm1491, %v4683, %v4685
    %v4744 = vsel %vm1491, %v4680, %v4682
    %v4745 = vsel %vm1491, %v4681, %v4683
    %v4746 = vsel %vm1491, %v4678, %v4680
    %v4747 = vsel %vm1491, %v4679, %v4681
    %v4748 = vsel %vm1491, %v4676, %v4678
    %v4749 = vsel %vm1491, %v4677, %v4679
    %v4750 = vsel %vm1491, %v4674, %v4676
    %v4751 = vsel %vm1491, %v4675, %v4677
    %v4752 = vsel %vm1491, %v4672, %v4674
    %v4753 = vsel %vm1491, %v4673, %v4675
    %v4754 = vsel %vm1491, %v4670, %v4672
    %v4755 = vsel %vm1491, %v4671, %v4673
    %v4756 = vsel %vm1491, %v4668, %v4670
    %v4757 = vsel %vm1491, %v4669, %v4671
    %v4758 = vsel %vm1491, %v4666, %v4668
    %v4759 = vsel %vm1491, %v4667, %v4669
    %v4760 = vsel %vm1491, %v4664, %v4666
    %v4761 = vsel %vm1491, %v4665, %v4667
    %v4762 = vsel %vm1491, %v4662, %v4664
    %v4763 = vsel %vm1491, %v4663, %v4665
    %v4764 = vsel %vm1491, %v4660, %v4662
    %v4765 = vsel %vm1491, %v4661, %v4663
    %v4766 = vsel %vm1491, %v4658, %v4660
    %v4767 = vsel %vm1491, %v4659, %v4661
    %v4768 = vsel %vm1491, %v4712, %v4658
    %v4769 = vsel %vm1491, %v4713, %v4659
    %v4770 = vsel %vm87, %v4766, 0.0
    %v4771 = vsel %vm87, %v4767, 0.0
    %v4772 = vsel %vm88, %v4764, 0.0
    %v4773 = vsel %vm88, %v4765, 0.0
    %v4774 = vsel %vm89, %v4762, 0.0
    %v4775 = vsel %vm89, %v4763, 0.0
    %v4776 = vsel %vm90, %v4760, 0.0
    %v4777 = vsel %vm90, %v4761, 0.0
    %v4778 = vsel %vm91, %v4758, 0.0
    %v4779 = vsel %vm91, %v4759, 0.0
    %v4780 = vsel %vm92, %v4756, 0.0
    %v4781 = vsel %vm92, %v4757, 0.0
    %v4782 = vsel %vm93, %v4754, 0.0
    %v4783 = vsel %vm93, %v4755, 0.0
    %v4784 = vsel %vm94, %v4752, 0.0
    %v4785 = vsel %vm94, %v4753, 0.0
    %v4786 = vsel %vm95, %v4750, 0.0
    %v4787 = vsel %vm95, %v4751, 0.0
    %v4788 = vsel %vm96, %v4748, 0.0
    %v4789 = vsel %vm96, %v4749, 0.0
    %v4790 = vsel %vm97, %v4746, 0.0
    %v4791 = vsel %vm97, %v4747, 0.0
    %v4792 = vsel %vm98, %v4744, 0.0
    %v4793 = vsel %vm98, %v4745, 0.0
    %v4794 = vsel %vm99, %v4742, 0.0
    %v4795 = vsel %vm99, %v4743, 0.0
    %v4796 = vsel %vm100, %v4740, 0.0
    %v4797 = vsel %vm100, %v4741, 0.0
    %v4798 = vsel %vm101, %v4738, 0.0
    %v4799 = vsel %vm101, %v4739, 0.0
    %v4800 = vsel %vm102, %v4736, 0.0
    %v4801 = vsel %vm102, %v4737, 0.0
    %v4802 = vsel %vm103, %v4734, 0.0
    %v4803 = vsel %vm103, %v4735, 0.0
    %v4804 = vsel %vm104, %v4732, 0.0
    %v4805 = vsel %vm104, %v4733, 0.0
    %v4806 = vsel %vm105, %v4730, 0.0
    %v4807 = vsel %vm105, %v4731, 0.0
    %v4808 = vsel %vm106, %v4728, 0.0
    %v4809 = vsel %vm106, %v4729, 0.0
    %v4810 = vsel %vm107, %v4726, 0.0
    %v4811 = vsel %vm107, %v4727, 0.0
    %v4812 = vsel %vm108, %v4724, 0.0
    %v4813 = vsel %vm108, %v4725, 0.0
    %v4814 = vsel %vm109, %v4722, 0.0
    %v4815 = vsel %vm109, %v4723, 0.0
    %v4816 = vsel %vm110, %v4720, 0.0
    %v4817 = vsel %vm110, %v4721, 0.0
    %v4818 = vsel %vm111, %v4718, 0.0
    %v4819 = vsel %vm111, %v4719, 0.0
    %v4820 = vsel %vm112, %v4716, 0.0
    %v4821 = vsel %vm112, %v4717, 0.0
    %v4822 = vsel %vm113, %v4714, 0.0
    %v4823 = vsel %vm113, %v4715, 0.0
    %v4824 = vsel %vm114, %v4768, 0.0
    %v4825 = vsel %vm114, %v4769, 0.0
    %v4826 = vsub.f32 %v4602, %v4770
    %v4827 = vsub.f32 %v4603, %v4771
    %v4828 = vsub.f32 %v4604, %v4772
    %v4829 = vsub.f32 %v4605, %v4773
    %v4830 = vsub.f32 %v4606, %v4774
    %v4831 = vsub.f32 %v4607, %v4775
    %v4832 = vsub.f32 %v4608, %v4776
    %v4833 = vsub.f32 %v4609, %v4777
    %v4834 = vsub.f32 %v4610, %v4778
    %v4835 = vsub.f32 %v4611, %v4779
    %v4836 = vsub.f32 %v4612, %v4780
    %v4837 = vsub.f32 %v4613, %v4781
    %v4838 = vsub.f32 %v4614, %v4782
    %v4839 = vsub.f32 %v4615, %v4783
    %v4840 = vsub.f32 %v4616, %v4784
    %v4841 = vsub.f32 %v4617, %v4785
    %v4842 = vsub.f32 %v4618, %v4786
    %v4843 = vsub.f32 %v4619, %v4787
    %v4844 = vsub.f32 %v4620, %v4788
    %v4845 = vsub.f32 %v4621, %v4789
    %v4846 = vsub.f32 %v4622, %v4790
    %v4847 = vsub.f32 %v4623, %v4791
    %v4848 = vsub.f32 %v4624, %v4792
    %v4849 = vsub.f32 %v4625, %v4793
    %v4850 = vsub.f32 %v4626, %v4794
    %v4851 = vsub.f32 %v4627, %v4795
    %v4852 = vsub.f32 %v4628, %v4796
    %v4853 = vsub.f32 %v4629, %v4797
    %v4854 = vsub.f32 %v4630, %v4798
    %v4855 = vsub.f32 %v4631, %v4799
    %v4856 = vsub.f32 %v4632, %v4800
    %v4857 = vsub.f32 %v4633, %v4801
    %v4858 = vsub.f32 %v4634, %v4802
    %v4859 = vsub.f32 %v4635, %v4803
    %v4860 = vsub.f32 %v4636, %v4804
    %v4861 = vsub.f32 %v4637, %v4805
    %v4862 = vsub.f32 %v4638, %v4806
    %v4863 = vsub.f32 %v4639, %v4807
    %v4864 = vsub.f32 %v4640, %v4808
    %v4865 = vsub.f32 %v4641, %v4809
    %v4866 = vsub.f32 %v4642, %v4810
    %v4867 = vsub.f32 %v4643, %v4811
    %v4868 = vsub.f32 %v4644, %v4812
    %v4869 = vsub.f32 %v4645, %v4813
    %v4870 = vsub.f32 %v4646, %v4814
    %v4871 = vsub.f32 %v4647, %v4815
    %v4872 = vsub.f32 %v4648, %v4816
    %v4873 = vsub.f32 %v4649, %v4817
    %v4874 = vsub.f32 %v4650, %v4818
    %v4875 = vsub.f32 %v4651, %v4819
    %v4876 = vsub.f32 %v4652, %v4820
    %v4877 = vsub.f32 %v4653, %v4821
    %v4878 = vsub.f32 %v4654, %v4822
    %v4879 = vsub.f32 %v4655, %v4823
    %v4880 = vsub.f32 %v4656, %v4824
    %v4881 = vsub.f32 %v4657, %v4825
    %v4882 = vmul.f32 %v4826, %v4826
    %v4883 = vmul.f32 %v4827, %v4827
    %v4884 = vmul.f32 %v4828, %v4828
    %v4885 = vmul.f32 %v4829, %v4829
    %v4886 = vmul.f32 %v4830, %v4830
    %v4887 = vmul.f32 %v4831, %v4831
    %v4888 = vmul.f32 %v4832, %v4832
    %v4889 = vmul.f32 %v4833, %v4833
    %v4890 = vmul.f32 %v4834, %v4834
    %v4891 = vmul.f32 %v4835, %v4835
    %v4892 = vmul.f32 %v4836, %v4836
    %v4893 = vmul.f32 %v4837, %v4837
    %v4894 = vmul.f32 %v4838, %v4838
    %v4895 = vmul.f32 %v4839, %v4839
    %v4896 = vmul.f32 %v4840, %v4840
    %v4897 = vmul.f32 %v4841, %v4841
    %v4898 = vmul.f32 %v4842, %v4842
    %v4899 = vmul.f32 %v4843, %v4843
    %v4900 = vmul.f32 %v4844, %v4844
    %v4901 = vmul.f32 %v4845, %v4845
    %v4902 = vmul.f32 %v4846, %v4846
    %v4903 = vmul.f32 %v4847, %v4847
    %v4904 = vmul.f32 %v4848, %v4848
    %v4905 = vmul.f32 %v4849, %v4849
    %v4906 = vmul.f32 %v4850, %v4850
    %v4907 = vmul.f32 %v4851, %v4851
    %v4908 = vmul.f32 %v4852, %v4852
    %v4909 = vmul.f32 %v4853, %v4853
    %v4910 = vmul.f32 %v4854, %v4854
    %v4911 = vmul.f32 %v4855, %v4855
    %v4912 = vmul.f32 %v4856, %v4856
    %v4913 = vmul.f32 %v4857, %v4857
    %v4914 = vmul.f32 %v4858, %v4858
    %v4915 = vmul.f32 %v4859, %v4859
    %v4916 = vmul.f32 %v4860, %v4860
    %v4917 = vmul.f32 %v4861, %v4861
    %v4918 = vmul.f32 %v4862, %v4862
    %v4919 = vmul.f32 %v4863, %v4863
    %v4920 = vmul.f32 %v4864, %v4864
    %v4921 = vmul.f32 %v4865, %v4865
    %v4922 = vmul.f32 %v4866, %v4866
    %v4923 = vmul.f32 %v4867, %v4867
    %v4924 = vmul.f32 %v4868, %v4868
    %v4925 = vmul.f32 %v4869, %v4869
    %v4926 = vmul.f32 %v4870, %v4870
    %v4927 = vmul.f32 %v4871, %v4871
    %v4928 = vmul.f32 %v4872, %v4872
    %v4929 = vmul.f32 %v4873, %v4873
    %v4930 = vmul.f32 %v4874, %v4874
    %v4931 = vmul.f32 %v4875, %v4875
    %v4932 = vmul.f32 %v4876, %v4876
    %v4933 = vmul.f32 %v4877, %v4877
    %v4934 = vmul.f32 %v4878, %v4878
    %v4935 = vmul.f32 %v4879, %v4879
    %v4936 = vmul.f32 %v4880, %v4880
    %v4937 = vmul.f32 %v4881, %v4881
    %v4938 = vadd.f32 %v4434, %v4882
    %v4939 = vadd.f32 %v4435, %v4883
    %v4940 = vadd.f32 %v4436, %v4884
    %v4941 = vadd.f32 %v4437, %v4885
    %v4942 = vadd.f32 %v4438, %v4886
    %v4943 = vadd.f32 %v4439, %v4887
    %v4944 = vadd.f32 %v4440, %v4888
    %v4945 = vadd.f32 %v4441, %v4889
    %v4946 = vadd.f32 %v4442, %v4890
    %v4947 = vadd.f32 %v4443, %v4891
    %v4948 = vadd.f32 %v4444, %v4892
    %v4949 = vadd.f32 %v4445, %v4893
    %v4950 = vadd.f32 %v4446, %v4894
    %v4951 = vadd.f32 %v4447, %v4895
    %v4952 = vadd.f32 %v4448, %v4896
    %v4953 = vadd.f32 %v4449, %v4897
    %v4954 = vadd.f32 %v4450, %v4898
    %v4955 = vadd.f32 %v4451, %v4899
    %v4956 = vadd.f32 %v4452, %v4900
    %v4957 = vadd.f32 %v4453, %v4901
    %v4958 = vadd.f32 %v4454, %v4902
    %v4959 = vadd.f32 %v4455, %v4903
    %v4960 = vadd.f32 %v4456, %v4904
    %v4961 = vadd.f32 %v4457, %v4905
    %v4962 = vadd.f32 %v4458, %v4906
    %v4963 = vadd.f32 %v4459, %v4907
    %v4964 = vadd.f32 %v4460, %v4908
    %v4965 = vadd.f32 %v4461, %v4909
    %v4966 = vadd.f32 %v4462, %v4910
    %v4967 = vadd.f32 %v4463, %v4911
    %v4968 = vadd.f32 %v4464, %v4912
    %v4969 = vadd.f32 %v4465, %v4913
    %v4970 = vadd.f32 %v4466, %v4914
    %v4971 = vadd.f32 %v4467, %v4915
    %v4972 = vadd.f32 %v4468, %v4916
    %v4973 = vadd.f32 %v4469, %v4917
    %v4974 = vadd.f32 %v4470, %v4918
    %v4975 = vadd.f32 %v4471, %v4919
    %v4976 = vadd.f32 %v4472, %v4920
    %v4977 = vadd.f32 %v4473, %v4921
    %v4978 = vadd.f32 %v4474, %v4922
    %v4979 = vadd.f32 %v4475, %v4923
    %v4980 = vadd.f32 %v4476, %v4924
    %v4981 = vadd.f32 %v4477, %v4925
    %v4982 = vadd.f32 %v4478, %v4926
    %v4983 = vadd.f32 %v4479, %v4927
    %v4984 = vadd.f32 %v4480, %v4928
    %v4985 = vadd.f32 %v4481, %v4929
    %v4986 = vadd.f32 %v4482, %v4930
    %v4987 = vadd.f32 %v4483, %v4931
    %v4988 = vadd.f32 %v4484, %v4932
    %v4989 = vadd.f32 %v4485, %v4933
    %v4990 = vadd.f32 %v4486, %v4934
    %v4991 = vadd.f32 %v4487, %v4935
    %v4992 = vadd.f32 %v4488, %v4936
    %v4993 = vadd.f32 %v4489, %v4937
    %v4994 = vrsqrt.pop %v4938
    %v4995 = vmul.f32 %v4938, %v4994
    %vm4996 = vcmp.eq.f32.partialorder %v4938, inf
    %v4997 = vsel %vm4996, %v4938, %v4995
    %vm4998 = vcmp.eq.f32.partialorder %v4938, 0.0
    %v4999 = vand.u32 %v4938, 2147483648
    %v5000 = vsel %vm4998, %v4999, %v4997
    %v5001 = vrsqrt.pop %v4939
    %v5002 = vmul.f32 %v4939, %v5001
    %vm5003 = vcmp.eq.f32.partialorder %v4939, inf
    %v5004 = vsel %vm5003, %v4939, %v5002
    %vm5005 = vcmp.eq.f32.partialorder %v4939, 0.0
    %v5006 = vand.u32 %v4939, 2147483648
    %v5007 = vsel %vm5005, %v5006, %v5004
    %v5008 = vrsqrt.pop %v4940
    %v5009 = vmul.f32 %v4940, %v5008
    %vm5010 = vcmp.eq.f32.partialorder %v4940, inf
    %v5011 = vsel %vm5010, %v4940, %v5009
    %vm5012 = vcmp.eq.f32.partialorder %v4940, 0.0
    %v5013 = vand.u32 %v4940, 2147483648
    %v5014 = vsel %vm5012, %v5013, %v5011
    %v5015 = vrsqrt.pop %v4941
    %v5016 = vmul.f32 %v4941, %v5015
    %vm5017 = vcmp.eq.f32.partialorder %v4941, inf
    %v5018 = vsel %vm5017, %v4941, %v5016
    %vm5019 = vcmp.eq.f32.partialorder %v4941, 0.0
    %v5020 = vand.u32 %v4941, 2147483648
    %v5021 = vsel %vm5019, %v5020, %v5018
    %v5022 = vrsqrt.pop %v4942
    %v5023 = vmul.f32 %v4942, %v5022
    %vm5024 = vcmp.eq.f32.partialorder %v4942, inf
    %v5025 = vsel %vm5024, %v4942, %v5023
    %vm5026 = vcmp.eq.f32.partialorder %v4942, 0.0
    %v5027 = vand.u32 %v4942, 2147483648
    %v5028 = vsel %vm5026, %v5027, %v5025
    %v5029 = vrsqrt.pop %v4943
    %v5030 = vmul.f32 %v4943, %v5029
    %vm5031 = vcmp.eq.f32.partialorder %v4943, inf
    %v5032 = vsel %vm5031, %v4943, %v5030
    %vm5033 = vcmp.eq.f32.partialorder %v4943, 0.0
    %v5034 = vand.u32 %v4943, 2147483648
    %v5035 = vsel %vm5033, %v5034, %v5032
    %v5036 = vrsqrt.pop %v4944
    %v5037 = vmul.f32 %v4944, %v5036
    %vm5038 = vcmp.eq.f32.partialorder %v4944, inf
    %v5039 = vsel %vm5038, %v4944, %v5037
    %vm5040 = vcmp.eq.f32.partialorder %v4944, 0.0
    %v5041 = vand.u32 %v4944, 2147483648
    %v5042 = vsel %vm5040, %v5041, %v5039
    %v5043 = vrsqrt.pop %v4945
    %v5044 = vmul.f32 %v4945, %v5043
    %vm5045 = vcmp.eq.f32.partialorder %v4945, inf
    %v5046 = vsel %vm5045, %v4945, %v5044
    %vm5047 = vcmp.eq.f32.partialorder %v4945, 0.0
    %v5048 = vand.u32 %v4945, 2147483648
    %v5049 = vsel %vm5047, %v5048, %v5046
    %v5050 = vrsqrt.pop %v4946
    %v5051 = vmul.f32 %v4946, %v5050
    %vm5052 = vcmp.eq.f32.partialorder %v4946, inf
    %v5053 = vsel %vm5052, %v4946, %v5051
    %vm5054 = vcmp.eq.f32.partialorder %v4946, 0.0
    %v5055 = vand.u32 %v4946, 2147483648
    %v5056 = vsel %vm5054, %v5055, %v5053
    %v5057 = vrsqrt.pop %v4947
    %v5058 = vmul.f32 %v4947, %v5057
    %vm5059 = vcmp.eq.f32.partialorder %v4947, inf
    %v5060 = vsel %vm5059, %v4947, %v5058
    %vm5061 = vcmp.eq.f32.partialorder %v4947, 0.0
    %v5062 = vand.u32 %v4947, 2147483648
    %v5063 = vsel %vm5061, %v5062, %v5060
    %v5064 = vrsqrt.pop %v4948
    %v5065 = vmul.f32 %v4948, %v5064
    %vm5066 = vcmp.eq.f32.partialorder %v4948, inf
    %v5067 = vsel %vm5066, %v4948, %v5065
    %vm5068 = vcmp.eq.f32.partialorder %v4948, 0.0
    %v5069 = vand.u32 %v4948, 2147483648
    %v5070 = vsel %vm5068, %v5069, %v5067
    %v5071 = vrsqrt.pop %v4949
    %v5072 = vmul.f32 %v4949, %v5071
    %vm5073 = vcmp.eq.f32.partialorder %v4949, inf
    %v5074 = vsel %vm5073, %v4949, %v5072
    %vm5075 = vcmp.eq.f32.partialorder %v4949, 0.0
    %v5076 = vand.u32 %v4949, 2147483648
    %v5077 = vsel %vm5075, %v5076, %v5074
    %v5078 = vrsqrt.pop %v4950
    %v5079 = vmul.f32 %v4950, %v5078
    %vm5080 = vcmp.eq.f32.partialorder %v4950, inf
    %v5081 = vsel %vm5080, %v4950, %v5079
    %vm5082 = vcmp.eq.f32.partialorder %v4950, 0.0
    %v5083 = vand.u32 %v4950, 2147483648
    %v5084 = vsel %vm5082, %v5083, %v5081
    %v5085 = vrsqrt.pop %v4951
    %v5086 = vmul.f32 %v4951, %v5085
    %vm5087 = vcmp.eq.f32.partialorder %v4951, inf
    %v5088 = vsel %vm5087, %v4951, %v5086
    %vm5089 = vcmp.eq.f32.partialorder %v4951, 0.0
    %v5090 = vand.u32 %v4951, 2147483648
    %v5091 = vsel %vm5089, %v5090, %v5088
    %v5092 = vrsqrt.pop %v4952
    %v5093 = vmul.f32 %v4952, %v5092
    %vm5094 = vcmp.eq.f32.partialorder %v4952, inf
    %v5095 = vsel %vm5094, %v4952, %v5093
    %vm5096 = vcmp.eq.f32.partialorder %v4952, 0.0
    %v5097 = vand.u32 %v4952, 2147483648
    %v5098 = vsel %vm5096, %v5097, %v5095
    %v5099 = vrsqrt.pop %v4953
    %v5100 = vmul.f32 %v4953, %v5099
    %vm5101 = vcmp.eq.f32.partialorder %v4953, inf
    %v5102 = vsel %vm5101, %v4953, %v5100
    %vm5103 = vcmp.eq.f32.partialorder %v4953, 0.0
    %v5104 = vand.u32 %v4953, 2147483648
    %v5105 = vsel %vm5103, %v5104, %v5102
    %v5106 = vrsqrt.pop %v4954
    %v5107 = vmul.f32 %v4954, %v5106
    %vm5108 = vcmp.eq.f32.partialorder %v4954, inf
    %v5109 = vsel %vm5108, %v4954, %v5107
    %vm5110 = vcmp.eq.f32.partialorder %v4954, 0.0
    %v5111 = vand.u32 %v4954, 2147483648
    %v5112 = vsel %vm5110, %v5111, %v5109
    %v5113 = vrsqrt.pop %v4955
    %v5114 = vmul.f32 %v4955, %v5113
    %vm5115 = vcmp.eq.f32.partialorder %v4955, inf
    %v5116 = vsel %vm5115, %v4955, %v5114
    %vm5117 = vcmp.eq.f32.partialorder %v4955, 0.0
    %v5118 = vand.u32 %v4955, 2147483648
    %v5119 = vsel %vm5117, %v5118, %v5116
    %v5120 = vrsqrt.pop %v4956
    %v5121 = vmul.f32 %v4956, %v5120
    %vm5122 = vcmp.eq.f32.partialorder %v4956, inf
    %v5123 = vsel %vm5122, %v4956, %v5121
    %vm5124 = vcmp.eq.f32.partialorder %v4956, 0.0
    %v5125 = vand.u32 %v4956, 2147483648
    %v5126 = vsel %vm5124, %v5125, %v5123
    %v5127 = vrsqrt.pop %v4957
    %v5128 = vmul.f32 %v4957, %v5127
    %vm5129 = vcmp.eq.f32.partialorder %v4957, inf
    %v5130 = vsel %vm5129, %v4957, %v5128
    %vm5131 = vcmp.eq.f32.partialorder %v4957, 0.0
    %v5132 = vand.u32 %v4957, 2147483648
    %v5133 = vsel %vm5131, %v5132, %v5130
    %v5134 = vrsqrt.pop %v4958
    %v5135 = vmul.f32 %v4958, %v5134
    %vm5136 = vcmp.eq.f32.partialorder %v4958, inf
    %v5137 = vsel %vm5136, %v4958, %v5135
    %vm5138 = vcmp.eq.f32.partialorder %v4958, 0.0
    %v5139 = vand.u32 %v4958, 2147483648
    %v5140 = vsel %vm5138, %v5139, %v5137
    %v5141 = vrsqrt.pop %v4959
    %v5142 = vmul.f32 %v4959, %v5141
    %vm5143 = vcmp.eq.f32.partialorder %v4959, inf
    %v5144 = vsel %vm5143, %v4959, %v5142
    %vm5145 = vcmp.eq.f32.partialorder %v4959, 0.0
    %v5146 = vand.u32 %v4959, 2147483648
    %v5147 = vsel %vm5145, %v5146, %v5144
    %v5148 = vrsqrt.pop %v4960
    %v5149 = vmul.f32 %v4960, %v5148
    %vm5150 = vcmp.eq.f32.partialorder %v4960, inf
    %v5151 = vsel %vm5150, %v4960, %v5149
    %vm5152 = vcmp.eq.f32.partialorder %v4960, 0.0
    %v5153 = vand.u32 %v4960, 2147483648
    %v5154 = vsel %vm5152, %v5153, %v5151
    %v5155 = vrsqrt.pop %v4961
    %v5156 = vmul.f32 %v4961, %v5155
    %vm5157 = vcmp.eq.f32.partialorder %v4961, inf
    %v5158 = vsel %vm5157, %v4961, %v5156
    %vm5159 = vcmp.eq.f32.partialorder %v4961, 0.0
    %v5160 = vand.u32 %v4961, 2147483648
    %v5161 = vsel %vm5159, %v5160, %v5158
    %v5162 = vrsqrt.pop %v4962
    %v5163 = vmul.f32 %v4962, %v5162
    %vm5164 = vcmp.eq.f32.partialorder %v4962, inf
    %v5165 = vsel %vm5164, %v4962, %v5163
    %vm5166 = vcmp.eq.f32.partialorder %v4962, 0.0
    %v5167 = vand.u32 %v4962, 2147483648
    %v5168 = vsel %vm5166, %v5167, %v5165
    %v5169 = vrsqrt.pop %v4963
    %v5170 = vmul.f32 %v4963, %v5169
    %vm5171 = vcmp.eq.f32.partialorder %v4963, inf
    %v5172 = vsel %vm5171, %v4963, %v5170
    %vm5173 = vcmp.eq.f32.partialorder %v4963, 0.0
    %v5174 = vand.u32 %v4963, 2147483648
    %v5175 = vsel %vm5173, %v5174, %v5172
    %v5176 = vrsqrt.pop %v4964
    %v5177 = vmul.f32 %v4964, %v5176
    %vm5178 = vcmp.eq.f32.partialorder %v4964, inf
    %v5179 = vsel %vm5178, %v4964, %v5177
    %vm5180 = vcmp.eq.f32.partialorder %v4964, 0.0
    %v5181 = vand.u32 %v4964, 2147483648
    %v5182 = vsel %vm5180, %v5181, %v5179
    %v5183 = vrsqrt.pop %v4965
    %v5184 = vmul.f32 %v4965, %v5183
    %vm5185 = vcmp.eq.f32.partialorder %v4965, inf
    %v5186 = vsel %vm5185, %v4965, %v5184
    %vm5187 = vcmp.eq.f32.partialorder %v4965, 0.0
    %v5188 = vand.u32 %v4965, 2147483648
    %v5189 = vsel %vm5187, %v5188, %v5186
    %v5190 = vrsqrt.pop %v4966
    %v5191 = vmul.f32 %v4966, %v5190
    %vm5192 = vcmp.eq.f32.partialorder %v4966, inf
    %v5193 = vsel %vm5192, %v4966, %v5191
    %vm5194 = vcmp.eq.f32.partialorder %v4966, 0.0
    %v5195 = vand.u32 %v4966, 2147483648
    %v5196 = vsel %vm5194, %v5195, %v5193
    %v5197 = vrsqrt.pop %v4967
    %v5198 = vmul.f32 %v4967, %v5197
    %vm5199 = vcmp.eq.f32.partialorder %v4967, inf
    %v5200 = vsel %vm5199, %v4967, %v5198
    %vm5201 = vcmp.eq.f32.partialorder %v4967, 0.0
    %v5202 = vand.u32 %v4967, 2147483648
    %v5203 = vsel %vm5201, %v5202, %v5200
    %v5204 = vrsqrt.pop %v4968
    %v5205 = vmul.f32 %v4968, %v5204
    %vm5206 = vcmp.eq.f32.partialorder %v4968, inf
    %v5207 = vsel %vm5206, %v4968, %v5205
    %vm5208 = vcmp.eq.f32.partialorder %v4968, 0.0
    %v5209 = vand.u32 %v4968, 2147483648
    %v5210 = vsel %vm5208, %v5209, %v5207
    %v5211 = vrsqrt.pop %v4969
    %v5212 = vmul.f32 %v4969, %v5211
    %vm5213 = vcmp.eq.f32.partialorder %v4969, inf
    %v5214 = vsel %vm5213, %v4969, %v5212
    %vm5215 = vcmp.eq.f32.partialorder %v4969, 0.0
    %v5216 = vand.u32 %v4969, 2147483648
    %v5217 = vsel %vm5215, %v5216, %v5214
    %v5218 = vrsqrt.pop %v4970
    %v5219 = vmul.f32 %v4970, %v5218
    %vm5220 = vcmp.eq.f32.partialorder %v4970, inf
    %v5221 = vsel %vm5220, %v4970, %v5219
    %vm5222 = vcmp.eq.f32.partialorder %v4970, 0.0
    %v5223 = vand.u32 %v4970, 2147483648
    %v5224 = vsel %vm5222, %v5223, %v5221
    %v5225 = vrsqrt.pop %v4971
    %v5226 = vmul.f32 %v4971, %v5225
    %vm5227 = vcmp.eq.f32.partialorder %v4971, inf
    %v5228 = vsel %vm5227, %v4971, %v5226
    %vm5229 = vcmp.eq.f32.partialorder %v4971, 0.0
    %v5230 = vand.u32 %v4971, 2147483648
    %v5231 = vsel %vm5229, %v5230, %v5228
    %v5232 = vrsqrt.pop %v4972
    %v5233 = vmul.f32 %v4972, %v5232
    %vm5234 = vcmp.eq.f32.partialorder %v4972, inf
    %v5235 = vsel %vm5234, %v4972, %v5233
    %vm5236 = vcmp.eq.f32.partialorder %v4972, 0.0
    %v5237 = vand.u32 %v4972, 2147483648
    %v5238 = vsel %vm5236, %v5237, %v5235
    %v5239 = vrsqrt.pop %v4973
    %v5240 = vmul.f32 %v4973, %v5239
    %vm5241 = vcmp.eq.f32.partialorder %v4973, inf
    %v5242 = vsel %vm5241, %v4973, %v5240
    %vm5243 = vcmp.eq.f32.partialorder %v4973, 0.0
    %v5244 = vand.u32 %v4973, 2147483648
    %v5245 = vsel %vm5243, %v5244, %v5242
    %v5246 = vrsqrt.pop %v4974
    %v5247 = vmul.f32 %v4974, %v5246
    %vm5248 = vcmp.eq.f32.partialorder %v4974, inf
    %v5249 = vsel %vm5248, %v4974, %v5247
    %vm5250 = vcmp.eq.f32.partialorder %v4974, 0.0
    %v5251 = vand.u32 %v4974, 2147483648
    %v5252 = vsel %vm5250, %v5251, %v5249
    %v5253 = vrsqrt.pop %v4975
    %v5254 = vmul.f32 %v4975, %v5253
    %vm5255 = vcmp.eq.f32.partialorder %v4975, inf
    %v5256 = vsel %vm5255, %v4975, %v5254
    %vm5257 = vcmp.eq.f32.partialorder %v4975, 0.0
    %v5258 = vand.u32 %v4975, 2147483648
    %v5259 = vsel %vm5257, %v5258, %v5256
    %v5260 = vrsqrt.pop %v4976
    %v5261 = vmul.f32 %v4976, %v5260
    %vm5262 = vcmp.eq.f32.partialorder %v4976, inf
    %v5263 = vsel %vm5262, %v4976, %v5261
    %vm5264 = vcmp.eq.f32.partialorder %v4976, 0.0
    %v5265 = vand.u32 %v4976, 2147483648
    %v5266 = vsel %vm5264, %v5265, %v5263
    %v5267 = vrsqrt.pop %v4977
    %v5268 = vmul.f32 %v4977, %v5267
    %vm5269 = vcmp.eq.f32.partialorder %v4977, inf
    %v5270 = vsel %vm5269, %v4977, %v5268
    %vm5271 = vcmp.eq.f32.partialorder %v4977, 0.0
    %v5272 = vand.u32 %v4977, 2147483648
    %v5273 = vsel %vm5271, %v5272, %v5270
    %v5274 = vrsqrt.pop %v4978
    %v5275 = vmul.f32 %v4978, %v5274
    %vm5276 = vcmp.eq.f32.partialorder %v4978, inf
    %v5277 = vsel %vm5276, %v4978, %v5275
    %vm5278 = vcmp.eq.f32.partialorder %v4978, 0.0
    %v5279 = vand.u32 %v4978, 2147483648
    %v5280 = vsel %vm5278, %v5279, %v5277
    %v5281 = vrsqrt.pop %v4979
    %v5282 = vmul.f32 %v4979, %v5281
    %vm5283 = vcmp.eq.f32.partialorder %v4979, inf
    %v5284 = vsel %vm5283, %v4979, %v5282
    %vm5285 = vcmp.eq.f32.partialorder %v4979, 0.0
    %v5286 = vand.u32 %v4979, 2147483648
    %v5287 = vsel %vm5285, %v5286, %v5284
    %v5288 = vrsqrt.pop %v4980
    %v5289 = vmul.f32 %v4980, %v5288
    %vm5290 = vcmp.eq.f32.partialorder %v4980, inf
    %v5291 = vsel %vm5290, %v4980, %v5289
    %vm5292 = vcmp.eq.f32.partialorder %v4980, 0.0
    %v5293 = vand.u32 %v4980, 2147483648
    %v5294 = vsel %vm5292, %v5293, %v5291
    %v5295 = vrsqrt.pop %v4981
    %v5296 = vmul.f32 %v4981, %v5295
    %vm5297 = vcmp.eq.f32.partialorder %v4981, inf
    %v5298 = vsel %vm5297, %v4981, %v5296
    %vm5299 = vcmp.eq.f32.partialorder %v4981, 0.0
    %v5300 = vand.u32 %v4981, 2147483648
    %v5301 = vsel %vm5299, %v5300, %v5298
    %v5302 = vrsqrt.pop %v4982
    %v5303 = vmul.f32 %v4982, %v5302
    %vm5304 = vcmp.eq.f32.partialorder %v4982, inf
    %v5305 = vsel %vm5304, %v4982, %v5303
    %vm5306 = vcmp.eq.f32.partialorder %v4982, 0.0
    %v5307 = vand.u32 %v4982, 2147483648
    %v5308 = vsel %vm5306, %v5307, %v5305
    %v5309 = vrsqrt.pop %v4983
    %v5310 = vmul.f32 %v4983, %v5309
    %vm5311 = vcmp.eq.f32.partialorder %v4983, inf
    %v5312 = vsel %vm5311, %v4983, %v5310
    %vm5313 = vcmp.eq.f32.partialorder %v4983, 0.0
    %v5314 = vand.u32 %v4983, 2147483648
    %v5315 = vsel %vm5313, %v5314, %v5312
    %v5316 = vrsqrt.pop %v4984
    %v5317 = vmul.f32 %v4984, %v5316
    %vm5318 = vcmp.eq.f32.partialorder %v4984, inf
    %v5319 = vsel %vm5318, %v4984, %v5317
    %vm5320 = vcmp.eq.f32.partialorder %v4984, 0.0
    %v5321 = vand.u32 %v4984, 2147483648
    %v5322 = vsel %vm5320, %v5321, %v5319
    %v5323 = vrsqrt.pop %v4985
    %v5324 = vmul.f32 %v4985, %v5323
    %vm5325 = vcmp.eq.f32.partialorder %v4985, inf
    %v5326 = vsel %vm5325, %v4985, %v5324
    %vm5327 = vcmp.eq.f32.partialorder %v4985, 0.0
    %v5328 = vand.u32 %v4985, 2147483648
    %v5329 = vsel %vm5327, %v5328, %v5326
    %v5330 = vrsqrt.pop %v4986
    %v5331 = vmul.f32 %v4986, %v5330
    %vm5332 = vcmp.eq.f32.partialorder %v4986, inf
    %v5333 = vsel %vm5332, %v4986, %v5331
    %vm5334 = vcmp.eq.f32.partialorder %v4986, 0.0
    %v5335 = vand.u32 %v4986, 2147483648
    %v5336 = vsel %vm5334, %v5335, %v5333
    %v5337 = vrsqrt.pop %v4987
    %v5338 = vmul.f32 %v4987, %v5337
    %vm5339 = vcmp.eq.f32.partialorder %v4987, inf
    %v5340 = vsel %vm5339, %v4987, %v5338
    %vm5341 = vcmp.eq.f32.partialorder %v4987, 0.0
    %v5342 = vand.u32 %v4987, 2147483648
    %v5343 = vsel %vm5341, %v5342, %v5340
    %v5344 = vrsqrt.pop %v4988
    %v5345 = vmul.f32 %v4988, %v5344
    %vm5346 = vcmp.eq.f32.partialorder %v4988, inf
    %v5347 = vsel %vm5346, %v4988, %v5345
    %vm5348 = vcmp.eq.f32.partialorder %v4988, 0.0
    %v5349 = vand.u32 %v4988, 2147483648
    %v5350 = vsel %vm5348, %v5349, %v5347
    %v5351 = vrsqrt.pop %v4989
    %v5352 = vmul.f32 %v4989, %v5351
    %vm5353 = vcmp.eq.f32.partialorder %v4989, inf
    %v5354 = vsel %vm5353, %v4989, %v5352
    %vm5355 = vcmp.eq.f32.partialorder %v4989, 0.0
    %v5356 = vand.u32 %v4989, 2147483648
    %v5357 = vsel %vm5355, %v5356, %v5354
    %v5358 = vrsqrt.pop %v4990
    %v5359 = vmul.f32 %v4990, %v5358
    %vm5360 = vcmp.eq.f32.partialorder %v4990, inf
    %v5361 = vsel %vm5360, %v4990, %v5359
    %vm5362 = vcmp.eq.f32.partialorder %v4990, 0.0
    %v5363 = vand.u32 %v4990, 2147483648
    %v5364 = vsel %vm5362, %v5363, %v5361
    %v5365 = vrsqrt.pop %v4991
    %v5366 = vmul.f32 %v4991, %v5365
    %vm5367 = vcmp.eq.f32.partialorder %v4991, inf
    %v5368 = vsel %vm5367, %v4991, %v5366
    %vm5369 = vcmp.eq.f32.partialorder %v4991, 0.0
    %v5370 = vand.u32 %v4991, 2147483648
    %v5371 = vsel %vm5369, %v5370, %v5368
    %v5372 = vrsqrt.pop %v4992
    %v5373 = vmul.f32 %v4992, %v5372
    %vm5374 = vcmp.eq.f32.partialorder %v4992, inf
    %v5375 = vsel %vm5374, %v4992, %v5373
    %vm5376 = vcmp.eq.f32.partialorder %v4992, 0.0
    %v5377 = vand.u32 %v4992, 2147483648
    %v5378 = vsel %vm5376, %v5377, %v5375
    %v5379 = vrsqrt.pop %v4993
    %v5380 = vmul.f32 %v4993, %v5379
    %vm5381 = vcmp.eq.f32.partialorder %v4993, inf
    %v5382 = vsel %vm5381, %v4993, %v5380
    %vm5383 = vcmp.eq.f32.partialorder %v4993, 0.0
    %v5384 = vand.u32 %v4993, 2147483648
    %v5385 = vsel %vm5383, %v5384, %v5382
    %s5386 = scalar_lea.vmem [#allocation5], 448
    %5387 = vst [vmem:[%s5386] sm:$0xff] %v5000
    %5388 = vst.msk [vmem:[%s5386 + $0x8] sm:$0xff] %vm2725, %v5007
    %5389 = vst [vmem:[%s5386 + $0x10] sm:$0xff] %v5014
    %5390 = vst.msk [vmem:[%s5386 + $0x18] sm:$0xff] %vm2725, %v5021
    %5391 = vst [vmem:[%s5386 + $0x20] sm:$0xff] %v5028
    %5392 = vst.msk [vmem:[%s5386 + $0x28] sm:$0xff] %vm2725, %v5035
    %5393 = vst [vmem:[%s5386 + $0x30] sm:$0xff] %v5042
    %5394 = vst.msk [vmem:[%s5386 + $0x38] sm:$0xff] %vm2725, %v5049
    %5395 = vst [vmem:[%s5386 + $0x40] sm:$0xff] %v5056
    %5396 = vst.msk [vmem:[%s5386 + $0x48] sm:$0xff] %vm2725, %v5063
    %5397 = vst [vmem:[%s5386 + $0x50] sm:$0xff] %v5070
    %5398 = vst.msk [vmem:[%s5386 + $0x58] sm:$0xff] %vm2725, %v5077
    %5399 = vst [vmem:[%s5386 + $0x60] sm:$0xff] %v5084
    %5400 = vst.msk [vmem:[%s5386 + $0x68] sm:$0xff] %vm2725, %v5091
    %5401 = vst [vmem:[%s5386 + $0x70] sm:$0xff] %v5098
    %5402 = vst.msk [vmem:[%s5386 + $0x78] sm:$0xff] %vm2725, %v5105
    %5403 = vst [vmem:[%s5386 + $0x80] sm:$0xff] %v5112
    %5404 = vst.msk [vmem:[%s5386 + $0x88] sm:$0xff] %vm2725, %v5119
    %5405 = vst [vmem:[%s5386 + $0x90] sm:$0xff] %v5126
    %5406 = vst.msk [vmem:[%s5386 + $0x98] sm:$0xff] %vm2725, %v5133
    %5407 = vst [vmem:[%s5386 + $0xa0] sm:$0xff] %v5140
    %5408 = vst.msk [vmem:[%s5386 + $0xa8] sm:$0xff] %vm2725, %v5147
    %5409 = vst [vmem:[%s5386 + $0xb0] sm:$0xff] %v5154
    %5410 = vst.msk [vmem:[%s5386 + $0xb8] sm:$0xff] %vm2725, %v5161
    %5411 = vst [vmem:[%s5386 + $0xc0] sm:$0xff] %v5168
    %5412 = vst.msk [vmem:[%s5386 + $0xc8] sm:$0xff] %vm2725, %v5175
    %5413 = vst [vmem:[%s5386 + $0xd0] sm:$0xff] %v5182
    %5414 = vst.msk [vmem:[%s5386 + $0xd8] sm:$0xff] %vm2725, %v5189
    %5415 = vst [vmem:[%s5386 + $0xe0] sm:$0xff] %v5196
    %5416 = vst.msk [vmem:[%s5386 + $0xe8] sm:$0xff] %vm2725, %v5203
    %5417 = vst [vmem:[%s5386 + $0xf0] sm:$0xff] %v5210
    %5418 = vst.msk [vmem:[%s5386 + $0xf8] sm:$0xff] %vm2725, %v5217
    %5419 = vst [vmem:[%s5386 + $0x100] sm:$0xff] %v5224
    %5420 = vst.msk [vmem:[%s5386 + $0x108] sm:$0xff] %vm2725, %v5231
    %5421 = vst [vmem:[%s5386 + $0x110] sm:$0xff] %v5238
    %5422 = vst.msk [vmem:[%s5386 + $0x118] sm:$0xff] %vm2725, %v5245
    %5423 = vst [vmem:[%s5386 + $0x120] sm:$0xff] %v5252
    %5424 = vst.msk [vmem:[%s5386 + $0x128] sm:$0xff] %vm2725, %v5259
    %5425 = vst [vmem:[%s5386 + $0x130] sm:$0xff] %v5266
    %5426 = vst.msk [vmem:[%s5386 + $0x138] sm:$0xff] %vm2725, %v5273
    %5427 = vst [vmem:[%s5386 + $0x140] sm:$0xff] %v5280
    %5428 = vst.msk [vmem:[%s5386 + $0x148] sm:$0xff] %vm2725, %v5287
    %5429 = vst [vmem:[%s5386 + $0x150] sm:$0xff] %v5294
    %5430 = vst.msk [vmem:[%s5386 + $0x158] sm:$0xff] %vm2725, %v5301
    %5431 = vst [vmem:[%s5386 + $0x160] sm:$0xff] %v5308
    %5432 = vst.msk [vmem:[%s5386 + $0x168] sm:$0xff] %vm2725, %v5315
    %5433 = vst [vmem:[%s5386 + $0x170] sm:$0xff] %v5322
    %5434 = vst.msk [vmem:[%s5386 + $0x178] sm:$0xff] %vm2725, %v5329
    %5435 = vst [vmem:[%s5386 + $0x180] sm:$0xff] %v5336
    %5436 = vst.msk [vmem:[%s5386 + $0x188] sm:$0xff] %vm2725, %v5343
    %5437 = vst [vmem:[%s5386 + $0x190] sm:$0xff] %v5350
    %5438 = vst.msk [vmem:[%s5386 + $0x198] sm:$0xff] %vm2725, %v5357
    %5439 = vst [vmem:[%s5386 + $0x1a0] sm:$0xff] %v5364
    %5440 = vst.msk [vmem:[%s5386 + $0x1a8] sm:$0xff] %vm2725, %v5371
    %5441 = vst [vmem:[%s5386 + $0x1b0] sm:$0xff] %v5378
    %5442 = vst.msk [vmem:[%s5386 + $0x1b8] sm:$0xff] %vm2725, %v5385
    // Predicated region
    $region10: #{tpu_custom_call.1} parent=1 // pred_check
      _
    $region11: #{tpu_custom_call.1} parent=1 // pred_check_branch
      %5444 = sbr.rel (0) target = $region13
    $region12: #{tpu_custom_call.1} parent=1 // pred_region
      %s5446 = ssub.s32 14336, 14336
      %5447 = vsyncadd [#allocation4], %s5446
      %s5448 = sshll.u32 [#allocation5], 4
      %s5449 = int_to_ptr.vmem [resolvable:$true] %s5448
      %5454 = dma.vmem_to_hbm [thread:$0]  %s5449, 14336, %s1, [#allocation4], 256, 256, 16
    $region13: #{tpu_custom_call.1} parent=1 // pred_fallthru
      _
    // Predicated region
    $region14: #{tpu_custom_call.1} parent=1 // pred_check
      _
    $region15: #{tpu_custom_call.1} parent=1 // pred_check_branch
      %5456 = sbr.rel (0) target = $region17
    $region16: #{tpu_custom_call.1} parent=1 // pred_region
      %5457 = dma.done [#allocation4], 14336
    $region17: #{tpu_custom_call.1} parent=1 // pred_fallthru
      _
    %5458 = vsyncpa [#allocation3], 1
    %5459 = vsyncpa [#allocation4], 1

</llo_original>
